<compile_context>
chip_gen: v6e
topology: v6e:2x2x1
jax: 0.10.0
libtpu: 0.0.40
codegen_flags: <defaults>
</compile_context>

<pallas_src>
import jax
import jax.numpy as jnp
from jax.experimental import pallas as pl
from jax.experimental.pallas import tpu as pltpu


TB = 256  # batch tile (multiple of 128; fits comfortably in VMEM on v5e/v6e/v7x)


def encoder_kernel(x_ref, w1_ref, b1_ref, w2_ref, b2_ref, z_ref):
    # fc1: bf16 MXU matmul with f32 accumulation, then f32 bias + relu.
    h = jnp.dot(x_ref[...], w1_ref[...], preferred_element_type=jnp.float32)
    h = jnp.maximum(h + b1_ref[...], 0.0)                       # (TB, 400) f32

    # Fused heads: single (400, 6) matmul; columns 0:3 -> relu, 3:6 -> sigmoid.
    y = jnp.dot(h, w2_ref[...], preferred_element_type=jnp.float32) + b2_ref[...]
    n = jnp.maximum(y[:, 0:3], 0.0)
    s = jax.nn.sigmoid(y[:, 3:6])
    v = n * s                                                   # (TB, 3)

    # F.normalize(v, dim=1): v / max(||v||, eps) == v * rsqrt(max(sumsq, eps^2))
    eps = 1e-12
    sumsq = jnp.sum(v * v, axis=1, keepdims=True)
    z_ref[...] = v * jax.lax.rsqrt(jnp.maximum(sumsq, eps * eps))


def encoder_forward(x, params, tb=TB):
    w1, b1, w21, b21, w22, b22 = params

    # Mirror PyTorch's x.view(-1, 784), then zero-pad the batch to a tile multiple.
    xf = x.reshape(-1, 784).astype(jnp.float32)
    B = xf.shape[0]
    num_tiles = (B + tb - 1) // tb
    Bp = num_tiles * tb
    if Bp != B:
        xf = jnp.pad(xf, ((0, Bp - B), (0, 0)))

    # bf16 feed for the dominant fc1 matmul; heads stay f32 (they are tiny).
    x_bf = xf.astype(jnp.bfloat16)
    w1_bf = w1.astype(jnp.bfloat16)
    b1_f = b1.astype(jnp.float32)
    w2 = jnp.concatenate([w21, w22], axis=1).astype(jnp.float32)   # (400, 6)
    b2 = jnp.concatenate([b21, b22], axis=1).astype(jnp.float32)   # (1, 6)

    vmem = pltpu.MemorySpace.VMEM

    z = pl.pallas_call(
        encoder_kernel,
        out_shape=jax.ShapeDtypeStruct((Bp, 3), jnp.float32),
        grid=(num_tiles,),
        in_specs=[
            pl.BlockSpec((tb, 784), lambda i: (i, 0), memory_space=vmem),
            # Constant block index -> weights stay resident in VMEM across steps.
            pl.BlockSpec((784, 400), lambda i: (0, 0), memory_space=vmem),
            pl.BlockSpec((1, 400), lambda i: (0, 0), memory_space=vmem),
            pl.BlockSpec((400, 6), lambda i: (0, 0), memory_space=vmem),
            pl.BlockSpec((1, 6), lambda i: (0, 0), memory_space=vmem),
        ],
        out_specs=pl.BlockSpec((tb, 3), lambda i: (i, 0), memory_space=vmem),
        compiler_params=pltpu.CompilerParams(
            dimension_semantics=("parallel",)),
    )(x_bf, w1_bf, b1_f, w2, b2)

    return z[:B]


def init_params(key):
    """Deterministic init mimicking nn.Linear defaults (U[-1/sqrt(fan_in), ...])."""
    def linear(key, fan_in, fan_out):
        kw, kb = jax.random.split(key)
        bound = 1.0 / jnp.sqrt(fan_in)
        # Stored as (in, out) so the kernel computes x @ W (== x @ W_pt^T).
        w = jax.random.uniform(kw, (fan_in, fan_out), jnp.float32, -bound, bound)
        b = jax.random.uniform(kb, (1, fan_out), jnp.float32, -bound, bound)
        return w, b

    k1, k2, k3 = jax.random.split(key, 3)
    w1, b1 = linear(k1, 784, 400)
    w21, b21 = linear(k2, 400, 3)
    w22, b22 = linear(k3, 400, 3)
    return (w1, b1, w21, b21, w22, b22)


def encoder_reference(x, params):
    """Plain-JAX f32 reference matching the PyTorch module."""
    w1, b1, w21, b21, w22, b22 = params
    xf = x.reshape(-1, 784).astype(jnp.float32)
    h = jax.nn.relu(xf @ w1 + b1)
    n = jax.nn.relu(h @ w21 + b21)
    s = jax.nn.sigmoid(h @ w22 + b22)
    v = n * s
    nrm = jnp.sqrt(jnp.sum(v * v, axis=1, keepdims=True))
    return v / jnp.maximum(nrm, 1e-12)


if __name__ == "__main__":
    key = jax.random.PRNGKey(0)
    kx, kp = jax.random.split(key)

    # MNIST-like input: batch=2, NCHW (2, 1, 28, 28) -> flattened to (2, 784)
    x = jax.random.normal(kx, (2, 1, 28, 28), jnp.float32)
    params = init_params(kp)

    z = encoder_forward(x, params)
    z = jax.block_until_ready(z)

    z_ref = encoder_reference(x, params)
    assert z.shape == (2, 3)
    # Tolerance loosened vs. the pure-f32 reference because fc1 inputs are bf16
    # (accumulation stays f32).
    assert jnp.allclose(z, z_ref, rtol=2e-2, atol=2e-2), "mismatch vs reference"

    print("KERNEL_OK")
</pallas_src>

<mosaic_0001>
module attributes {stable_mosaic.version = 11 : i64} {
  func.func @encoder_kernel(%arg0: i32, %arg1: memref<256x784xbf16, #tpu.memory_space<vmem>>, %arg2: memref<784x400xbf16, #tpu.memory_space<vmem>>, %arg3: memref<1x400xf32, #tpu.memory_space<vmem>>, %arg4: memref<400x6xf32, #tpu.memory_space<vmem>>, %arg5: memref<1x6xf32, #tpu.memory_space<vmem>>, %arg6: memref<256x3xf32, #tpu.memory_space<vmem>>) attributes {dimension_semantics = [#tpu.dimension_semantics<parallel>], iteration_bounds = array<i64: 1>, scalar_prefetch = 0 : i64, scratch_operands = 0 : i64, tpu.core_type = #tpu.core_type<tc>, window_params = [{transform_indices = @transform_0, window_bounds = array<i64: 256, 784>}, {pipeline_mode = #tpu.pipeline_mode<synchronous>, transform_indices = @transform_1, window_bounds = array<i64: 784, 400>}, {pipeline_mode = #tpu.pipeline_mode<synchronous>, transform_indices = @transform_2, window_bounds = array<i64: 1, 400>}, {pipeline_mode = #tpu.pipeline_mode<synchronous>, transform_indices = @transform_3, window_bounds = array<i64: 400, 6>}, {pipeline_mode = #tpu.pipeline_mode<synchronous>, transform_indices = @transform_4, window_bounds = array<i64: 1, 6>}, {transform_indices = @transform_5, window_bounds = array<i64: 256, 3>}]} {
    %c0 = arith.constant 0 : index
    %c0_0 = arith.constant 0 : index
    %0 = vector.load %arg1[%c0, %c0_0] : memref<256x784xbf16, #tpu.memory_space<vmem>>, vector<256x784xbf16>
    %c0_1 = arith.constant 0 : index
    %c0_2 = arith.constant 0 : index
    %1 = vector.load %arg2[%c0_1, %c0_2] : memref<784x400xbf16, #tpu.memory_space<vmem>>, vector<784x400xbf16>
    %cst = arith.constant dense<0.000000e+00> : vector<256x400xf32>
    %2 = tpu.matmul %0, %1, %cst {dimension_numbers = #tpu.dot_dimension_numbers<[1], [0], [0], [1], [0, 0, 1, 1], [], []>} : vector<256x784xbf16>, vector<784x400xbf16>, vector<256x400xf32> -> vector<256x400xf32>
    %c0_3 = arith.constant 0 : index
    %c0_4 = arith.constant 0 : index
    %3 = vector.load %arg3[%c0_3, %c0_4] : memref<1x400xf32, #tpu.memory_space<vmem>>, vector<1x400xf32>
    %4 = vector.broadcast %3 : vector<1x400xf32> to vector<256x400xf32>
    %5 = arith.addf %2, %4 : vector<256x400xf32>
    %cst_5 = arith.constant 0.000000e+00 : f32
    %6 = vector.broadcast %cst_5 : f32 to vector<256x400xf32>
    %7 = arith.maximumf %5, %6 : vector<256x400xf32>
    %c0_6 = arith.constant 0 : index
    %c0_7 = arith.constant 0 : index
    %8 = vector.load %arg4[%c0_6, %c0_7] : memref<400x6xf32, #tpu.memory_space<vmem>>, vector<400x6xf32>
    %cst_8 = arith.constant dense<0.000000e+00> : vector<256x6xf32>
    %9 = tpu.matmul %7, %8, %cst_8 {dimension_numbers = #tpu.dot_dimension_numbers<[1], [0], [0], [1], [0, 0, 1, 1], [], []>} : vector<256x400xf32>, vector<400x6xf32>, vector<256x6xf32> -> vector<256x6xf32>
    %c0_9 = arith.constant 0 : index
    %c0_10 = arith.constant 0 : index
    %10 = vector.load %arg5[%c0_9, %c0_10] : memref<1x6xf32, #tpu.memory_space<vmem>>, vector<1x6xf32>
    %11 = vector.broadcast %10 : vector<1x6xf32> to vector<256x6xf32>
    %12 = arith.addf %9, %11 : vector<256x6xf32>
    %13 = vector.extract_strided_slice %12 {offsets = [0, 0], sizes = [256, 3], strides = [1, 1]} : vector<256x6xf32> to vector<256x3xf32>
    %cst_11 = arith.constant 0.000000e+00 : f32
    %14 = vector.broadcast %cst_11 : f32 to vector<256x3xf32>
    %15 = arith.maximumf %13, %14 : vector<256x3xf32>
    %16 = vector.extract_strided_slice %12 {offsets = [0, 3], sizes = [256, 3], strides = [1, 1]} : vector<256x6xf32> to vector<256x3xf32>
    %17 = arith.negf %16 : vector<256x3xf32>
    %18 = math.exp %17 : vector<256x3xf32>
    %cst_12 = arith.constant 1.000000e+00 : f32
    %19 = vector.broadcast %cst_12 : f32 to vector<256x3xf32>
    %20 = arith.addf %19, %18 : vector<256x3xf32>
    %21 = arith.divf %19, %20 : vector<256x3xf32>
    %22 = arith.mulf %15, %21 : vector<256x3xf32>
    %23 = arith.mulf %22, %22 : vector<256x3xf32>
    %cst_13 = arith.constant dense<0.000000e+00> : vector<256xf32>
    %24 = vector.multi_reduction <add>, %23, %cst_13 [1] : vector<256x3xf32> to vector<256xf32>
    %25 = vector.shape_cast %24 : vector<256xf32> to vector<256x1xf32>
    %cst_14 = arith.constant 1.000000e-24 : f32
    %26 = vector.broadcast %cst_14 : f32 to vector<256x1xf32>
    %27 = arith.maximumf %25, %26 : vector<256x1xf32>
    %28 = math.rsqrt %27 : vector<256x1xf32>
    %29 = vector.broadcast %28 : vector<256x1xf32> to vector<256x3xf32>
    %30 = arith.mulf %22, %29 : vector<256x3xf32>
    %c0_15 = arith.constant 0 : index
    %c0_16 = arith.constant 0 : index
    %31 = vector.load %arg6[%c0_15, %c0_16] : memref<256x3xf32, #tpu.memory_space<vmem>>, vector<256x3xf32>
    tpu.vector_store %arg6[%c0_15, %c0_16], %30 {strides = array<i32>} : memref<256x3xf32, #tpu.memory_space<vmem>>, vector<256x3xf32>,
    return
  }
  func.func @transform_0(%arg0: i32) -> (i32, i32) {
    %c0_i32 = arith.constant 0 : i32
    %c0_i32_0 = arith.constant 0 : i32
    return %arg0, %c0_i32 : i32, i32
  }
  func.func @transform_1(%arg0: i32) -> (i32, i32) {
    %c0_i32 = arith.constant 0 : i32
    %c0_i32_0 = arith.constant 0 : i32
    %c0_i32_1 = arith.constant 0 : i32
    return %c0_i32, %c0_i32_0 : i32, i32
  }
  func.func @transform_2(%arg0: i32) -> (i32, i32) {
    %c0_i32 = arith.constant 0 : i32
    %c0_i32_0 = arith.constant 0 : i32
    %c0_i32_1 = arith.constant 0 : i32
    return %c0_i32, %c0_i32_0 : i32, i32
  }
  func.func @transform_3(%arg0: i32) -> (i32, i32) {
    %c0_i32 = arith.constant 0 : i32
    %c0_i32_0 = arith.constant 0 : i32
    %c0_i32_1 = arith.constant 0 : i32
    return %c0_i32, %c0_i32_0 : i32, i32
  }
  func.func @transform_4(%arg0: i32) -> (i32, i32) {
    %c0_i32 = arith.constant 0 : i32
    %c0_i32_0 = arith.constant 0 : i32
    %c0_i32_1 = arith.constant 0 : i32
    return %c0_i32, %c0_i32_0 : i32, i32
  }
  func.func @transform_5(%arg0: i32) -> (i32, i32) {
    %c0_i32 = arith.constant 0 : i32
    %c0_i32_0 = arith.constant 0 : i32
    return %arg0, %c0_i32 : i32, i32
  }
}

</mosaic_0001>

<llo_original>
// kernel: tpu_custom_call.1
$region0: #{tpu_custom_call.1}
  #allocation0 [shape = 'u32[]', space=smem, size = 0x4, offset = 0x4, fixed_abs, tag = 'smem constant byte address 0x4 - core index']
  #allocation1 [shape = 'u32[144,128]{1,0:T(1,128)}', space=vmem, size = 0x12000, scoped, tag = 'internal scratch']
  %s0 = inlined_call_operand.vmem [shape: bf16[256,784], index: 0, kind: input, shape index: {}]
  %s1 = inlined_call_operand.vmem [shape: bf16[784,400], index: 1, kind: input, shape index: {}]
  %s2 = inlined_call_operand.vmem [shape: f32[1,400], index: 2, kind: input, shape index: {}]
  %s3 = inlined_call_operand.vmem [shape: f32[400,6], index: 3, kind: input, shape index: {}]
  %s4 = inlined_call_operand.vmem [shape: f32[1,6], index: 4, kind: input, shape index: {}]
  %s5 = inlined_call_operand.vmem [shape: f32[256,3], index: 5, kind: output, shape index: {}]
  %s6 = sld [smem:[#allocation0]]
  $region30: #{tpu_custom_call.1} parent=0
    _
  %s8 = ssub.s32 1, %s6
  %s9 = scalar_select 0, %s8, %s6
  // Predicated region
  $region2: #{tpu_custom_call.1} parent=0 // pred_check
    _
  $region3: #{tpu_custom_call.1} parent=0 // pred_check_branch
    %11 = sbr.rel (0) target = $region5
  $region4: #{tpu_custom_call.1} parent=0 // pred_region
    _
  $region5: #{tpu_custom_call.1} parent=0 // pred_fallthru
    _
  // Predicated region
  $region6: #{tpu_custom_call.1} parent=0 // pred_check
    _
  $region7: #{tpu_custom_call.1} parent=0 // pred_check_branch
    %13 = sbr.rel (0) target = $region9
  $region8: #{tpu_custom_call.1} parent=0 // pred_region
    _
  $region9: #{tpu_custom_call.1} parent=0 // pred_fallthru
    _
  // Predicated region
  $region10: #{tpu_custom_call.1} parent=0 // pred_check
    _
  $region11: #{tpu_custom_call.1} parent=0 // pred_check_branch
    %15 = sbr.rel (0) target = $region13
  $region12: #{tpu_custom_call.1} parent=0 // pred_region
    _
  $region13: #{tpu_custom_call.1} parent=0 // pred_fallthru
    _
  // Predicated region
  $region14: #{tpu_custom_call.1} parent=0 // pred_check
    _
  $region15: #{tpu_custom_call.1} parent=0 // pred_check_branch
    %17 = sbr.rel (0) target = $region17
  $region16: #{tpu_custom_call.1} parent=0 // pred_region
    _
  $region17: #{tpu_custom_call.1} parent=0 // pred_fallthru
    _
  // Predicated region
  $region18: #{tpu_custom_call.1} parent=0 // pred_check
    _
  $region19: #{tpu_custom_call.1} parent=0 // pred_check_branch
    %19 = sbr.rel (0) target = $region21
  $region20: #{tpu_custom_call.1} parent=0 // pred_region
    _
  $region21: #{tpu_custom_call.1} parent=0 // pred_fallthru
    _
  %v21 = vld [vmem:[%s0] sm:$0xff]
  %v22 = vld [vmem:[%s0 + $0x8] sm:$0xff]
  %v23 = vld [vmem:[%s0 + $0x10] sm:$0xff]
  %v24 = vld [vmem:[%s0 + $0x18] sm:$0xf]
  %v25 = vld [vmem:[%s0 + $0x1c] sm:$0xff]
  %v26 = vld [vmem:[%s0 + $0x24] sm:$0xff]
  %v27 = vld [vmem:[%s0 + $0x2c] sm:$0xff]
  %v28 = vld [vmem:[%s0 + $0x34] sm:$0xf]
  %v29 = vld [vmem:[%s0 + $0x38] sm:$0xff]
  %v30 = vld [vmem:[%s0 + $0x40] sm:$0xff]
  %v31 = vld [vmem:[%s0 + $0x48] sm:$0xff]
  %v32 = vld [vmem:[%s0 + $0x50] sm:$0xf]
  %v33 = vld [vmem:[%s0 + $0x54] sm:$0xff]
  %v34 = vld [vmem:[%s0 + $0x5c] sm:$0xff]
  %v35 = vld [vmem:[%s0 + $0x64] sm:$0xff]
  %v36 = vld [vmem:[%s0 + $0x6c] sm:$0xf]
  %v37 = vld [vmem:[%s0 + $0x70] sm:$0xff]
  %v38 = vld [vmem:[%s0 + $0x78] sm:$0xff]
  %v39 = vld [vmem:[%s0 + $0x80] sm:$0xff]
  %v40 = vld [vmem:[%s0 + $0x88] sm:$0xf]
  %v41 = vld [vmem:[%s0 + $0x8c] sm:$0xff]
  %v42 = vld [vmem:[%s0 + $0x94] sm:$0xff]
  %v43 = vld [vmem:[%s0 + $0x9c] sm:$0xff]
  %v44 = vld [vmem:[%s0 + $0xa4] sm:$0xf]
  %v45 = vld [vmem:[%s0 + $0xa8] sm:$0xff]
  %v46 = vld [vmem:[%s0 + $0xb0] sm:$0xff]
  %v47 = vld [vmem:[%s0 + $0xb8] sm:$0xff]
  %v48 = vld [vmem:[%s0 + $0xc0] sm:$0xf]
  %v49 = vld [vmem:[%s0 + $0xc4] sm:$0xff]
  %v50 = vld [vmem:[%s0 + $0xcc] sm:$0xff]
  %v51 = vld [vmem:[%s0 + $0xd4] sm:$0xff]
  %v52 = vld [vmem:[%s0 + $0xdc] sm:$0xf]
  %v53 = vld [vmem:[%s0 + $0xe0] sm:$0xff]
  %v54 = vld [vmem:[%s0 + $0xe8] sm:$0xff]
  %v55 = vld [vmem:[%s0 + $0xf0] sm:$0xff]
  %v56 = vld [vmem:[%s0 + $0xf8] sm:$0xf]
  %v57 = vld [vmem:[%s0 + $0xfc] sm:$0xff]
  %v58 = vld [vmem:[%s0 + $0x104] sm:$0xff]
  %v59 = vld [vmem:[%s0 + $0x10c] sm:$0xff]
  %v60 = vld [vmem:[%s0 + $0x114] sm:$0xf]
  %v61 = vld [vmem:[%s0 + $0x118] sm:$0xff]
  %v62 = vld [vmem:[%s0 + $0x120] sm:$0xff]
  %v63 = vld [vmem:[%s0 + $0x128] sm:$0xff]
  %v64 = vld [vmem:[%s0 + $0x130] sm:$0xf]
  %v65 = vld [vmem:[%s0 + $0x134] sm:$0xff]
  %v66 = vld [vmem:[%s0 + $0x13c] sm:$0xff]
  %v67 = vld [vmem:[%s0 + $0x144] sm:$0xff]
  %v68 = vld [vmem:[%s0 + $0x14c] sm:$0xf]
  %v69 = vld [vmem:[%s0 + $0x150] sm:$0xff]
  %v70 = vld [vmem:[%s0 + $0x158] sm:$0xff]
  %v71 = vld [vmem:[%s0 + $0x160] sm:$0xff]
  %v72 = vld [vmem:[%s0 + $0x168] sm:$0xf]
  %v73 = vld [vmem:[%s0 + $0x16c] sm:$0xff]
  %v74 = vld [vmem:[%s0 + $0x174] sm:$0xff]
  %v75 = vld [vmem:[%s0 + $0x17c] sm:$0xff]
  %v76 = vld [vmem:[%s0 + $0x184] sm:$0xf]
  %v77 = vld [vmem:[%s0 + $0x188] sm:$0xff]
  %v78 = vld [vmem:[%s0 + $0x190] sm:$0xff]
  %v79 = vld [vmem:[%s0 + $0x198] sm:$0xff]
  %v80 = vld [vmem:[%s0 + $0x1a0] sm:$0xf]
  %v81 = vld [vmem:[%s0 + $0x1a4] sm:$0xff]
  %v82 = vld [vmem:[%s0 + $0x1ac] sm:$0xff]
  %v83 = vld [vmem:[%s0 + $0x1b4] sm:$0xff]
  %v84 = vld [vmem:[%s0 + $0x1bc] sm:$0xf]
  %v85 = vld [vmem:[%s0 + $0x1c0] sm:$0xff]
  %v86 = vld [vmem:[%s0 + $0x1c8] sm:$0xff]
  %v87 = vld [vmem:[%s0 + $0x1d0] sm:$0xff]
  %v88 = vld [vmem:[%s0 + $0x1d8] sm:$0xf]
  %v89 = vld [vmem:[%s0 + $0x1dc] sm:$0xff]
  %v90 = vld [vmem:[%s0 + $0x1e4] sm:$0xff]
  %v91 = vld [vmem:[%s0 + $0x1ec] sm:$0xff]
  %v92 = vld [vmem:[%s0 + $0x1f4] sm:$0xf]
  %v93 = vld [vmem:[%s0 + $0x1f8] sm:$0xff]
  %v94 = vld [vmem:[%s0 + $0x200] sm:$0xff]
  %v95 = vld [vmem:[%s0 + $0x208] sm:$0xff]
  %v96 = vld [vmem:[%s0 + $0x210] sm:$0xf]
  %v97 = vld [vmem:[%s0 + $0x214] sm:$0xff]
  %v98 = vld [vmem:[%s0 + $0x21c] sm:$0xff]
  %v99 = vld [vmem:[%s0 + $0x224] sm:$0xff]
  %v100 = vld [vmem:[%s0 + $0x22c] sm:$0xf]
  %v101 = vld [vmem:[%s0 + $0x230] sm:$0xff]
  %v102 = vld [vmem:[%s0 + $0x238] sm:$0xff]
  %v103 = vld [vmem:[%s0 + $0x240] sm:$0xff]
  %v104 = vld [vmem:[%s0 + $0x248] sm:$0xf]
  %v105 = vld [vmem:[%s0 + $0x24c] sm:$0xff]
  %v106 = vld [vmem:[%s0 + $0x254] sm:$0xff]
  %v107 = vld [vmem:[%s0 + $0x25c] sm:$0xff]
  %v108 = vld [vmem:[%s0 + $0x264] sm:$0xf]
  %v109 = vld [vmem:[%s0 + $0x268] sm:$0xff]
  %v110 = vld [vmem:[%s0 + $0x270] sm:$0xff]
  %v111 = vld [vmem:[%s0 + $0x278] sm:$0xff]
  %v112 = vld [vmem:[%s0 + $0x280] sm:$0xf]
  %v113 = vld [vmem:[%s0 + $0x284] sm:$0xff]
  %v114 = vld [vmem:[%s0 + $0x28c] sm:$0xff]
  %v115 = vld [vmem:[%s0 + $0x294] sm:$0xff]
  %v116 = vld [vmem:[%s0 + $0x29c] sm:$0xf]
  %v117 = vld [vmem:[%s0 + $0x2a0] sm:$0xff]
  %v118 = vld [vmem:[%s0 + $0x2a8] sm:$0xff]
  %v119 = vld [vmem:[%s0 + $0x2b0] sm:$0xff]
  %v120 = vld [vmem:[%s0 + $0x2b8] sm:$0xf]
  %v121 = vld [vmem:[%s0 + $0x2bc] sm:$0xff]
  %v122 = vld [vmem:[%s0 + $0x2c4] sm:$0xff]
  %v123 = vld [vmem:[%s0 + $0x2cc] sm:$0xff]
  %v124 = vld [vmem:[%s0 + $0x2d4] sm:$0xf]
  %v125 = vld [vmem:[%s0 + $0x2d8] sm:$0xff]
  %v126 = vld [vmem:[%s0 + $0x2e0] sm:$0xff]
  %v127 = vld [vmem:[%s0 + $0x2e8] sm:$0xff]
  %v128 = vld [vmem:[%s0 + $0x2f0] sm:$0xf]
  %v129 = vld [vmem:[%s0 + $0x2f4] sm:$0xff]
  %v130 = vld [vmem:[%s0 + $0x2fc] sm:$0xff]
  %v131 = vld [vmem:[%s0 + $0x304] sm:$0xff]
  %v132 = vld [vmem:[%s0 + $0x30c] sm:$0xf]
  %v133 = vld [vmem:[%s0 + $0x310] sm:$0xff]
  %v134 = vld [vmem:[%s0 + $0x318] sm:$0xff]
  %v135 = vld [vmem:[%s0 + $0x320] sm:$0xff]
  %v136 = vld [vmem:[%s0 + $0x328] sm:$0xf]
  %v137 = vld [vmem:[%s0 + $0x32c] sm:$0xff]
  %v138 = vld [vmem:[%s0 + $0x334] sm:$0xff]
  %v139 = vld [vmem:[%s0 + $0x33c] sm:$0xff]
  %v140 = vld [vmem:[%s0 + $0x344] sm:$0xf]
  %v141 = vld [vmem:[%s0 + $0x348] sm:$0xff]
  %v142 = vld [vmem:[%s0 + $0x350] sm:$0xff]
  %v143 = vld [vmem:[%s0 + $0x358] sm:$0xff]
  %v144 = vld [vmem:[%s0 + $0x360] sm:$0xf]
  %v145 = vld [vmem:[%s0 + $0x364] sm:$0xff]
  %v146 = vld [vmem:[%s0 + $0x36c] sm:$0xff]
  %v147 = vld [vmem:[%s0 + $0x374] sm:$0xff]
  %v148 = vld [vmem:[%s0 + $0x37c] sm:$0xf]
  %v149 = vld [vmem:[%s1] sm:$0xff]
  %v150 = vld [vmem:[%s1 + $0x8] sm:$0xff]
  %v151 = vld [vmem:[%s1 + $0x10] sm:$0xff]
  %v152 = vld [vmem:[%s1 + $0x18] sm:$0xff]
  %v153 = vld [vmem:[%s1 + $0x20] sm:$0xff]
  %v154 = vld [vmem:[%s1 + $0x28] sm:$0xff]
  %v155 = vld [vmem:[%s1 + $0x30] sm:$0xff]
  %v156 = vld [vmem:[%s1 + $0x38] sm:$0xff]
  %v157 = vld [vmem:[%s1 + $0x40] sm:$0xff]
  %v158 = vld [vmem:[%s1 + $0x48] sm:$0xff]
  %v159 = vld [vmem:[%s1 + $0x50] sm:$0xff]
  %v160 = vld [vmem:[%s1 + $0x58] sm:$0xff]
  %v161 = vld [vmem:[%s1 + $0x60] sm:$0xff]
  %v162 = vld [vmem:[%s1 + $0x68] sm:$0xff]
  %v163 = vld [vmem:[%s1 + $0x70] sm:$0xff]
  %v164 = vld [vmem:[%s1 + $0x78] sm:$0xff]
  %v165 = vld [vmem:[%s1 + $0x80] sm:$0xff]
  %v166 = vld [vmem:[%s1 + $0x88] sm:$0xff]
  %v167 = vld [vmem:[%s1 + $0x90] sm:$0xff]
  %v168 = vld [vmem:[%s1 + $0x98] sm:$0xff]
  %v169 = vld [vmem:[%s1 + $0xa0] sm:$0xff]
  %v170 = vld [vmem:[%s1 + $0xa8] sm:$0xff]
  %v171 = vld [vmem:[%s1 + $0xb0] sm:$0xff]
  %v172 = vld [vmem:[%s1 + $0xb8] sm:$0xff]
  %v173 = vld [vmem:[%s1 + $0xc0] sm:$0xff]
  %v174 = vld [vmem:[%s1 + $0xc8] sm:$0xff]
  %v175 = vld [vmem:[%s1 + $0xd0] sm:$0xff]
  %v176 = vld [vmem:[%s1 + $0xd8] sm:$0xff]
  %v177 = vld [vmem:[%s1 + $0xe0] sm:$0xff]
  %v178 = vld [vmem:[%s1 + $0xe8] sm:$0xff]
  %v179 = vld [vmem:[%s1 + $0xf0] sm:$0xff]
  %v180 = vld [vmem:[%s1 + $0xf8] sm:$0xff]
  %v181 = vld [vmem:[%s1 + $0x100] sm:$0xff]
  %v182 = vld [vmem:[%s1 + $0x108] sm:$0xff]
  %v183 = vld [vmem:[%s1 + $0x110] sm:$0xff]
  %v184 = vld [vmem:[%s1 + $0x118] sm:$0xff]
  %v185 = vld [vmem:[%s1 + $0x120] sm:$0xff]
  %v186 = vld [vmem:[%s1 + $0x128] sm:$0xff]
  %v187 = vld [vmem:[%s1 + $0x130] sm:$0xff]
  %v188 = vld [vmem:[%s1 + $0x138] sm:$0xff]
  %v189 = vld [vmem:[%s1 + $0x140] sm:$0xff]
  %v190 = vld [vmem:[%s1 + $0x148] sm:$0xff]
  %v191 = vld [vmem:[%s1 + $0x150] sm:$0xff]
  %v192 = vld [vmem:[%s1 + $0x158] sm:$0xff]
  %v193 = vld [vmem:[%s1 + $0x160] sm:$0xff]
  %v194 = vld [vmem:[%s1 + $0x168] sm:$0xff]
  %v195 = vld [vmem:[%s1 + $0x170] sm:$0xff]
  %v196 = vld [vmem:[%s1 + $0x178] sm:$0xff]
  %v197 = vld [vmem:[%s1 + $0x180] sm:$0xff]
  %v198 = vld [vmem:[%s1 + $0x188] sm:$0xff]
  %v199 = vld [vmem:[%s1 + $0x190] sm:$0xff]
  %v200 = vld [vmem:[%s1 + $0x198] sm:$0xff]
  %v201 = vld [vmem:[%s1 + $0x1a0] sm:$0xff]
  %v202 = vld [vmem:[%s1 + $0x1a8] sm:$0xff]
  %v203 = vld [vmem:[%s1 + $0x1b0] sm:$0xff]
  %v204 = vld [vmem:[%s1 + $0x1b8] sm:$0xff]
  %v205 = vld [vmem:[%s1 + $0x1c0] sm:$0xff]
  %v206 = vld [vmem:[%s1 + $0x1c8] sm:$0xff]
  %v207 = vld [vmem:[%s1 + $0x1d0] sm:$0xff]
  %v208 = vld [vmem:[%s1 + $0x1d8] sm:$0xff]
  %v209 = vld [vmem:[%s1 + $0x1e0] sm:$0xff]
  %v210 = vld [vmem:[%s1 + $0x1e8] sm:$0xff]
  %v211 = vld [vmem:[%s1 + $0x1f0] sm:$0xff]
  %v212 = vld [vmem:[%s1 + $0x1f8] sm:$0xff]
  %v213 = vld [vmem:[%s1 + $0x200] sm:$0xff]
  %v214 = vld [vmem:[%s1 + $0x208] sm:$0xff]
  %v215 = vld [vmem:[%s1 + $0x210] sm:$0xff]
  %v216 = vld [vmem:[%s1 + $0x218] sm:$0xff]
  %v217 = vld [vmem:[%s1 + $0x220] sm:$0xff]
  %v218 = vld [vmem:[%s1 + $0x228] sm:$0xff]
  %v219 = vld [vmem:[%s1 + $0x230] sm:$0xff]
  %v220 = vld [vmem:[%s1 + $0x238] sm:$0xff]
  %v221 = vld [vmem:[%s1 + $0x240] sm:$0xff]
  %v222 = vld [vmem:[%s1 + $0x248] sm:$0xff]
  %v223 = vld [vmem:[%s1 + $0x250] sm:$0xff]
  %v224 = vld [vmem:[%s1 + $0x258] sm:$0xff]
  %v225 = vld [vmem:[%s1 + $0x260] sm:$0xff]
  %v226 = vld [vmem:[%s1 + $0x268] sm:$0xff]
  %v227 = vld [vmem:[%s1 + $0x270] sm:$0xff]
  %v228 = vld [vmem:[%s1 + $0x278] sm:$0xff]
  %v229 = vld [vmem:[%s1 + $0x280] sm:$0xff]
  %v230 = vld [vmem:[%s1 + $0x288] sm:$0xff]
  %v231 = vld [vmem:[%s1 + $0x290] sm:$0xff]
  %v232 = vld [vmem:[%s1 + $0x298] sm:$0xff]
  %v233 = vld [vmem:[%s1 + $0x2a0] sm:$0xff]
  %v234 = vld [vmem:[%s1 + $0x2a8] sm:$0xff]
  %v235 = vld [vmem:[%s1 + $0x2b0] sm:$0xff]
  %v236 = vld [vmem:[%s1 + $0x2b8] sm:$0xff]
  %v237 = vld [vmem:[%s1 + $0x2c0] sm:$0xff]
  %v238 = vld [vmem:[%s1 + $0x2c8] sm:$0xff]
  %v239 = vld [vmem:[%s1 + $0x2d0] sm:$0xff]
  %v240 = vld [vmem:[%s1 + $0x2d8] sm:$0xff]
  %v241 = vld [vmem:[%s1 + $0x2e0] sm:$0xff]
  %v242 = vld [vmem:[%s1 + $0x2e8] sm:$0xff]
  %v243 = vld [vmem:[%s1 + $0x2f0] sm:$0xff]
  %v244 = vld [vmem:[%s1 + $0x2f8] sm:$0xff]
  %v245 = vld [vmem:[%s1 + $0x300] sm:$0xff]
  %v246 = vld [vmem:[%s1 + $0x308] sm:$0xff]
  %v247 = vld [vmem:[%s1 + $0x310] sm:$0xff]
  %v248 = vld [vmem:[%s1 + $0x318] sm:$0xff]
  %v249 = vld [vmem:[%s1 + $0x320] sm:$0xff]
  %v250 = vld [vmem:[%s1 + $0x328] sm:$0xff]
  %v251 = vld [vmem:[%s1 + $0x330] sm:$0xff]
  %v252 = vld [vmem:[%s1 + $0x338] sm:$0xff]
  %v253 = vld [vmem:[%s1 + $0x340] sm:$0xff]
  %v254 = vld [vmem:[%s1 + $0x348] sm:$0xff]
  %v255 = vld [vmem:[%s1 + $0x350] sm:$0xff]
  %v256 = vld [vmem:[%s1 + $0x358] sm:$0xff]
  %v257 = vld [vmem:[%s1 + $0x360] sm:$0xff]
  %v258 = vld [vmem:[%s1 + $0x368] sm:$0xff]
  %v259 = vld [vmem:[%s1 + $0x370] sm:$0xff]
  %v260 = vld [vmem:[%s1 + $0x378] sm:$0xff]
  %v261 = vld [vmem:[%s1 + $0x380] sm:$0xff]
  %v262 = vld [vmem:[%s1 + $0x388] sm:$0xff]
  %v263 = vld [vmem:[%s1 + $0x390] sm:$0xff]
  %v264 = vld [vmem:[%s1 + $0x398] sm:$0xff]
  %v265 = vld [vmem:[%s1 + $0x3a0] sm:$0xff]
  %v266 = vld [vmem:[%s1 + $0x3a8] sm:$0xff]
  %v267 = vld [vmem:[%s1 + $0x3b0] sm:$0xff]
  %v268 = vld [vmem:[%s1 + $0x3b8] sm:$0xff]
  %v269 = vld [vmem:[%s1 + $0x3c0] sm:$0xff]
  %v270 = vld [vmem:[%s1 + $0x3c8] sm:$0xff]
  %v271 = vld [vmem:[%s1 + $0x3d0] sm:$0xff]
  %v272 = vld [vmem:[%s1 + $0x3d8] sm:$0xff]
  %v273 = vld [vmem:[%s1 + $0x3e0] sm:$0xff]
  %v274 = vld [vmem:[%s1 + $0x3e8] sm:$0xff]
  %v275 = vld [vmem:[%s1 + $0x3f0] sm:$0xff]
  %v276 = vld [vmem:[%s1 + $0x3f8] sm:$0xff]
  %v277 = vld [vmem:[%s1 + $0x400] sm:$0xff]
  %v278 = vld [vmem:[%s1 + $0x408] sm:$0xff]
  %v279 = vld [vmem:[%s1 + $0x410] sm:$0xff]
  %v280 = vld [vmem:[%s1 + $0x418] sm:$0xff]
  %v281 = vld [vmem:[%s1 + $0x420] sm:$0xff]
  %v282 = vld [vmem:[%s1 + $0x428] sm:$0xff]
  %v283 = vld [vmem:[%s1 + $0x430] sm:$0xff]
  %v284 = vld [vmem:[%s1 + $0x438] sm:$0xff]
  %v285 = vld [vmem:[%s1 + $0x440] sm:$0xff]
  %v286 = vld [vmem:[%s1 + $0x448] sm:$0xff]
  %v287 = vld [vmem:[%s1 + $0x450] sm:$0xff]
  %v288 = vld [vmem:[%s1 + $0x458] sm:$0xff]
  %v289 = vld [vmem:[%s1 + $0x460] sm:$0xff]
  %v290 = vld [vmem:[%s1 + $0x468] sm:$0xff]
  %v291 = vld [vmem:[%s1 + $0x470] sm:$0xff]
  %v292 = vld [vmem:[%s1 + $0x478] sm:$0xff]
  %v293 = vld [vmem:[%s1 + $0x480] sm:$0xff]
  %v294 = vld [vmem:[%s1 + $0x488] sm:$0xff]
  %v295 = vld [vmem:[%s1 + $0x490] sm:$0xff]
  %v296 = vld [vmem:[%s1 + $0x498] sm:$0xff]
  %v297 = vld [vmem:[%s1 + $0x4a0] sm:$0xff]
  %v298 = vld [vmem:[%s1 + $0x4a8] sm:$0xff]
  %v299 = vld [vmem:[%s1 + $0x4b0] sm:$0xff]
  %v300 = vld [vmem:[%s1 + $0x4b8] sm:$0xff]
  %v301 = vld [vmem:[%s1 + $0x4c0] sm:$0xff]
  %v302 = vld [vmem:[%s1 + $0x4c8] sm:$0xff]
  %v303 = vld [vmem:[%s1 + $0x4d0] sm:$0xff]
  %v304 = vld [vmem:[%s1 + $0x4d8] sm:$0xff]
  %v305 = vld [vmem:[%s1 + $0x4e0] sm:$0xff]
  %v306 = vld [vmem:[%s1 + $0x4e8] sm:$0xff]
  %v307 = vld [vmem:[%s1 + $0x4f0] sm:$0xff]
  %v308 = vld [vmem:[%s1 + $0x4f8] sm:$0xff]
  %v309 = vld [vmem:[%s1 + $0x500] sm:$0xff]
  %v310 = vld [vmem:[%s1 + $0x508] sm:$0xff]
  %v311 = vld [vmem:[%s1 + $0x510] sm:$0xff]
  %v312 = vld [vmem:[%s1 + $0x518] sm:$0xff]
  %v313 = vld [vmem:[%s1 + $0x520] sm:$0xff]
  %v314 = vld [vmem:[%s1 + $0x528] sm:$0xff]
  %v315 = vld [vmem:[%s1 + $0x530] sm:$0xff]
  %v316 = vld [vmem:[%s1 + $0x538] sm:$0xff]
  %v317 = vld [vmem:[%s1 + $0x540] sm:$0xff]
  %v318 = vld [vmem:[%s1 + $0x548] sm:$0xff]
  %v319 = vld [vmem:[%s1 + $0x550] sm:$0xff]
  %v320 = vld [vmem:[%s1 + $0x558] sm:$0xff]
  %v321 = vld [vmem:[%s1 + $0x560] sm:$0xff]
  %v322 = vld [vmem:[%s1 + $0x568] sm:$0xff]
  %v323 = vld [vmem:[%s1 + $0x570] sm:$0xff]
  %v324 = vld [vmem:[%s1 + $0x578] sm:$0xff]
  %v325 = vld [vmem:[%s1 + $0x580] sm:$0xff]
  %v326 = vld [vmem:[%s1 + $0x588] sm:$0xff]
  %v327 = vld [vmem:[%s1 + $0x590] sm:$0xff]
  %v328 = vld [vmem:[%s1 + $0x598] sm:$0xff]
  %v329 = vld [vmem:[%s1 + $0x5a0] sm:$0xff]
  %v330 = vld [vmem:[%s1 + $0x5a8] sm:$0xff]
  %v331 = vld [vmem:[%s1 + $0x5b0] sm:$0xff]
  %v332 = vld [vmem:[%s1 + $0x5b8] sm:$0xff]
  %v333 = vld [vmem:[%s1 + $0x5c0] sm:$0xff]
  %v334 = vld [vmem:[%s1 + $0x5c8] sm:$0xff]
  %v335 = vld [vmem:[%s1 + $0x5d0] sm:$0xff]
  %v336 = vld [vmem:[%s1 + $0x5d8] sm:$0xff]
  %v337 = vld [vmem:[%s1 + $0x5e0] sm:$0xff]
  %v338 = vld [vmem:[%s1 + $0x5e8] sm:$0xff]
  %v339 = vld [vmem:[%s1 + $0x5f0] sm:$0xff]
  %v340 = vld [vmem:[%s1 + $0x5f8] sm:$0xff]
  %v341 = vld [vmem:[%s1 + $0x600] sm:$0xff]
  %v342 = vld [vmem:[%s1 + $0x608] sm:$0xff]
  %v343 = vld [vmem:[%s1 + $0x610] sm:$0xff]
  %v344 = vld [vmem:[%s1 + $0x618] sm:$0xff]
  %v345 = vld [vmem:[%s2] sm:$0xf]
  %v347 = vlaneseq
  %v348 = vshrl.u32 %v347, 7
  %v349 = vsub.s32 0, %v348
  %v350 = vrot.slane %v345, %v349
  %v351 = vlaneseq
  %v352 = vshrl.u32 %v351, 7
  %v353 = vsub.s32 1, %v352
  %v354 = vrot.slane %v345, %v353
  %v355 = vlaneseq
  %v356 = vshrl.u32 %v355, 7
  %v357 = vsub.s32 2, %v356
  %v358 = vrot.slane %v345, %v357
  %v359 = vlaneseq
  %v360 = vshrl.u32 %v359, 7
  %v361 = vsub.s32 3, %v360
  %v362 = vrot.slane %v345, %v361
  %v495 = vunpack.c.l.b16 %v21
  %v496 = vunpack.c.h.b16 %v21
  %v497 = vunpack.c.l.b16 %v22
  %v498 = vunpack.c.h.b16 %v22
  %v499 = vunpack.c.l.b16 %v23
  %v500 = vunpack.c.h.b16 %v23
  %v501 = vunpack.c.l.b16 %v24
  %v502 = vunpack.c.l.b16 %v25
  %v503 = vunpack.c.h.b16 %v25
  %v504 = vunpack.c.l.b16 %v26
  %v505 = vunpack.c.h.b16 %v26
  %v506 = vunpack.c.l.b16 %v27
  %v507 = vunpack.c.h.b16 %v27
  %v508 = vunpack.c.l.b16 %v28
  %v509 = vunpack.c.l.b16 %v29
  %v510 = vunpack.c.h.b16 %v29
  %v511 = vunpack.c.l.b16 %v30
  %v512 = vunpack.c.h.b16 %v30
  %v513 = vunpack.c.l.b16 %v31
  %v514 = vunpack.c.h.b16 %v31
  %v515 = vunpack.c.l.b16 %v32
  %v516 = vunpack.c.l.b16 %v33
  %v517 = vunpack.c.h.b16 %v33
  %v518 = vunpack.c.l.b16 %v34
  %v519 = vunpack.c.h.b16 %v34
  %v520 = vunpack.c.l.b16 %v35
  %v521 = vunpack.c.h.b16 %v35
  %v522 = vunpack.c.l.b16 %v36
  %v523 = vunpack.c.l.b16 %v37
  %v524 = vunpack.c.h.b16 %v37
  %v525 = vunpack.c.l.b16 %v38
  %v526 = vunpack.c.h.b16 %v38
  %v527 = vunpack.c.l.b16 %v39
  %v528 = vunpack.c.h.b16 %v39
  %v529 = vunpack.c.l.b16 %v40
  %v530 = vunpack.c.l.b16 %v41
  %v531 = vunpack.c.h.b16 %v41
  %v532 = vunpack.c.l.b16 %v42
  %v533 = vunpack.c.h.b16 %v42
  %v534 = vunpack.c.l.b16 %v43
  %v535 = vunpack.c.h.b16 %v43
  %v536 = vunpack.c.l.b16 %v44
  %v537 = vunpack.c.l.b16 %v45
  %v538 = vunpack.c.h.b16 %v45
  %v539 = vunpack.c.l.b16 %v46
  %v540 = vunpack.c.h.b16 %v46
  %v541 = vunpack.c.l.b16 %v47
  %v542 = vunpack.c.h.b16 %v47
  %v543 = vunpack.c.l.b16 %v48
  %v544 = vunpack.c.l.b16 %v49
  %v545 = vunpack.c.h.b16 %v49
  %v546 = vunpack.c.l.b16 %v50
  %v547 = vunpack.c.h.b16 %v50
  %v548 = vunpack.c.l.b16 %v51
  %v549 = vunpack.c.h.b16 %v51
  %v550 = vunpack.c.l.b16 %v52
  %v551 = vunpack.c.l.b16 %v53
  %v552 = vunpack.c.h.b16 %v53
  %v553 = vunpack.c.l.b16 %v54
  %v554 = vunpack.c.h.b16 %v54
  %v555 = vunpack.c.l.b16 %v55
  %v556 = vunpack.c.h.b16 %v55
  %v557 = vunpack.c.l.b16 %v56
  %v558 = vunpack.c.l.b16 %v57
  %v559 = vunpack.c.h.b16 %v57
  %v560 = vunpack.c.l.b16 %v58
  %v561 = vunpack.c.h.b16 %v58
  %v562 = vunpack.c.l.b16 %v59
  %v563 = vunpack.c.h.b16 %v59
  %v564 = vunpack.c.l.b16 %v60
  %v565 = vunpack.c.l.b16 %v61
  %v566 = vunpack.c.h.b16 %v61
  %v567 = vunpack.c.l.b16 %v62
  %v568 = vunpack.c.h.b16 %v62
  %v569 = vunpack.c.l.b16 %v63
  %v570 = vunpack.c.h.b16 %v63
  %v571 = vunpack.c.l.b16 %v64
  %v572 = vunpack.c.l.b16 %v65
  %v573 = vunpack.c.h.b16 %v65
  %v574 = vunpack.c.l.b16 %v66
  %v575 = vunpack.c.h.b16 %v66
  %v576 = vunpack.c.l.b16 %v67
  %v577 = vunpack.c.h.b16 %v67
  %v578 = vunpack.c.l.b16 %v68
  %v579 = vunpack.c.l.b16 %v69
  %v580 = vunpack.c.h.b16 %v69
  %v581 = vunpack.c.l.b16 %v70
  %v582 = vunpack.c.h.b16 %v70
  %v583 = vunpack.c.l.b16 %v71
  %v584 = vunpack.c.h.b16 %v71
  %v585 = vunpack.c.l.b16 %v72
  %v586 = vunpack.c.l.b16 %v73
  %v587 = vunpack.c.h.b16 %v73
  %v588 = vunpack.c.l.b16 %v74
  %v589 = vunpack.c.h.b16 %v74
  %v590 = vunpack.c.l.b16 %v75
  %v591 = vunpack.c.h.b16 %v75
  %v592 = vunpack.c.l.b16 %v76
  %v593 = vunpack.c.l.b16 %v77
  %v594 = vunpack.c.h.b16 %v77
  %v595 = vunpack.c.l.b16 %v78
  %v596 = vunpack.c.h.b16 %v78
  %v597 = vunpack.c.l.b16 %v79
  %v598 = vunpack.c.h.b16 %v79
  %v599 = vunpack.c.l.b16 %v80
  %v600 = vunpack.c.l.b16 %v81
  %v601 = vunpack.c.h.b16 %v81
  %v602 = vunpack.c.l.b16 %v82
  %v603 = vunpack.c.h.b16 %v82
  %v604 = vunpack.c.l.b16 %v83
  %v605 = vunpack.c.h.b16 %v83
  %v606 = vunpack.c.l.b16 %v84
  %v607 = vunpack.c.l.b16 %v85
  %v608 = vunpack.c.h.b16 %v85
  %v609 = vunpack.c.l.b16 %v86
  %v610 = vunpack.c.h.b16 %v86
  %v611 = vunpack.c.l.b16 %v87
  %v612 = vunpack.c.h.b16 %v87
  %v613 = vunpack.c.l.b16 %v88
  %v614 = vunpack.c.l.b16 %v89
  %v615 = vunpack.c.h.b16 %v89
  %v616 = vunpack.c.l.b16 %v90
  %v617 = vunpack.c.h.b16 %v90
  %v618 = vunpack.c.l.b16 %v91
  %v619 = vunpack.c.h.b16 %v91
  %v620 = vunpack.c.l.b16 %v92
  %v621 = vunpack.c.l.b16 %v93
  %v622 = vunpack.c.h.b16 %v93
  %v623 = vunpack.c.l.b16 %v94
  %v624 = vunpack.c.h.b16 %v94
  %v625 = vunpack.c.l.b16 %v95
  %v626 = vunpack.c.h.b16 %v95
  %v627 = vunpack.c.l.b16 %v96
  %v628 = vunpack.c.l.b16 %v97
  %v629 = vunpack.c.h.b16 %v97
  %v630 = vunpack.c.l.b16 %v98
  %v631 = vunpack.c.h.b16 %v98
  %v632 = vunpack.c.l.b16 %v99
  %v633 = vunpack.c.h.b16 %v99
  %v634 = vunpack.c.l.b16 %v100
  %v635 = vunpack.c.l.b16 %v101
  %v636 = vunpack.c.h.b16 %v101
  %v637 = vunpack.c.l.b16 %v102
  %v638 = vunpack.c.h.b16 %v102
  %v639 = vunpack.c.l.b16 %v103
  %v640 = vunpack.c.h.b16 %v103
  %v641 = vunpack.c.l.b16 %v104
  %v642 = vunpack.c.l.b16 %v105
  %v643 = vunpack.c.h.b16 %v105
  %v644 = vunpack.c.l.b16 %v106
  %v645 = vunpack.c.h.b16 %v106
  %v646 = vunpack.c.l.b16 %v107
  %v647 = vunpack.c.h.b16 %v107
  %v648 = vunpack.c.l.b16 %v108
  %v649 = vunpack.c.l.b16 %v109
  %v650 = vunpack.c.h.b16 %v109
  %v651 = vunpack.c.l.b16 %v110
  %v652 = vunpack.c.h.b16 %v110
  %v653 = vunpack.c.l.b16 %v111
  %v654 = vunpack.c.h.b16 %v111
  %v655 = vunpack.c.l.b16 %v112
  %v656 = vunpack.c.l.b16 %v113
  %v657 = vunpack.c.h.b16 %v113
  %v658 = vunpack.c.l.b16 %v114
  %v659 = vunpack.c.h.b16 %v114
  %v660 = vunpack.c.l.b16 %v115
  %v661 = vunpack.c.h.b16 %v115
  %v662 = vunpack.c.l.b16 %v116
  %v663 = vunpack.c.l.b16 %v117
  %v664 = vunpack.c.h.b16 %v117
  %v665 = vunpack.c.l.b16 %v118
  %v666 = vunpack.c.h.b16 %v118
  %v667 = vunpack.c.l.b16 %v119
  %v668 = vunpack.c.h.b16 %v119
  %v669 = vunpack.c.l.b16 %v120
  %v670 = vunpack.c.l.b16 %v121
  %v671 = vunpack.c.h.b16 %v121
  %v672 = vunpack.c.l.b16 %v122
  %v673 = vunpack.c.h.b16 %v122
  %v674 = vunpack.c.l.b16 %v123
  %v675 = vunpack.c.h.b16 %v123
  %v676 = vunpack.c.l.b16 %v124
  %v677 = vunpack.c.l.b16 %v125
  %v678 = vunpack.c.h.b16 %v125
  %v679 = vunpack.c.l.b16 %v126
  %v680 = vunpack.c.h.b16 %v126
  %v681 = vunpack.c.l.b16 %v127
  %v682 = vunpack.c.h.b16 %v127
  %v683 = vunpack.c.l.b16 %v128
  %v684 = vunpack.c.l.b16 %v129
  %v685 = vunpack.c.h.b16 %v129
  %v686 = vunpack.c.l.b16 %v130
  %v687 = vunpack.c.h.b16 %v130
  %v688 = vunpack.c.l.b16 %v131
  %v689 = vunpack.c.h.b16 %v131
  %v690 = vunpack.c.l.b16 %v132
  %v691 = vunpack.c.l.b16 %v133
  %v692 = vunpack.c.h.b16 %v133
  %v693 = vunpack.c.l.b16 %v134
  %v694 = vunpack.c.h.b16 %v134
  %v695 = vunpack.c.l.b16 %v135
  %v696 = vunpack.c.h.b16 %v135
  %v697 = vunpack.c.l.b16 %v136
  %v698 = vunpack.c.l.b16 %v137
  %v699 = vunpack.c.h.b16 %v137
  %v700 = vunpack.c.l.b16 %v138
  %v701 = vunpack.c.h.b16 %v138
  %v702 = vunpack.c.l.b16 %v139
  %v703 = vunpack.c.h.b16 %v139
  %v704 = vunpack.c.l.b16 %v140
  %v705 = vunpack.c.l.b16 %v141
  %v706 = vunpack.c.h.b16 %v141
  %v707 = vunpack.c.l.b16 %v142
  %v708 = vunpack.c.h.b16 %v142
  %v709 = vunpack.c.l.b16 %v143
  %v710 = vunpack.c.h.b16 %v143
  %v711 = vunpack.c.l.b16 %v144
  %v712 = vunpack.c.l.b16 %v145
  %v713 = vunpack.c.h.b16 %v145
  %v714 = vunpack.c.l.b16 %v146
  %v715 = vunpack.c.h.b16 %v146
  %v716 = vunpack.c.l.b16 %v147
  %v717 = vunpack.c.h.b16 %v147
  %v718 = vunpack.c.l.b16 %v148
  %v719 = vpack.c.b16 %v502, %v495
  %v720 = vpack.c.b16 %v503, %v496
  %v721 = vpack.c.b16 %v504, %v497
  %v722 = vpack.c.b16 %v505, %v498
  %v723 = vpack.c.b16 %v506, %v499
  %v724 = vpack.c.b16 %v507, %v500
  %v725 = vpack.c.b16 %v508, %v501
  %v726 = vpack.c.b16 %v516, %v509
  %v727 = vpack.c.b16 %v517, %v510
  %v728 = vpack.c.b16 %v518, %v511
  %v729 = vpack.c.b16 %v519, %v512
  %v730 = vpack.c.b16 %v520, %v513
  %v731 = vpack.c.b16 %v521, %v514
  %v732 = vpack.c.b16 %v522, %v515
  %v733 = vpack.c.b16 %v530, %v523
  %v734 = vpack.c.b16 %v531, %v524
  %v735 = vpack.c.b16 %v532, %v525
  %v736 = vpack.c.b16 %v533, %v526
  %v737 = vpack.c.b16 %v534, %v527
  %v738 = vpack.c.b16 %v535, %v528
  %v739 = vpack.c.b16 %v536, %v529
  %v740 = vpack.c.b16 %v544, %v537
  %v741 = vpack.c.b16 %v545, %v538
  %v742 = vpack.c.b16 %v546, %v539
  %v743 = vpack.c.b16 %v547, %v540
  %v744 = vpack.c.b16 %v548, %v541
  %v745 = vpack.c.b16 %v549, %v542
  %v746 = vpack.c.b16 %v550, %v543
  %v747 = vpack.c.b16 %v558, %v551
  %v748 = vpack.c.b16 %v559, %v552
  %v749 = vpack.c.b16 %v560, %v553
  %v750 = vpack.c.b16 %v561, %v554
  %v751 = vpack.c.b16 %v562, %v555
  %v752 = vpack.c.b16 %v563, %v556
  %v753 = vpack.c.b16 %v564, %v557
  %v754 = vpack.c.b16 %v572, %v565
  %v755 = vpack.c.b16 %v573, %v566
  %v756 = vpack.c.b16 %v574, %v567
  %v757 = vpack.c.b16 %v575, %v568
  %v758 = vpack.c.b16 %v576, %v569
  %v759 = vpack.c.b16 %v577, %v570
  %v760 = vpack.c.b16 %v578, %v571
  %v761 = vpack.c.b16 %v586, %v579
  %v762 = vpack.c.b16 %v587, %v580
  %v763 = vpack.c.b16 %v588, %v581
  %v764 = vpack.c.b16 %v589, %v582
  %v765 = vpack.c.b16 %v590, %v583
  %v766 = vpack.c.b16 %v591, %v584
  %v767 = vpack.c.b16 %v592, %v585
  %v768 = vpack.c.b16 %v600, %v593
  %v769 = vpack.c.b16 %v601, %v594
  %v770 = vpack.c.b16 %v602, %v595
  %v771 = vpack.c.b16 %v603, %v596
  %v772 = vpack.c.b16 %v604, %v597
  %v773 = vpack.c.b16 %v605, %v598
  %v774 = vpack.c.b16 %v606, %v599
  %v775 = vpack.c.b16 %v614, %v607
  %v776 = vpack.c.b16 %v615, %v608
  %v777 = vpack.c.b16 %v616, %v609
  %v778 = vpack.c.b16 %v617, %v610
  %v779 = vpack.c.b16 %v618, %v611
  %v780 = vpack.c.b16 %v619, %v612
  %v781 = vpack.c.b16 %v620, %v613
  %v782 = vpack.c.b16 %v628, %v621
  %v783 = vpack.c.b16 %v629, %v622
  %v784 = vpack.c.b16 %v630, %v623
  %v785 = vpack.c.b16 %v631, %v624
  %v786 = vpack.c.b16 %v632, %v625
  %v787 = vpack.c.b16 %v633, %v626
  %v788 = vpack.c.b16 %v634, %v627
  %v789 = vpack.c.b16 %v642, %v635
  %v790 = vpack.c.b16 %v643, %v636
  %v791 = vpack.c.b16 %v644, %v637
  %v792 = vpack.c.b16 %v645, %v638
  %v793 = vpack.c.b16 %v646, %v639
  %v794 = vpack.c.b16 %v647, %v640
  %v795 = vpack.c.b16 %v648, %v641
  %v796 = vpack.c.b16 %v656, %v649
  %v797 = vpack.c.b16 %v657, %v650
  %v798 = vpack.c.b16 %v658, %v651
  %v799 = vpack.c.b16 %v659, %v652
  %v800 = vpack.c.b16 %v660, %v653
  %v801 = vpack.c.b16 %v661, %v654
  %v802 = vpack.c.b16 %v662, %v655
  %v803 = vpack.c.b16 %v670, %v663
  %v804 = vpack.c.b16 %v671, %v664
  %v805 = vpack.c.b16 %v672, %v665
  %v806 = vpack.c.b16 %v673, %v666
  %v807 = vpack.c.b16 %v674, %v667
  %v808 = vpack.c.b16 %v675, %v668
  %v809 = vpack.c.b16 %v676, %v669
  %v810 = vpack.c.b16 %v684, %v677
  %v811 = vpack.c.b16 %v685, %v678
  %v812 = vpack.c.b16 %v686, %v679
  %v813 = vpack.c.b16 %v687, %v680
  %v814 = vpack.c.b16 %v688, %v681
  %v815 = vpack.c.b16 %v689, %v682
  %v816 = vpack.c.b16 %v690, %v683
  %v817 = vpack.c.b16 %v698, %v691
  %v818 = vpack.c.b16 %v699, %v692
  %v819 = vpack.c.b16 %v700, %v693
  %v820 = vpack.c.b16 %v701, %v694
  %v821 = vpack.c.b16 %v702, %v695
  %v822 = vpack.c.b16 %v703, %v696
  %v823 = vpack.c.b16 %v704, %v697
  %v824 = vpack.c.b16 %v712, %v705
  %v825 = vpack.c.b16 %v713, %v706
  %v826 = vpack.c.b16 %v714, %v707
  %v827 = vpack.c.b16 %v715, %v708
  %v828 = vpack.c.b16 %v716, %v709
  %v829 = vpack.c.b16 %v717, %v710
  %v830 = vpack.c.b16 %v718, %v711
  %v1123 = vunpack.c.l.b16 %v149
  %v1124 = vunpack.c.h.b16 %v149
  %v1125 = vunpack.c.l.b16 %v150
  %v1126 = vunpack.c.h.b16 %v150
  %v1127 = vunpack.c.l.b16 %v151
  %v1128 = vunpack.c.h.b16 %v151
  %v1129 = vunpack.c.l.b16 %v152
  %v1130 = vunpack.c.h.b16 %v152
  %v1131 = vunpack.c.l.b16 %v153
  %v1132 = vunpack.c.h.b16 %v153
  %v1133 = vunpack.c.l.b16 %v154
  %v1134 = vunpack.c.h.b16 %v154
  %v1135 = vunpack.c.l.b16 %v155
  %v1136 = vunpack.c.h.b16 %v155
  %v1137 = vunpack.c.l.b16 %v156
  %v1138 = vunpack.c.h.b16 %v156
  %v1139 = vunpack.c.l.b16 %v157
  %v1140 = vunpack.c.h.b16 %v157
  %v1141 = vunpack.c.l.b16 %v158
  %v1142 = vunpack.c.h.b16 %v158
  %v1143 = vunpack.c.l.b16 %v159
  %v1144 = vunpack.c.h.b16 %v159
  %v1145 = vunpack.c.l.b16 %v160
  %v1146 = vunpack.c.h.b16 %v160
  %v1147 = vunpack.c.l.b16 %v161
  %v1148 = vunpack.c.h.b16 %v161
  %v1149 = vunpack.c.l.b16 %v162
  %v1150 = vunpack.c.h.b16 %v162
  %v1151 = vunpack.c.l.b16 %v163
  %v1152 = vunpack.c.h.b16 %v163
  %v1153 = vunpack.c.l.b16 %v164
  %v1154 = vunpack.c.h.b16 %v164
  %v1155 = vunpack.c.l.b16 %v165
  %v1156 = vunpack.c.h.b16 %v165
  %v1157 = vunpack.c.l.b16 %v166
  %v1158 = vunpack.c.h.b16 %v166
  %v1159 = vunpack.c.l.b16 %v167
  %v1160 = vunpack.c.h.b16 %v167
  %v1161 = vunpack.c.l.b16 %v168
  %v1162 = vunpack.c.h.b16 %v168
  %v1163 = vunpack.c.l.b16 %v169
  %v1164 = vunpack.c.h.b16 %v169
  %v1165 = vunpack.c.l.b16 %v170
  %v1166 = vunpack.c.h.b16 %v170
  %v1167 = vunpack.c.l.b16 %v171
  %v1168 = vunpack.c.h.b16 %v171
  %v1169 = vunpack.c.l.b16 %v172
  %v1170 = vunpack.c.h.b16 %v172
  %v1171 = vunpack.c.l.b16 %v173
  %v1172 = vunpack.c.h.b16 %v173
  %v1173 = vunpack.c.l.b16 %v174
  %v1174 = vunpack.c.h.b16 %v174
  %v1175 = vunpack.c.l.b16 %v175
  %v1176 = vunpack.c.h.b16 %v175
  %v1177 = vunpack.c.l.b16 %v176
  %v1178 = vunpack.c.h.b16 %v176
  %v1179 = vunpack.c.l.b16 %v177
  %v1180 = vunpack.c.h.b16 %v177
  %v1181 = vunpack.c.l.b16 %v178
  %v1182 = vunpack.c.h.b16 %v178
  %v1183 = vunpack.c.l.b16 %v179
  %v1184 = vunpack.c.h.b16 %v179
  %v1185 = vunpack.c.l.b16 %v180
  %v1186 = vunpack.c.h.b16 %v180
  %v1187 = vunpack.c.l.b16 %v181
  %v1188 = vunpack.c.h.b16 %v181
  %v1189 = vunpack.c.l.b16 %v182
  %v1190 = vunpack.c.h.b16 %v182
  %v1191 = vunpack.c.l.b16 %v183
  %v1192 = vunpack.c.h.b16 %v183
  %v1193 = vunpack.c.l.b16 %v184
  %v1194 = vunpack.c.h.b16 %v184
  %v1195 = vunpack.c.l.b16 %v185
  %v1196 = vunpack.c.h.b16 %v185
  %v1197 = vunpack.c.l.b16 %v186
  %v1198 = vunpack.c.h.b16 %v186
  %v1199 = vunpack.c.l.b16 %v187
  %v1200 = vunpack.c.h.b16 %v187
  %v1201 = vunpack.c.l.b16 %v188
  %v1202 = vunpack.c.h.b16 %v188
  %v1203 = vunpack.c.l.b16 %v189
  %v1204 = vunpack.c.h.b16 %v189
  %v1205 = vunpack.c.l.b16 %v190
  %v1206 = vunpack.c.h.b16 %v190
  %v1207 = vunpack.c.l.b16 %v191
  %v1208 = vunpack.c.h.b16 %v191
  %v1209 = vunpack.c.l.b16 %v192
  %v1210 = vunpack.c.h.b16 %v192
  %v1211 = vunpack.c.l.b16 %v193
  %v1212 = vunpack.c.h.b16 %v193
  %v1213 = vunpack.c.l.b16 %v194
  %v1214 = vunpack.c.h.b16 %v194
  %v1215 = vunpack.c.l.b16 %v195
  %v1216 = vunpack.c.h.b16 %v195
  %v1217 = vunpack.c.l.b16 %v196
  %v1218 = vunpack.c.h.b16 %v196
  %v1219 = vunpack.c.l.b16 %v197
  %v1220 = vunpack.c.h.b16 %v197
  %v1221 = vunpack.c.l.b16 %v198
  %v1222 = vunpack.c.h.b16 %v198
  %v1223 = vunpack.c.l.b16 %v199
  %v1224 = vunpack.c.h.b16 %v199
  %v1225 = vunpack.c.l.b16 %v200
  %v1226 = vunpack.c.h.b16 %v200
  %v1227 = vunpack.c.l.b16 %v201
  %v1228 = vunpack.c.h.b16 %v201
  %v1229 = vunpack.c.l.b16 %v202
  %v1230 = vunpack.c.h.b16 %v202
  %v1231 = vunpack.c.l.b16 %v203
  %v1232 = vunpack.c.h.b16 %v203
  %v1233 = vunpack.c.l.b16 %v204
  %v1234 = vunpack.c.h.b16 %v204
  %v1235 = vunpack.c.l.b16 %v205
  %v1236 = vunpack.c.h.b16 %v205
  %v1237 = vunpack.c.l.b16 %v206
  %v1238 = vunpack.c.h.b16 %v206
  %v1239 = vunpack.c.l.b16 %v207
  %v1240 = vunpack.c.h.b16 %v207
  %v1241 = vunpack.c.l.b16 %v208
  %v1242 = vunpack.c.h.b16 %v208
  %v1243 = vunpack.c.l.b16 %v209
  %v1244 = vunpack.c.h.b16 %v209
  %v1245 = vunpack.c.l.b16 %v210
  %v1246 = vunpack.c.h.b16 %v210
  %v1247 = vunpack.c.l.b16 %v211
  %v1248 = vunpack.c.h.b16 %v211
  %v1249 = vunpack.c.l.b16 %v212
  %v1250 = vunpack.c.h.b16 %v212
  %v1251 = vunpack.c.l.b16 %v213
  %v1252 = vunpack.c.h.b16 %v213
  %v1253 = vunpack.c.l.b16 %v214
  %v1254 = vunpack.c.h.b16 %v214
  %v1255 = vunpack.c.l.b16 %v215
  %v1256 = vunpack.c.h.b16 %v215
  %v1257 = vunpack.c.l.b16 %v216
  %v1258 = vunpack.c.h.b16 %v216
  %v1259 = vunpack.c.l.b16 %v217
  %v1260 = vunpack.c.h.b16 %v217
  %v1261 = vunpack.c.l.b16 %v218
  %v1262 = vunpack.c.h.b16 %v218
  %v1263 = vunpack.c.l.b16 %v219
  %v1264 = vunpack.c.h.b16 %v219
  %v1265 = vunpack.c.l.b16 %v220
  %v1266 = vunpack.c.h.b16 %v220
  %v1267 = vunpack.c.l.b16 %v221
  %v1268 = vunpack.c.h.b16 %v221
  %v1269 = vunpack.c.l.b16 %v222
  %v1270 = vunpack.c.h.b16 %v222
  %v1271 = vunpack.c.l.b16 %v223
  %v1272 = vunpack.c.h.b16 %v223
  %v1273 = vunpack.c.l.b16 %v224
  %v1274 = vunpack.c.h.b16 %v224
  %v1275 = vunpack.c.l.b16 %v225
  %v1276 = vunpack.c.h.b16 %v225
  %v1277 = vunpack.c.l.b16 %v226
  %v1278 = vunpack.c.h.b16 %v226
  %v1279 = vunpack.c.l.b16 %v227
  %v1280 = vunpack.c.h.b16 %v227
  %v1281 = vunpack.c.l.b16 %v228
  %v1282 = vunpack.c.h.b16 %v228
  %v1283 = vunpack.c.l.b16 %v229
  %v1284 = vunpack.c.h.b16 %v229
  %v1285 = vunpack.c.l.b16 %v230
  %v1286 = vunpack.c.h.b16 %v230
  %v1287 = vunpack.c.l.b16 %v231
  %v1288 = vunpack.c.h.b16 %v231
  %v1289 = vunpack.c.l.b16 %v232
  %v1290 = vunpack.c.h.b16 %v232
  %v1291 = vunpack.c.l.b16 %v233
  %v1292 = vunpack.c.h.b16 %v233
  %v1293 = vunpack.c.l.b16 %v234
  %v1294 = vunpack.c.h.b16 %v234
  %v1295 = vunpack.c.l.b16 %v235
  %v1296 = vunpack.c.h.b16 %v235
  %v1297 = vunpack.c.l.b16 %v236
  %v1298 = vunpack.c.h.b16 %v236
  %v1299 = vunpack.c.l.b16 %v237
  %v1300 = vunpack.c.h.b16 %v237
  %v1301 = vunpack.c.l.b16 %v238
  %v1302 = vunpack.c.h.b16 %v238
  %v1303 = vunpack.c.l.b16 %v239
  %v1304 = vunpack.c.h.b16 %v239
  %v1305 = vunpack.c.l.b16 %v240
  %v1306 = vunpack.c.h.b16 %v240
  %v1307 = vunpack.c.l.b16 %v241
  %v1308 = vunpack.c.h.b16 %v241
  %v1309 = vunpack.c.l.b16 %v242
  %v1310 = vunpack.c.h.b16 %v242
  %v1311 = vunpack.c.l.b16 %v243
  %v1312 = vunpack.c.h.b16 %v243
  %v1313 = vunpack.c.l.b16 %v244
  %v1314 = vunpack.c.h.b16 %v244
  %v1315 = vunpack.c.l.b16 %v245
  %v1316 = vunpack.c.h.b16 %v245
  %v1317 = vunpack.c.l.b16 %v246
  %v1318 = vunpack.c.h.b16 %v246
  %v1319 = vunpack.c.l.b16 %v247
  %v1320 = vunpack.c.h.b16 %v247
  %v1321 = vunpack.c.l.b16 %v248
  %v1322 = vunpack.c.h.b16 %v248
  %v1323 = vunpack.c.l.b16 %v249
  %v1324 = vunpack.c.h.b16 %v249
  %v1325 = vunpack.c.l.b16 %v250
  %v1326 = vunpack.c.h.b16 %v250
  %v1327 = vunpack.c.l.b16 %v251
  %v1328 = vunpack.c.h.b16 %v251
  %v1329 = vunpack.c.l.b16 %v252
  %v1330 = vunpack.c.h.b16 %v252
  %v1331 = vunpack.c.l.b16 %v253
  %v1332 = vunpack.c.h.b16 %v253
  %v1333 = vunpack.c.l.b16 %v254
  %v1334 = vunpack.c.h.b16 %v254
  %v1335 = vunpack.c.l.b16 %v255
  %v1336 = vunpack.c.h.b16 %v255
  %v1337 = vunpack.c.l.b16 %v256
  %v1338 = vunpack.c.h.b16 %v256
  %v1339 = vunpack.c.l.b16 %v257
  %v1340 = vunpack.c.h.b16 %v257
  %v1341 = vunpack.c.l.b16 %v258
  %v1342 = vunpack.c.h.b16 %v258
  %v1343 = vunpack.c.l.b16 %v259
  %v1344 = vunpack.c.h.b16 %v259
  %v1345 = vunpack.c.l.b16 %v260
  %v1346 = vunpack.c.h.b16 %v260
  %v1347 = vunpack.c.l.b16 %v261
  %v1348 = vunpack.c.h.b16 %v261
  %v1349 = vunpack.c.l.b16 %v262
  %v1350 = vunpack.c.h.b16 %v262
  %v1351 = vunpack.c.l.b16 %v263
  %v1352 = vunpack.c.h.b16 %v263
  %v1353 = vunpack.c.l.b16 %v264
  %v1354 = vunpack.c.h.b16 %v264
  %v1355 = vunpack.c.l.b16 %v265
  %v1356 = vunpack.c.h.b16 %v265
  %v1357 = vunpack.c.l.b16 %v266
  %v1358 = vunpack.c.h.b16 %v266
  %v1359 = vunpack.c.l.b16 %v267
  %v1360 = vunpack.c.h.b16 %v267
  %v1361 = vunpack.c.l.b16 %v268
  %v1362 = vunpack.c.h.b16 %v268
  %v1363 = vunpack.c.l.b16 %v269
  %v1364 = vunpack.c.h.b16 %v269
  %v1365 = vunpack.c.l.b16 %v270
  %v1366 = vunpack.c.h.b16 %v270
  %v1367 = vunpack.c.l.b16 %v271
  %v1368 = vunpack.c.h.b16 %v271
  %v1369 = vunpack.c.l.b16 %v272
  %v1370 = vunpack.c.h.b16 %v272
  %v1371 = vunpack.c.l.b16 %v273
  %v1372 = vunpack.c.h.b16 %v273
  %v1373 = vunpack.c.l.b16 %v274
  %v1374 = vunpack.c.h.b16 %v274
  %v1375 = vunpack.c.l.b16 %v275
  %v1376 = vunpack.c.h.b16 %v275
  %v1377 = vunpack.c.l.b16 %v276
  %v1378 = vunpack.c.h.b16 %v276
  %v1379 = vunpack.c.l.b16 %v277
  %v1380 = vunpack.c.h.b16 %v277
  %v1381 = vunpack.c.l.b16 %v278
  %v1382 = vunpack.c.h.b16 %v278
  %v1383 = vunpack.c.l.b16 %v279
  %v1384 = vunpack.c.h.b16 %v279
  %v1385 = vunpack.c.l.b16 %v280
  %v1386 = vunpack.c.h.b16 %v280
  %v1387 = vunpack.c.l.b16 %v281
  %v1388 = vunpack.c.h.b16 %v281
  %v1389 = vunpack.c.l.b16 %v282
  %v1390 = vunpack.c.h.b16 %v282
  %v1391 = vunpack.c.l.b16 %v283
  %v1392 = vunpack.c.h.b16 %v283
  %v1393 = vunpack.c.l.b16 %v284
  %v1394 = vunpack.c.h.b16 %v284
  %v1395 = vunpack.c.l.b16 %v285
  %v1396 = vunpack.c.h.b16 %v285
  %v1397 = vunpack.c.l.b16 %v286
  %v1398 = vunpack.c.h.b16 %v286
  %v1399 = vunpack.c.l.b16 %v287
  %v1400 = vunpack.c.h.b16 %v287
  %v1401 = vunpack.c.l.b16 %v288
  %v1402 = vunpack.c.h.b16 %v288
  %v1403 = vunpack.c.l.b16 %v289
  %v1404 = vunpack.c.h.b16 %v289
  %v1405 = vunpack.c.l.b16 %v290
  %v1406 = vunpack.c.h.b16 %v290
  %v1407 = vunpack.c.l.b16 %v291
  %v1408 = vunpack.c.h.b16 %v291
  %v1409 = vunpack.c.l.b16 %v292
  %v1410 = vunpack.c.h.b16 %v292
  %v1411 = vunpack.c.l.b16 %v293
  %v1412 = vunpack.c.h.b16 %v293
  %v1413 = vunpack.c.l.b16 %v294
  %v1414 = vunpack.c.h.b16 %v294
  %v1415 = vunpack.c.l.b16 %v295
  %v1416 = vunpack.c.h.b16 %v295
  %v1417 = vunpack.c.l.b16 %v296
  %v1418 = vunpack.c.h.b16 %v296
  %v1419 = vunpack.c.l.b16 %v297
  %v1420 = vunpack.c.h.b16 %v297
  %v1421 = vunpack.c.l.b16 %v298
  %v1422 = vunpack.c.h.b16 %v298
  %v1423 = vunpack.c.l.b16 %v299
  %v1424 = vunpack.c.h.b16 %v299
  %v1425 = vunpack.c.l.b16 %v300
  %v1426 = vunpack.c.h.b16 %v300
  %v1427 = vunpack.c.l.b16 %v301
  %v1428 = vunpack.c.h.b16 %v301
  %v1429 = vunpack.c.l.b16 %v302
  %v1430 = vunpack.c.h.b16 %v302
  %v1431 = vunpack.c.l.b16 %v303
  %v1432 = vunpack.c.h.b16 %v303
  %v1433 = vunpack.c.l.b16 %v304
  %v1434 = vunpack.c.h.b16 %v304
  %v1435 = vunpack.c.l.b16 %v305
  %v1436 = vunpack.c.h.b16 %v305
  %v1437 = vunpack.c.l.b16 %v306
  %v1438 = vunpack.c.h.b16 %v306
  %v1439 = vunpack.c.l.b16 %v307
  %v1440 = vunpack.c.h.b16 %v307
  %v1441 = vunpack.c.l.b16 %v308
  %v1442 = vunpack.c.h.b16 %v308
  %v1443 = vunpack.c.l.b16 %v309
  %v1444 = vunpack.c.h.b16 %v309
  %v1445 = vunpack.c.l.b16 %v310
  %v1446 = vunpack.c.h.b16 %v310
  %v1447 = vunpack.c.l.b16 %v311
  %v1448 = vunpack.c.h.b16 %v311
  %v1449 = vunpack.c.l.b16 %v312
  %v1450 = vunpack.c.h.b16 %v312
  %v1451 = vunpack.c.l.b16 %v313
  %v1452 = vunpack.c.h.b16 %v313
  %v1453 = vunpack.c.l.b16 %v314
  %v1454 = vunpack.c.h.b16 %v314
  %v1455 = vunpack.c.l.b16 %v315
  %v1456 = vunpack.c.h.b16 %v315
  %v1457 = vunpack.c.l.b16 %v316
  %v1458 = vunpack.c.h.b16 %v316
  %v1459 = vunpack.c.l.b16 %v317
  %v1460 = vunpack.c.h.b16 %v317
  %v1461 = vunpack.c.l.b16 %v318
  %v1462 = vunpack.c.h.b16 %v318
  %v1463 = vunpack.c.l.b16 %v319
  %v1464 = vunpack.c.h.b16 %v319
  %v1465 = vunpack.c.l.b16 %v320
  %v1466 = vunpack.c.h.b16 %v320
  %v1467 = vunpack.c.l.b16 %v321
  %v1468 = vunpack.c.h.b16 %v321
  %v1469 = vunpack.c.l.b16 %v322
  %v1470 = vunpack.c.h.b16 %v322
  %v1471 = vunpack.c.l.b16 %v323
  %v1472 = vunpack.c.h.b16 %v323
  %v1473 = vunpack.c.l.b16 %v324
  %v1474 = vunpack.c.h.b16 %v324
  %v1475 = vunpack.c.l.b16 %v325
  %v1476 = vunpack.c.h.b16 %v325
  %v1477 = vunpack.c.l.b16 %v326
  %v1478 = vunpack.c.h.b16 %v326
  %v1479 = vunpack.c.l.b16 %v327
  %v1480 = vunpack.c.h.b16 %v327
  %v1481 = vunpack.c.l.b16 %v328
  %v1482 = vunpack.c.h.b16 %v328
  %v1483 = vunpack.c.l.b16 %v329
  %v1484 = vunpack.c.h.b16 %v329
  %v1485 = vunpack.c.l.b16 %v330
  %v1486 = vunpack.c.h.b16 %v330
  %v1487 = vunpack.c.l.b16 %v331
  %v1488 = vunpack.c.h.b16 %v331
  %v1489 = vunpack.c.l.b16 %v332
  %v1490 = vunpack.c.h.b16 %v332
  %v1491 = vunpack.c.l.b16 %v333
  %v1492 = vunpack.c.h.b16 %v333
  %v1493 = vunpack.c.l.b16 %v334
  %v1494 = vunpack.c.h.b16 %v334
  %v1495 = vunpack.c.l.b16 %v335
  %v1496 = vunpack.c.h.b16 %v335
  %v1497 = vunpack.c.l.b16 %v336
  %v1498 = vunpack.c.h.b16 %v336
  %v1499 = vunpack.c.l.b16 %v337
  %v1500 = vunpack.c.h.b16 %v337
  %v1501 = vunpack.c.l.b16 %v338
  %v1502 = vunpack.c.h.b16 %v338
  %v1503 = vunpack.c.l.b16 %v339
  %v1504 = vunpack.c.h.b16 %v339
  %v1505 = vunpack.c.l.b16 %v340
  %v1506 = vunpack.c.h.b16 %v340
  %v1507 = vunpack.c.l.b16 %v341
  %v1508 = vunpack.c.h.b16 %v341
  %v1509 = vunpack.c.l.b16 %v342
  %v1510 = vunpack.c.h.b16 %v342
  %v1511 = vunpack.c.l.b16 %v343
  %v1512 = vunpack.c.h.b16 %v343
  %v1513 = vunpack.c.l.b16 %v344
  %v1514 = vunpack.c.h.b16 %v344
  %v1515 = vpack.c.b16 %v1127, %v1123
  %v1516 = vpack.c.b16 %v1128, %v1124
  %v1517 = vpack.c.b16 %v1129, %v1125
  %v1518 = vpack.c.b16 %v1130, %v1126
  %v1519 = vpack.c.b16 %v1135, %v1131
  %v1520 = vpack.c.b16 %v1136, %v1132
  %v1521 = vpack.c.b16 %v1137, %v1133
  %v1522 = vpack.c.b16 %v1138, %v1134
  %v1523 = vpack.c.b16 %v1143, %v1139
  %v1524 = vpack.c.b16 %v1144, %v1140
  %v1525 = vpack.c.b16 %v1145, %v1141
  %v1526 = vpack.c.b16 %v1146, %v1142
  %v1527 = vpack.c.b16 %v1151, %v1147
  %v1528 = vpack.c.b16 %v1152, %v1148
  %v1529 = vpack.c.b16 %v1153, %v1149
  %v1530 = vpack.c.b16 %v1154, %v1150
  %v1531 = vpack.c.b16 %v1159, %v1155
  %v1532 = vpack.c.b16 %v1160, %v1156
  %v1533 = vpack.c.b16 %v1161, %v1157
  %v1534 = vpack.c.b16 %v1162, %v1158
  %v1535 = vpack.c.b16 %v1167, %v1163
  %v1536 = vpack.c.b16 %v1168, %v1164
  %v1537 = vpack.c.b16 %v1169, %v1165
  %v1538 = vpack.c.b16 %v1170, %v1166
  %v1539 = vpack.c.b16 %v1175, %v1171
  %v1540 = vpack.c.b16 %v1176, %v1172
  %v1541 = vpack.c.b16 %v1177, %v1173
  %v1542 = vpack.c.b16 %v1178, %v1174
  %v1543 = vpack.c.b16 %v1183, %v1179
  %v1544 = vpack.c.b16 %v1184, %v1180
  %v1545 = vpack.c.b16 %v1185, %v1181
  %v1546 = vpack.c.b16 %v1186, %v1182
  %v1547 = vpack.c.b16 %v1191, %v1187
  %v1548 = vpack.c.b16 %v1192, %v1188
  %v1549 = vpack.c.b16 %v1193, %v1189
  %v1550 = vpack.c.b16 %v1194, %v1190
  %v1551 = vpack.c.b16 %v1199, %v1195
  %v1552 = vpack.c.b16 %v1200, %v1196
  %v1553 = vpack.c.b16 %v1201, %v1197
  %v1554 = vpack.c.b16 %v1202, %v1198
  %v1555 = vpack.c.b16 %v1207, %v1203
  %v1556 = vpack.c.b16 %v1208, %v1204
  %v1557 = vpack.c.b16 %v1209, %v1205
  %v1558 = vpack.c.b16 %v1210, %v1206
  %v1559 = vpack.c.b16 %v1215, %v1211
  %v1560 = vpack.c.b16 %v1216, %v1212
  %v1561 = vpack.c.b16 %v1217, %v1213
  %v1562 = vpack.c.b16 %v1218, %v1214
  %v1563 = vpack.c.b16 %v1223, %v1219
  %v1564 = vpack.c.b16 %v1224, %v1220
  %v1565 = vpack.c.b16 %v1225, %v1221
  %v1566 = vpack.c.b16 %v1226, %v1222
  %v1567 = vpack.c.b16 %v1231, %v1227
  %v1568 = vpack.c.b16 %v1232, %v1228
  %v1569 = vpack.c.b16 %v1233, %v1229
  %v1570 = vpack.c.b16 %v1234, %v1230
  %v1571 = vpack.c.b16 %v1239, %v1235
  %v1572 = vpack.c.b16 %v1240, %v1236
  %v1573 = vpack.c.b16 %v1241, %v1237
  %v1574 = vpack.c.b16 %v1242, %v1238
  %v1575 = vpack.c.b16 %v1247, %v1243
  %v1576 = vpack.c.b16 %v1248, %v1244
  %v1577 = vpack.c.b16 %v1249, %v1245
  %v1578 = vpack.c.b16 %v1250, %v1246
  %v1579 = vpack.c.b16 %v1255, %v1251
  %v1580 = vpack.c.b16 %v1256, %v1252
  %v1581 = vpack.c.b16 %v1257, %v1253
  %v1582 = vpack.c.b16 %v1258, %v1254
  %v1583 = vpack.c.b16 %v1263, %v1259
  %v1584 = vpack.c.b16 %v1264, %v1260
  %v1585 = vpack.c.b16 %v1265, %v1261
  %v1586 = vpack.c.b16 %v1266, %v1262
  %v1587 = vpack.c.b16 %v1271, %v1267
  %v1588 = vpack.c.b16 %v1272, %v1268
  %v1589 = vpack.c.b16 %v1273, %v1269
  %v1590 = vpack.c.b16 %v1274, %v1270
  %v1591 = vpack.c.b16 %v1279, %v1275
  %v1592 = vpack.c.b16 %v1280, %v1276
  %v1593 = vpack.c.b16 %v1281, %v1277
  %v1594 = vpack.c.b16 %v1282, %v1278
  %v1595 = vpack.c.b16 %v1287, %v1283
  %v1596 = vpack.c.b16 %v1288, %v1284
  %v1597 = vpack.c.b16 %v1289, %v1285
  %v1598 = vpack.c.b16 %v1290, %v1286
  %v1599 = vpack.c.b16 %v1295, %v1291
  %v1600 = vpack.c.b16 %v1296, %v1292
  %v1601 = vpack.c.b16 %v1297, %v1293
  %v1602 = vpack.c.b16 %v1298, %v1294
  %v1603 = vpack.c.b16 %v1303, %v1299
  %v1604 = vpack.c.b16 %v1304, %v1300
  %v1605 = vpack.c.b16 %v1305, %v1301
  %v1606 = vpack.c.b16 %v1306, %v1302
  %v1607 = vpack.c.b16 %v1311, %v1307
  %v1608 = vpack.c.b16 %v1312, %v1308
  %v1609 = vpack.c.b16 %v1313, %v1309
  %v1610 = vpack.c.b16 %v1314, %v1310
  %v1611 = vpack.c.b16 %v1319, %v1315
  %v1612 = vpack.c.b16 %v1320, %v1316
  %v1613 = vpack.c.b16 %v1321, %v1317
  %v1614 = vpack.c.b16 %v1322, %v1318
  %v1615 = vpack.c.b16 %v1327, %v1323
  %v1616 = vpack.c.b16 %v1328, %v1324
  %v1617 = vpack.c.b16 %v1329, %v1325
  %v1618 = vpack.c.b16 %v1330, %v1326
  %v1619 = vpack.c.b16 %v1335, %v1331
  %v1620 = vpack.c.b16 %v1336, %v1332
  %v1621 = vpack.c.b16 %v1337, %v1333
  %v1622 = vpack.c.b16 %v1338, %v1334
  %v1623 = vpack.c.b16 %v1343, %v1339
  %v1624 = vpack.c.b16 %v1344, %v1340
  %v1625 = vpack.c.b16 %v1345, %v1341
  %v1626 = vpack.c.b16 %v1346, %v1342
  %v1627 = vpack.c.b16 %v1351, %v1347
  %v1628 = vpack.c.b16 %v1352, %v1348
  %v1629 = vpack.c.b16 %v1353, %v1349
  %v1630 = vpack.c.b16 %v1354, %v1350
  %v1631 = vpack.c.b16 %v1359, %v1355
  %v1632 = vpack.c.b16 %v1360, %v1356
  %v1633 = vpack.c.b16 %v1361, %v1357
  %v1634 = vpack.c.b16 %v1362, %v1358
  %v1635 = vpack.c.b16 %v1367, %v1363
  %v1636 = vpack.c.b16 %v1368, %v1364
  %v1637 = vpack.c.b16 %v1369, %v1365
  %v1638 = vpack.c.b16 %v1370, %v1366
  %v1639 = vpack.c.b16 %v1375, %v1371
  %v1640 = vpack.c.b16 %v1376, %v1372
  %v1641 = vpack.c.b16 %v1377, %v1373
  %v1642 = vpack.c.b16 %v1378, %v1374
  %v1643 = vpack.c.b16 %v1383, %v1379
  %v1644 = vpack.c.b16 %v1384, %v1380
  %v1645 = vpack.c.b16 %v1385, %v1381
  %v1646 = vpack.c.b16 %v1386, %v1382
  %v1647 = vpack.c.b16 %v1391, %v1387
  %v1648 = vpack.c.b16 %v1392, %v1388
  %v1649 = vpack.c.b16 %v1393, %v1389
  %v1650 = vpack.c.b16 %v1394, %v1390
  %v1651 = vpack.c.b16 %v1399, %v1395
  %v1652 = vpack.c.b16 %v1400, %v1396
  %v1653 = vpack.c.b16 %v1401, %v1397
  %v1654 = vpack.c.b16 %v1402, %v1398
  %v1655 = vpack.c.b16 %v1407, %v1403
  %v1656 = vpack.c.b16 %v1408, %v1404
  %v1657 = vpack.c.b16 %v1409, %v1405
  %v1658 = vpack.c.b16 %v1410, %v1406
  %v1659 = vpack.c.b16 %v1415, %v1411
  %v1660 = vpack.c.b16 %v1416, %v1412
  %v1661 = vpack.c.b16 %v1417, %v1413
  %v1662 = vpack.c.b16 %v1418, %v1414
  %v1663 = vpack.c.b16 %v1423, %v1419
  %v1664 = vpack.c.b16 %v1424, %v1420
  %v1665 = vpack.c.b16 %v1425, %v1421
  %v1666 = vpack.c.b16 %v1426, %v1422
  %v1667 = vpack.c.b16 %v1431, %v1427
  %v1668 = vpack.c.b16 %v1432, %v1428
  %v1669 = vpack.c.b16 %v1433, %v1429
  %v1670 = vpack.c.b16 %v1434, %v1430
  %v1671 = vpack.c.b16 %v1439, %v1435
  %v1672 = vpack.c.b16 %v1440, %v1436
  %v1673 = vpack.c.b16 %v1441, %v1437
  %v1674 = vpack.c.b16 %v1442, %v1438
  %v1675 = vpack.c.b16 %v1447, %v1443
  %v1676 = vpack.c.b16 %v1448, %v1444
  %v1677 = vpack.c.b16 %v1449, %v1445
  %v1678 = vpack.c.b16 %v1450, %v1446
  %v1679 = vpack.c.b16 %v1455, %v1451
  %v1680 = vpack.c.b16 %v1456, %v1452
  %v1681 = vpack.c.b16 %v1457, %v1453
  %v1682 = vpack.c.b16 %v1458, %v1454
  %v1683 = vpack.c.b16 %v1463, %v1459
  %v1684 = vpack.c.b16 %v1464, %v1460
  %v1685 = vpack.c.b16 %v1465, %v1461
  %v1686 = vpack.c.b16 %v1466, %v1462
  %v1687 = vpack.c.b16 %v1471, %v1467
  %v1688 = vpack.c.b16 %v1472, %v1468
  %v1689 = vpack.c.b16 %v1473, %v1469
  %v1690 = vpack.c.b16 %v1474, %v1470
  %v1691 = vpack.c.b16 %v1479, %v1475
  %v1692 = vpack.c.b16 %v1480, %v1476
  %v1693 = vpack.c.b16 %v1481, %v1477
  %v1694 = vpack.c.b16 %v1482, %v1478
  %v1695 = vpack.c.b16 %v1487, %v1483
  %v1696 = vpack.c.b16 %v1488, %v1484
  %v1697 = vpack.c.b16 %v1489, %v1485
  %v1698 = vpack.c.b16 %v1490, %v1486
  %v1699 = vpack.c.b16 %v1495, %v1491
  %v1700 = vpack.c.b16 %v1496, %v1492
  %v1701 = vpack.c.b16 %v1497, %v1493
  %v1702 = vpack.c.b16 %v1498, %v1494
  %v1703 = vpack.c.b16 %v1503, %v1499
  %v1704 = vpack.c.b16 %v1504, %v1500
  %v1705 = vpack.c.b16 %v1505, %v1501
  %v1706 = vpack.c.b16 %v1506, %v1502
  %v1707 = vpack.c.b16 %v1511, %v1507
  %v1708 = vpack.c.b16 %v1512, %v1508
  %v1709 = vpack.c.b16 %v1513, %v1509
  %v1710 = vpack.c.b16 %v1514, %v1510
  %vm1907 = vcmask 130048
  %v1909 = vsel %vm1907, %v725, 0
  %v1912 = vsel %vm1907, %v732, 0
  %v1915 = vsel %vm1907, %v739, 0
  %v1918 = vsel %vm1907, %v746, 0
  %v1921 = vsel %vm1907, %v753, 0
  %v1924 = vsel %vm1907, %v760, 0
  %v1927 = vsel %vm1907, %v767, 0
  %v1930 = vsel %vm1907, %v774, 0
  %v1933 = vsel %vm1907, %v781, 0
  %v1936 = vsel %vm1907, %v788, 0
  %v1939 = vsel %vm1907, %v795, 0
  %v1942 = vsel %vm1907, %v802, 0
  %v1945 = vsel %vm1907, %v809, 0
  %v1948 = vsel %vm1907, %v816, 0
  %v1951 = vsel %vm1907, %v823, 0
  %v1954 = vsel %vm1907, %v830, 0
  %1956 = vmatprep.subr.bf16.mxu0 %v1544
  %1957 = vmatpush1.bf16.msra.mxu0 %v1543
  %1958 = vmatprep.subr.bf16.mxu0 %v1540
  %1959 = vmatpush1.bf16.msra.mxu0 %v1539
  %1960 = vmatprep.subr.bf16.mxu0 %v1536
  %1961 = vmatpush1.bf16.msra.mxu0 %v1535
  %1962 = vmatprep.subr.bf16.mxu0 %v1532
  %1963 = vmatpush1.bf16.msra.mxu0 %v1531
  %1964 = vmatprep.subr.bf16.mxu0 %v1528
  %1965 = vmatpush1.bf16.msra.mxu0 %v1527
  %1966 = vmatprep.subr.bf16.mxu0 %v1524
  %1967 = vmatpush1.bf16.msra.mxu0 %v1523
  %1968 = vmatprep.subr.bf16.mxu0 %v1520
  %1969 = vmatpush1.bf16.msra.mxu0 %v1519
  %1970 = vmatprep.subr.bf16.mxu0 %v1516
  %1971 = vmatpush1.bf16.msra.mxu0 %v1515
  %1972 = vmatprep.subr.bf16.mxu0 %v1576
  %1973 = vmatpush2.bf16.msra.mxu0 %v1575
  %1974 = vmatprep.subr.bf16.mxu0 %v1572
  %1975 = vmatpush2.bf16.msra.mxu0 %v1571
  %1976 = vmatprep.subr.bf16.mxu0 %v1568
  %1977 = vmatpush2.bf16.msra.mxu0 %v1567
  %1978 = vmatprep.subr.bf16.mxu0 %v1564
  %1979 = vmatpush2.bf16.msra.mxu0 %v1563
  %1980 = vmatprep.subr.bf16.mxu0 %v1560
  %1981 = vmatpush2.bf16.msra.mxu0 %v1559
  %1982 = vmatprep.subr.bf16.mxu0 %v1556
  %1983 = vmatpush2.bf16.msra.mxu0 %v1555
  %1984 = vmatprep.subr.bf16.mxu0 %v1552
  %1985 = vmatpush2.bf16.msra.mxu0 %v1551
  %1986 = vmatprep.subr.bf16.mxu0 %v1548
  %1987 = vmatpush2.bf16.msra.mxu0 %v1547
  %1988 = vmatprep.mubr.bf16.mxu0 %v720
  %1989 = vmatmul.mubr.bf16.gmra.mxu0 %v719
  %v1990 = vpop.f32.mrf.mxu0
  %v1991 = vadd.f32 %v350, %v1990
  %v1992 = vpop.f32.mrf.mxu0
  %v1993 = vadd.f32 %v354, %v1992
  %v1994 = vpop.f32.mrf.mxu0
  %v1995 = vadd.f32 %v350, %v1994
  %v1996 = vpop.f32.mrf.mxu0
  %v1997 = vadd.f32 %v354, %v1996
  %1998 = vmatprep.mubr.bf16.mxu0 %v727
  %1999 = vmatmul.mubr.bf16.gmra.mxu0 %v726
  %v2000 = vpop.f32.mrf.mxu0
  %v2001 = vadd.f32 %v350, %v2000
  %v2002 = vpop.f32.mrf.mxu0
  %v2003 = vadd.f32 %v354, %v2002
  %v2004 = vpop.f32.mrf.mxu0
  %v2005 = vadd.f32 %v350, %v2004
  %v2006 = vpop.f32.mrf.mxu0
  %v2007 = vadd.f32 %v354, %v2006
  %2008 = vmatprep.mubr.bf16.mxu0 %v734
  %2009 = vmatmul.mubr.bf16.gmra.mxu0 %v733
  %v2010 = vpop.f32.mrf.mxu0
  %v2011 = vadd.f32 %v350, %v2010
  %v2012 = vpop.f32.mrf.mxu0
  %v2013 = vadd.f32 %v354, %v2012
  %v2014 = vpop.f32.mrf.mxu0
  %v2015 = vadd.f32 %v350, %v2014
  %v2016 = vpop.f32.mrf.mxu0
  %v2017 = vadd.f32 %v354, %v2016
  %2018 = vmatprep.mubr.bf16.mxu0 %v741
  %2019 = vmatmul.mubr.bf16.gmra.mxu0 %v740
  %v2020 = vpop.f32.mrf.mxu0
  %v2021 = vadd.f32 %v350, %v2020
  %v2022 = vpop.f32.mrf.mxu0
  %v2023 = vadd.f32 %v354, %v2022
  %v2024 = vpop.f32.mrf.mxu0
  %v2025 = vadd.f32 %v350, %v2024
  %v2026 = vpop.f32.mrf.mxu0
  %v2027 = vadd.f32 %v354, %v2026
  %2028 = vmatprep.mubr.bf16.mxu0 %v748
  %2029 = vmatmul.mubr.bf16.gmra.mxu0 %v747
  %v2030 = vpop.f32.mrf.mxu0
  %v2031 = vadd.f32 %v350, %v2030
  %v2032 = vpop.f32.mrf.mxu0
  %v2033 = vadd.f32 %v354, %v2032
  %v2034 = vpop.f32.mrf.mxu0
  %v2035 = vadd.f32 %v350, %v2034
  %v2036 = vpop.f32.mrf.mxu0
  %v2037 = vadd.f32 %v354, %v2036
  %2038 = vmatprep.mubr.bf16.mxu0 %v755
  %2039 = vmatmul.mubr.bf16.gmra.mxu0 %v754
  %v2040 = vpop.f32.mrf.mxu0
  %v2041 = vadd.f32 %v350, %v2040
  %v2042 = vpop.f32.mrf.mxu0
  %v2043 = vadd.f32 %v354, %v2042
  %v2044 = vpop.f32.mrf.mxu0
  %v2045 = vadd.f32 %v350, %v2044
  %v2046 = vpop.f32.mrf.mxu0
  %v2047 = vadd.f32 %v354, %v2046
  %2048 = vmatprep.mubr.bf16.mxu0 %v762
  %2049 = vmatmul.mubr.bf16.gmra.mxu0 %v761
  %v2050 = vpop.f32.mrf.mxu0
  %v2051 = vadd.f32 %v350, %v2050
  %v2052 = vpop.f32.mrf.mxu0
  %v2053 = vadd.f32 %v354, %v2052
  %v2054 = vpop.f32.mrf.mxu0
  %v2055 = vadd.f32 %v350, %v2054
  %v2056 = vpop.f32.mrf.mxu0
  %v2057 = vadd.f32 %v354, %v2056
  %2058 = vmatprep.mubr.bf16.mxu0 %v769
  %2059 = vmatmul.mubr.bf16.gmra.mxu0 %v768
  %v2060 = vpop.f32.mrf.mxu0
  %v2061 = vadd.f32 %v350, %v2060
  %v2062 = vpop.f32.mrf.mxu0
  %v2063 = vadd.f32 %v354, %v2062
  %v2064 = vpop.f32.mrf.mxu0
  %v2065 = vadd.f32 %v350, %v2064
  %v2066 = vpop.f32.mrf.mxu0
  %v2067 = vadd.f32 %v354, %v2066
  %2068 = vmatprep.mubr.bf16.mxu0 %v776
  %2069 = vmatmul.mubr.bf16.gmra.mxu0 %v775
  %v2070 = vpop.f32.mrf.mxu0
  %v2071 = vadd.f32 %v350, %v2070
  %v2072 = vpop.f32.mrf.mxu0
  %v2073 = vadd.f32 %v354, %v2072
  %v2074 = vpop.f32.mrf.mxu0
  %v2075 = vadd.f32 %v350, %v2074
  %v2076 = vpop.f32.mrf.mxu0
  %v2077 = vadd.f32 %v354, %v2076
  %2078 = vmatprep.mubr.bf16.mxu0 %v783
  %2079 = vmatmul.mubr.bf16.gmra.mxu0 %v782
  %v2080 = vpop.f32.mrf.mxu0
  %v2081 = vadd.f32 %v350, %v2080
  %v2082 = vpop.f32.mrf.mxu0
  %v2083 = vadd.f32 %v354, %v2082
  %v2084 = vpop.f32.mrf.mxu0
  %v2085 = vadd.f32 %v350, %v2084
  %v2086 = vpop.f32.mrf.mxu0
  %v2087 = vadd.f32 %v354, %v2086
  %2088 = vmatprep.mubr.bf16.mxu0 %v790
  %2089 = vmatmul.mubr.bf16.gmra.mxu0 %v789
  %v2090 = vpop.f32.mrf.mxu0
  %v2091 = vadd.f32 %v350, %v2090
  %v2092 = vpop.f32.mrf.mxu0
  %v2093 = vadd.f32 %v354, %v2092
  %v2094 = vpop.f32.mrf.mxu0
  %v2095 = vadd.f32 %v350, %v2094
  %v2096 = vpop.f32.mrf.mxu0
  %v2097 = vadd.f32 %v354, %v2096
  %2098 = vmatprep.mubr.bf16.mxu0 %v797
  %2099 = vmatmul.mubr.bf16.gmra.mxu0 %v796
  %v2100 = vpop.f32.mrf.mxu0
  %v2101 = vadd.f32 %v350, %v2100
  %v2102 = vpop.f32.mrf.mxu0
  %v2103 = vadd.f32 %v354, %v2102
  %v2104 = vpop.f32.mrf.mxu0
  %v2105 = vadd.f32 %v350, %v2104
  %v2106 = vpop.f32.mrf.mxu0
  %v2107 = vadd.f32 %v354, %v2106
  %2108 = vmatprep.mubr.bf16.mxu0 %v804
  %2109 = vmatmul.mubr.bf16.gmra.mxu0 %v803
  %v2110 = vpop.f32.mrf.mxu0
  %v2111 = vadd.f32 %v350, %v2110
  %v2112 = vpop.f32.mrf.mxu0
  %v2113 = vadd.f32 %v354, %v2112
  %v2114 = vpop.f32.mrf.mxu0
  %v2115 = vadd.f32 %v350, %v2114
  %v2116 = vpop.f32.mrf.mxu0
  %v2117 = vadd.f32 %v354, %v2116
  %2118 = vmatprep.mubr.bf16.mxu0 %v811
  %2119 = vmatmul.mubr.bf16.gmra.mxu0 %v810
  %v2120 = vpop.f32.mrf.mxu0
  %v2121 = vadd.f32 %v350, %v2120
  %v2122 = vpop.f32.mrf.mxu0
  %v2123 = vadd.f32 %v354, %v2122
  %v2124 = vpop.f32.mrf.mxu0
  %v2125 = vadd.f32 %v350, %v2124
  %v2126 = vpop.f32.mrf.mxu0
  %v2127 = vadd.f32 %v354, %v2126
  %2128 = vmatprep.mubr.bf16.mxu0 %v818
  %2129 = vmatmul.mubr.bf16.gmra.mxu0 %v817
  %v2130 = vpop.f32.mrf.mxu0
  %v2131 = vadd.f32 %v350, %v2130
  %v2132 = vpop.f32.mrf.mxu0
  %v2133 = vadd.f32 %v354, %v2132
  %v2134 = vpop.f32.mrf.mxu0
  %v2135 = vadd.f32 %v350, %v2134
  %v2136 = vpop.f32.mrf.mxu0
  %v2137 = vadd.f32 %v354, %v2136
  %2138 = vmatprep.mubr.bf16.mxu0 %v825
  %2139 = vmatmul.mubr.bf16.gmra.mxu0 %v824
  %v2140 = vpop.f32.mrf.mxu0
  %v2141 = vadd.f32 %v350, %v2140
  %v2142 = vpop.f32.mrf.mxu0
  %v2143 = vadd.f32 %v354, %v2142
  %v2144 = vpop.f32.mrf.mxu0
  %v2145 = vadd.f32 %v350, %v2144
  %v2146 = vpop.f32.mrf.mxu0
  %v2147 = vadd.f32 %v354, %v2146
  %2148 = vdwg.mxu0
  %2149 = vmatprep.subr.bf16.mxu0 %v1608
  %2150 = vmatpush1.bf16.msra.mxu0 %v1607
  %2151 = vmatprep.subr.bf16.mxu0 %v1604
  %2152 = vmatpush1.bf16.msra.mxu0 %v1603
  %2153 = vmatprep.subr.bf16.mxu0 %v1600
  %2154 = vmatpush1.bf16.msra.mxu0 %v1599
  %2155 = vmatprep.subr.bf16.mxu0 %v1596
  %2156 = vmatpush1.bf16.msra.mxu0 %v1595
  %2157 = vmatprep.subr.bf16.mxu0 %v1592
  %2158 = vmatpush1.bf16.msra.mxu0 %v1591
  %2159 = vmatprep.subr.bf16.mxu0 %v1588
  %2160 = vmatpush1.bf16.msra.mxu0 %v1587
  %2161 = vmatprep.subr.bf16.mxu0 %v1584
  %2162 = vmatpush1.bf16.msra.mxu0 %v1583
  %2163 = vmatprep.subr.bf16.mxu0 %v1580
  %2164 = vmatpush1.bf16.msra.mxu0 %v1579
  %2165 = vmatprep.subr.bf16.mxu0 %v1640
  %2166 = vmatpush2.bf16.msra.mxu0 %v1639
  %2167 = vmatprep.subr.bf16.mxu0 %v1636
  %2168 = vmatpush2.bf16.msra.mxu0 %v1635
  %2169 = vmatprep.subr.bf16.mxu0 %v1632
  %2170 = vmatpush2.bf16.msra.mxu0 %v1631
  %2171 = vmatprep.subr.bf16.mxu0 %v1628
  %2172 = vmatpush2.bf16.msra.mxu0 %v1627
  %2173 = vmatprep.subr.bf16.mxu0 %v1624
  %2174 = vmatpush2.bf16.msra.mxu0 %v1623
  %2175 = vmatprep.subr.bf16.mxu0 %v1620
  %2176 = vmatpush2.bf16.msra.mxu0 %v1619
  %2177 = vmatprep.subr.bf16.mxu0 %v1616
  %2178 = vmatpush2.bf16.msra.mxu0 %v1615
  %2179 = vmatprep.subr.bf16.mxu0 %v1612
  %2180 = vmatpush2.bf16.msra.mxu0 %v1611
  %2181 = vmatprep.mubr.bf16.mxu0 %v722
  %2182 = vmatmul.mubr.bf16.gmra.mxu0 %v721
  %v2183 = vpop.f32.mrf.mxu0
  %v2184 = vadd.f32 %v1991, %v2183
  %v2185 = vpop.f32.mrf.mxu0
  %v2186 = vadd.f32 %v1993, %v2185
  %v2187 = vpop.f32.mrf.mxu0
  %v2188 = vadd.f32 %v1995, %v2187
  %v2189 = vpop.f32.mrf.mxu0
  %v2190 = vadd.f32 %v1997, %v2189
  %2191 = vmatprep.mubr.bf16.mxu0 %v729
  %2192 = vmatmul.mubr.bf16.gmra.mxu0 %v728
  %v2193 = vpop.f32.mrf.mxu0
  %v2194 = vadd.f32 %v2001, %v2193
  %v2195 = vpop.f32.mrf.mxu0
  %v2196 = vadd.f32 %v2003, %v2195
  %v2197 = vpop.f32.mrf.mxu0
  %v2198 = vadd.f32 %v2005, %v2197
  %v2199 = vpop.f32.mrf.mxu0
  %v2200 = vadd.f32 %v2007, %v2199
  %2201 = vmatprep.mubr.bf16.mxu0 %v736
  %2202 = vmatmul.mubr.bf16.gmra.mxu0 %v735
  %v2203 = vpop.f32.mrf.mxu0
  %v2204 = vadd.f32 %v2011, %v2203
  %v2205 = vpop.f32.mrf.mxu0
  %v2206 = vadd.f32 %v2013, %v2205
  %v2207 = vpop.f32.mrf.mxu0
  %v2208 = vadd.f32 %v2015, %v2207
  %v2209 = vpop.f32.mrf.mxu0
  %v2210 = vadd.f32 %v2017, %v2209
  %2211 = vmatprep.mubr.bf16.mxu0 %v743
  %2212 = vmatmul.mubr.bf16.gmra.mxu0 %v742
  %v2213 = vpop.f32.mrf.mxu0
  %v2214 = vadd.f32 %v2021, %v2213
  %v2215 = vpop.f32.mrf.mxu0
  %v2216 = vadd.f32 %v2023, %v2215
  %v2217 = vpop.f32.mrf.mxu0
  %v2218 = vadd.f32 %v2025, %v2217
  %v2219 = vpop.f32.mrf.mxu0
  %v2220 = vadd.f32 %v2027, %v2219
  %2221 = vmatprep.mubr.bf16.mxu0 %v750
  %2222 = vmatmul.mubr.bf16.gmra.mxu0 %v749
  %v2223 = vpop.f32.mrf.mxu0
  %v2224 = vadd.f32 %v2031, %v2223
  %v2225 = vpop.f32.mrf.mxu0
  %v2226 = vadd.f32 %v2033, %v2225
  %v2227 = vpop.f32.mrf.mxu0
  %v2228 = vadd.f32 %v2035, %v2227
  %v2229 = vpop.f32.mrf.mxu0
  %v2230 = vadd.f32 %v2037, %v2229
  %2231 = vmatprep.mubr.bf16.mxu0 %v757
  %2232 = vmatmul.mubr.bf16.gmra.mxu0 %v756
  %v2233 = vpop.f32.mrf.mxu0
  %v2234 = vadd.f32 %v2041, %v2233
  %v2235 = vpop.f32.mrf.mxu0
  %v2236 = vadd.f32 %v2043, %v2235
  %v2237 = vpop.f32.mrf.mxu0
  %v2238 = vadd.f32 %v2045, %v2237
  %v2239 = vpop.f32.mrf.mxu0
  %v2240 = vadd.f32 %v2047, %v2239
  %2241 = vmatprep.mubr.bf16.mxu0 %v764
  %2242 = vmatmul.mubr.bf16.gmra.mxu0 %v763
  %v2243 = vpop.f32.mrf.mxu0
  %v2244 = vadd.f32 %v2051, %v2243
  %v2245 = vpop.f32.mrf.mxu0
  %v2246 = vadd.f32 %v2053, %v2245
  %v2247 = vpop.f32.mrf.mxu0
  %v2248 = vadd.f32 %v2055, %v2247
  %v2249 = vpop.f32.mrf.mxu0
  %v2250 = vadd.f32 %v2057, %v2249
  %2251 = vmatprep.mubr.bf16.mxu0 %v771
  %2252 = vmatmul.mubr.bf16.gmra.mxu0 %v770
  %v2253 = vpop.f32.mrf.mxu0
  %v2254 = vadd.f32 %v2061, %v2253
  %v2255 = vpop.f32.mrf.mxu0
  %v2256 = vadd.f32 %v2063, %v2255
  %v2257 = vpop.f32.mrf.mxu0
  %v2258 = vadd.f32 %v2065, %v2257
  %v2259 = vpop.f32.mrf.mxu0
  %v2260 = vadd.f32 %v2067, %v2259
  %2261 = vmatprep.mubr.bf16.mxu0 %v778
  %2262 = vmatmul.mubr.bf16.gmra.mxu0 %v777
  %v2263 = vpop.f32.mrf.mxu0
  %v2264 = vadd.f32 %v2071, %v2263
  %v2265 = vpop.f32.mrf.mxu0
  %v2266 = vadd.f32 %v2073, %v2265
  %v2267 = vpop.f32.mrf.mxu0
  %v2268 = vadd.f32 %v2075, %v2267
  %v2269 = vpop.f32.mrf.mxu0
  %v2270 = vadd.f32 %v2077, %v2269
  %2271 = vmatprep.mubr.bf16.mxu0 %v785
  %2272 = vmatmul.mubr.bf16.gmra.mxu0 %v784
  %v2273 = vpop.f32.mrf.mxu0
  %v2274 = vadd.f32 %v2081, %v2273
  %v2275 = vpop.f32.mrf.mxu0
  %v2276 = vadd.f32 %v2083, %v2275
  %v2277 = vpop.f32.mrf.mxu0
  %v2278 = vadd.f32 %v2085, %v2277
  %v2279 = vpop.f32.mrf.mxu0
  %v2280 = vadd.f32 %v2087, %v2279
  %2281 = vmatprep.mubr.bf16.mxu0 %v792
  %2282 = vmatmul.mubr.bf16.gmra.mxu0 %v791
  %v2283 = vpop.f32.mrf.mxu0
  %v2284 = vadd.f32 %v2091, %v2283
  %v2285 = vpop.f32.mrf.mxu0
  %v2286 = vadd.f32 %v2093, %v2285
  %v2287 = vpop.f32.mrf.mxu0
  %v2288 = vadd.f32 %v2095, %v2287
  %v2289 = vpop.f32.mrf.mxu0
  %v2290 = vadd.f32 %v2097, %v2289
  %2291 = vmatprep.mubr.bf16.mxu0 %v799
  %2292 = vmatmul.mubr.bf16.gmra.mxu0 %v798
  %v2293 = vpop.f32.mrf.mxu0
  %v2294 = vadd.f32 %v2101, %v2293
  %v2295 = vpop.f32.mrf.mxu0
  %v2296 = vadd.f32 %v2103, %v2295
  %v2297 = vpop.f32.mrf.mxu0
  %v2298 = vadd.f32 %v2105, %v2297
  %v2299 = vpop.f32.mrf.mxu0
  %v2300 = vadd.f32 %v2107, %v2299
  %2301 = vmatprep.mubr.bf16.mxu0 %v806
  %2302 = vmatmul.mubr.bf16.gmra.mxu0 %v805
  %v2303 = vpop.f32.mrf.mxu0
  %v2304 = vadd.f32 %v2111, %v2303
  %v2305 = vpop.f32.mrf.mxu0
  %v2306 = vadd.f32 %v2113, %v2305
  %v2307 = vpop.f32.mrf.mxu0
  %v2308 = vadd.f32 %v2115, %v2307
  %v2309 = vpop.f32.mrf.mxu0
  %v2310 = vadd.f32 %v2117, %v2309
  %2311 = vmatprep.mubr.bf16.mxu0 %v813
  %2312 = vmatmul.mubr.bf16.gmra.mxu0 %v812
  %v2313 = vpop.f32.mrf.mxu0
  %v2314 = vadd.f32 %v2121, %v2313
  %v2315 = vpop.f32.mrf.mxu0
  %v2316 = vadd.f32 %v2123, %v2315
  %v2317 = vpop.f32.mrf.mxu0
  %v2318 = vadd.f32 %v2125, %v2317
  %v2319 = vpop.f32.mrf.mxu0
  %v2320 = vadd.f32 %v2127, %v2319
  %2321 = vmatprep.mubr.bf16.mxu0 %v820
  %2322 = vmatmul.mubr.bf16.gmra.mxu0 %v819
  %v2323 = vpop.f32.mrf.mxu0
  %v2324 = vadd.f32 %v2131, %v2323
  %v2325 = vpop.f32.mrf.mxu0
  %v2326 = vadd.f32 %v2133, %v2325
  %v2327 = vpop.f32.mrf.mxu0
  %v2328 = vadd.f32 %v2135, %v2327
  %v2329 = vpop.f32.mrf.mxu0
  %v2330 = vadd.f32 %v2137, %v2329
  %2331 = vmatprep.mubr.bf16.mxu0 %v827
  %2332 = vmatmul.mubr.bf16.gmra.mxu0 %v826
  %v2333 = vpop.f32.mrf.mxu0
  %v2334 = vadd.f32 %v2141, %v2333
  %v2335 = vpop.f32.mrf.mxu0
  %v2336 = vadd.f32 %v2143, %v2335
  %v2337 = vpop.f32.mrf.mxu0
  %v2338 = vadd.f32 %v2145, %v2337
  %v2339 = vpop.f32.mrf.mxu0
  %v2340 = vadd.f32 %v2147, %v2339
  %2341 = vdwg.mxu0
  %2342 = vmatprep.subr.bf16.mxu0 %v1672
  %2343 = vmatpush1.bf16.msra.mxu0 %v1671
  %2344 = vmatprep.subr.bf16.mxu0 %v1668
  %2345 = vmatpush1.bf16.msra.mxu0 %v1667
  %2346 = vmatprep.subr.bf16.mxu0 %v1664
  %2347 = vmatpush1.bf16.msra.mxu0 %v1663
  %2348 = vmatprep.subr.bf16.mxu0 %v1660
  %2349 = vmatpush1.bf16.msra.mxu0 %v1659
  %2350 = vmatprep.subr.bf16.mxu0 %v1656
  %2351 = vmatpush1.bf16.msra.mxu0 %v1655
  %2352 = vmatprep.subr.bf16.mxu0 %v1652
  %2353 = vmatpush1.bf16.msra.mxu0 %v1651
  %2354 = vmatprep.subr.bf16.mxu0 %v1648
  %2355 = vmatpush1.bf16.msra.mxu0 %v1647
  %2356 = vmatprep.subr.bf16.mxu0 %v1644
  %2357 = vmatpush1.bf16.msra.mxu0 %v1643
  %2358 = vmatprep.subr.bf16.mxu0 %v1704
  %2359 = vmatpush2.bf16.msra.mxu0 %v1703
  %2360 = vmatprep.subr.bf16.mxu0 %v1700
  %2361 = vmatpush2.bf16.msra.mxu0 %v1699
  %2362 = vmatprep.subr.bf16.mxu0 %v1696
  %2363 = vmatpush2.bf16.msra.mxu0 %v1695
  %2364 = vmatprep.subr.bf16.mxu0 %v1692
  %2365 = vmatpush2.bf16.msra.mxu0 %v1691
  %2366 = vmatprep.subr.bf16.mxu0 %v1688
  %2367 = vmatpush2.bf16.msra.mxu0 %v1687
  %2368 = vmatprep.subr.bf16.mxu0 %v1684
  %2369 = vmatpush2.bf16.msra.mxu0 %v1683
  %2370 = vmatprep.subr.bf16.mxu0 %v1680
  %2371 = vmatpush2.bf16.msra.mxu0 %v1679
  %2372 = vmatprep.subr.bf16.mxu0 %v1676
  %2373 = vmatpush2.bf16.msra.mxu0 %v1675
  %2374 = vmatprep.mubr.bf16.mxu0 %v724
  %2375 = vmatmul.mubr.bf16.gmra.mxu0 %v723
  %v2376 = vpop.f32.mrf.mxu0
  %v2377 = vadd.f32 %v2184, %v2376
  %v2378 = vpop.f32.mrf.mxu0
  %v2379 = vadd.f32 %v2186, %v2378
  %v2380 = vpop.f32.mrf.mxu0
  %v2381 = vadd.f32 %v2188, %v2380
  %v2382 = vpop.f32.mrf.mxu0
  %v2383 = vadd.f32 %v2190, %v2382
  %2384 = vmatprep.mubr.bf16.mxu0 %v731
  %2385 = vmatmul.mubr.bf16.gmra.mxu0 %v730
  %v2386 = vpop.f32.mrf.mxu0
  %v2387 = vadd.f32 %v2194, %v2386
  %v2388 = vpop.f32.mrf.mxu0
  %v2389 = vadd.f32 %v2196, %v2388
  %v2390 = vpop.f32.mrf.mxu0
  %v2391 = vadd.f32 %v2198, %v2390
  %v2392 = vpop.f32.mrf.mxu0
  %v2393 = vadd.f32 %v2200, %v2392
  %2394 = vmatprep.mubr.bf16.mxu0 %v738
  %2395 = vmatmul.mubr.bf16.gmra.mxu0 %v737
  %v2396 = vpop.f32.mrf.mxu0
  %v2397 = vadd.f32 %v2204, %v2396
  %v2398 = vpop.f32.mrf.mxu0
  %v2399 = vadd.f32 %v2206, %v2398
  %v2400 = vpop.f32.mrf.mxu0
  %v2401 = vadd.f32 %v2208, %v2400
  %v2402 = vpop.f32.mrf.mxu0
  %v2403 = vadd.f32 %v2210, %v2402
  %2404 = vmatprep.mubr.bf16.mxu0 %v745
  %2405 = vmatmul.mubr.bf16.gmra.mxu0 %v744
  %v2406 = vpop.f32.mrf.mxu0
  %v2407 = vadd.f32 %v2214, %v2406
  %v2408 = vpop.f32.mrf.mxu0
  %v2409 = vadd.f32 %v2216, %v2408
  %v2410 = vpop.f32.mrf.mxu0
  %v2411 = vadd.f32 %v2218, %v2410
  %v2412 = vpop.f32.mrf.mxu0
  %v2413 = vadd.f32 %v2220, %v2412
  %2414 = vmatprep.mubr.bf16.mxu0 %v752
  %2415 = vmatmul.mubr.bf16.gmra.mxu0 %v751
  %v2416 = vpop.f32.mrf.mxu0
  %v2417 = vadd.f32 %v2224, %v2416
  %v2418 = vpop.f32.mrf.mxu0
  %v2419 = vadd.f32 %v2226, %v2418
  %v2420 = vpop.f32.mrf.mxu0
  %v2421 = vadd.f32 %v2228, %v2420
  %v2422 = vpop.f32.mrf.mxu0
  %v2423 = vadd.f32 %v2230, %v2422
  %2424 = vmatprep.mubr.bf16.mxu0 %v759
  %2425 = vmatmul.mubr.bf16.gmra.mxu0 %v758
  %v2426 = vpop.f32.mrf.mxu0
  %v2427 = vadd.f32 %v2234, %v2426
  %v2428 = vpop.f32.mrf.mxu0
  %v2429 = vadd.f32 %v2236, %v2428
  %v2430 = vpop.f32.mrf.mxu0
  %v2431 = vadd.f32 %v2238, %v2430
  %v2432 = vpop.f32.mrf.mxu0
  %v2433 = vadd.f32 %v2240, %v2432
  %2434 = vmatprep.mubr.bf16.mxu0 %v766
  %2435 = vmatmul.mubr.bf16.gmra.mxu0 %v765
  %v2436 = vpop.f32.mrf.mxu0
  %v2437 = vadd.f32 %v2244, %v2436
  %v2438 = vpop.f32.mrf.mxu0
  %v2439 = vadd.f32 %v2246, %v2438
  %v2440 = vpop.f32.mrf.mxu0
  %v2441 = vadd.f32 %v2248, %v2440
  %v2442 = vpop.f32.mrf.mxu0
  %v2443 = vadd.f32 %v2250, %v2442
  %2444 = vmatprep.mubr.bf16.mxu0 %v773
  %2445 = vmatmul.mubr.bf16.gmra.mxu0 %v772
  %v2446 = vpop.f32.mrf.mxu0
  %v2447 = vadd.f32 %v2254, %v2446
  %v2448 = vpop.f32.mrf.mxu0
  %v2449 = vadd.f32 %v2256, %v2448
  %v2450 = vpop.f32.mrf.mxu0
  %v2451 = vadd.f32 %v2258, %v2450
  %v2452 = vpop.f32.mrf.mxu0
  %v2453 = vadd.f32 %v2260, %v2452
  %2454 = vmatprep.mubr.bf16.mxu0 %v780
  %2455 = vmatmul.mubr.bf16.gmra.mxu0 %v779
  %v2456 = vpop.f32.mrf.mxu0
  %v2457 = vadd.f32 %v2264, %v2456
  %v2458 = vpop.f32.mrf.mxu0
  %v2459 = vadd.f32 %v2266, %v2458
  %v2460 = vpop.f32.mrf.mxu0
  %v2461 = vadd.f32 %v2268, %v2460
  %v2462 = vpop.f32.mrf.mxu0
  %v2463 = vadd.f32 %v2270, %v2462
  %2464 = vmatprep.mubr.bf16.mxu0 %v787
  %2465 = vmatmul.mubr.bf16.gmra.mxu0 %v786
  %v2466 = vpop.f32.mrf.mxu0
  %v2467 = vadd.f32 %v2274, %v2466
  %v2468 = vpop.f32.mrf.mxu0
  %v2469 = vadd.f32 %v2276, %v2468
  %v2470 = vpop.f32.mrf.mxu0
  %v2471 = vadd.f32 %v2278, %v2470
  %v2472 = vpop.f32.mrf.mxu0
  %v2473 = vadd.f32 %v2280, %v2472
  %2474 = vmatprep.mubr.bf16.mxu0 %v794
  %2475 = vmatmul.mubr.bf16.gmra.mxu0 %v793
  %v2476 = vpop.f32.mrf.mxu0
  %v2477 = vadd.f32 %v2284, %v2476
  %v2478 = vpop.f32.mrf.mxu0
  %v2479 = vadd.f32 %v2286, %v2478
  %v2480 = vpop.f32.mrf.mxu0
  %v2481 = vadd.f32 %v2288, %v2480
  %v2482 = vpop.f32.mrf.mxu0
  %v2483 = vadd.f32 %v2290, %v2482
  %2484 = vmatprep.mubr.bf16.mxu0 %v801
  %2485 = vmatmul.mubr.bf16.gmra.mxu0 %v800
  %v2486 = vpop.f32.mrf.mxu0
  %v2487 = vadd.f32 %v2294, %v2486
  %v2488 = vpop.f32.mrf.mxu0
  %v2489 = vadd.f32 %v2296, %v2488
  %v2490 = vpop.f32.mrf.mxu0
  %v2491 = vadd.f32 %v2298, %v2490
  %v2492 = vpop.f32.mrf.mxu0
  %v2493 = vadd.f32 %v2300, %v2492
  %2494 = vmatprep.mubr.bf16.mxu0 %v808
  %2495 = vmatmul.mubr.bf16.gmra.mxu0 %v807
  %v2496 = vpop.f32.mrf.mxu0
  %v2497 = vadd.f32 %v2304, %v2496
  %v2498 = vpop.f32.mrf.mxu0
  %v2499 = vadd.f32 %v2306, %v2498
  %v2500 = vpop.f32.mrf.mxu0
  %v2501 = vadd.f32 %v2308, %v2500
  %v2502 = vpop.f32.mrf.mxu0
  %v2503 = vadd.f32 %v2310, %v2502
  %2504 = vmatprep.mubr.bf16.mxu0 %v815
  %2505 = vmatmul.mubr.bf16.gmra.mxu0 %v814
  %v2506 = vpop.f32.mrf.mxu0
  %v2507 = vadd.f32 %v2314, %v2506
  %v2508 = vpop.f32.mrf.mxu0
  %v2509 = vadd.f32 %v2316, %v2508
  %v2510 = vpop.f32.mrf.mxu0
  %v2511 = vadd.f32 %v2318, %v2510
  %v2512 = vpop.f32.mrf.mxu0
  %v2513 = vadd.f32 %v2320, %v2512
  %2514 = vmatprep.mubr.bf16.mxu0 %v822
  %2515 = vmatmul.mubr.bf16.gmra.mxu0 %v821
  %v2516 = vpop.f32.mrf.mxu0
  %v2517 = vadd.f32 %v2324, %v2516
  %v2518 = vpop.f32.mrf.mxu0
  %v2519 = vadd.f32 %v2326, %v2518
  %v2520 = vpop.f32.mrf.mxu0
  %v2521 = vadd.f32 %v2328, %v2520
  %v2522 = vpop.f32.mrf.mxu0
  %v2523 = vadd.f32 %v2330, %v2522
  %2524 = vmatprep.mubr.bf16.mxu0 %v829
  %2525 = vmatmul.mubr.bf16.gmra.mxu0 %v828
  %v2526 = vpop.f32.mrf.mxu0
  %v2527 = vadd.f32 %v2334, %v2526
  %v2528 = vpop.f32.mrf.mxu0
  %v2529 = vadd.f32 %v2336, %v2528
  %v2530 = vpop.f32.mrf.mxu0
  %v2531 = vadd.f32 %v2338, %v2530
  %v2532 = vpop.f32.mrf.mxu0
  %v2533 = vadd.f32 %v2340, %v2532
  %2534 = vdwg.mxu0
  %2535 = vmatprep.subr.bf16.mxu0 0
  %2536 = vmatpush1.bf16.msra.mxu0 0
  %2537 = vmatprep.subr.bf16.mxu0 0
  %2538 = vmatpush1.bf16.msra.mxu0 0
  %2539 = vmatprep.subr.bf16.mxu0 0
  %2540 = vmatpush1.bf16.msra.mxu0 0
  %2541 = vmatprep.subr.bf16.mxu0 0
  %2542 = vmatpush1.bf16.msra.mxu0 0
  %2543 = vmatprep.subr.bf16.mxu0 0
  %2544 = vmatpush1.bf16.msra.mxu0 0
  %2545 = vmatprep.subr.bf16.mxu0 0
  %2546 = vmatpush1.bf16.msra.mxu0 0
  %2547 = vmatprep.subr.bf16.mxu0 0
  %2548 = vmatpush1.bf16.msra.mxu0 0
  %2549 = vmatprep.subr.bf16.mxu0 %v1708
  %2550 = vmatpush1.bf16.msra.mxu0 %v1707
  %2551 = vmatprep.subr.bf16.mxu0 0
  %2552 = vmatpush2.bf16.msra.mxu0 0
  %2553 = vmatprep.subr.bf16.mxu0 0
  %2554 = vmatpush2.bf16.msra.mxu0 0
  %2555 = vmatprep.subr.bf16.mxu0 0
  %2556 = vmatpush2.bf16.msra.mxu0 0
  %2557 = vmatprep.subr.bf16.mxu0 0
  %2558 = vmatpush2.bf16.msra.mxu0 0
  %2559 = vmatprep.subr.bf16.mxu0 0
  %2560 = vmatpush2.bf16.msra.mxu0 0
  %2561 = vmatprep.subr.bf16.mxu0 0
  %2562 = vmatpush2.bf16.msra.mxu0 0
  %2563 = vmatprep.subr.bf16.mxu0 0
  %2564 = vmatpush2.bf16.msra.mxu0 0
  %2565 = vmatprep.subr.bf16.mxu0 0
  %2566 = vmatpush2.bf16.msra.mxu0 0
  %2567 = vmatprep.mubr.bf16.mxu0 0
  %2568 = vmatmul.mubr.bf16.gmra.mxu0 %v1909
  %v2569 = vpop.f32.mrf.mxu0
  %v2570 = vadd.f32 %v2377, %v2569
  %v2571 = vpop.f32.mrf.mxu0
  %v2572 = vadd.f32 %v2379, %v2571
  %v2573 = vpop.f32.mrf.mxu0
  %v2574 = vadd.f32 %v2381, %v2573
  %v2575 = vpop.f32.mrf.mxu0
  %v2576 = vadd.f32 %v2383, %v2575
  %2577 = vmatprep.mubr.bf16.mxu0 0
  %2578 = vmatmul.mubr.bf16.gmra.mxu0 %v1912
  %v2579 = vpop.f32.mrf.mxu0
  %v2580 = vadd.f32 %v2387, %v2579
  %v2581 = vpop.f32.mrf.mxu0
  %v2582 = vadd.f32 %v2389, %v2581
  %v2583 = vpop.f32.mrf.mxu0
  %v2584 = vadd.f32 %v2391, %v2583
  %v2585 = vpop.f32.mrf.mxu0
  %v2586 = vadd.f32 %v2393, %v2585
  %2587 = vmatprep.mubr.bf16.mxu0 0
  %2588 = vmatmul.mubr.bf16.gmra.mxu0 %v1915
  %v2589 = vpop.f32.mrf.mxu0
  %v2590 = vadd.f32 %v2397, %v2589
  %v2591 = vpop.f32.mrf.mxu0
  %v2592 = vadd.f32 %v2399, %v2591
  %v2593 = vpop.f32.mrf.mxu0
  %v2594 = vadd.f32 %v2401, %v2593
  %v2595 = vpop.f32.mrf.mxu0
  %v2596 = vadd.f32 %v2403, %v2595
  %2597 = vmatprep.mubr.bf16.mxu0 0
  %2598 = vmatmul.mubr.bf16.gmra.mxu0 %v1918
  %v2599 = vpop.f32.mrf.mxu0
  %v2600 = vadd.f32 %v2407, %v2599
  %v2601 = vpop.f32.mrf.mxu0
  %v2602 = vadd.f32 %v2409, %v2601
  %v2603 = vpop.f32.mrf.mxu0
  %v2604 = vadd.f32 %v2411, %v2603
  %v2605 = vpop.f32.mrf.mxu0
  %v2606 = vadd.f32 %v2413, %v2605
  %2607 = vmatprep.mubr.bf16.mxu0 0
  %2608 = vmatmul.mubr.bf16.gmra.mxu0 %v1921
  %v2609 = vpop.f32.mrf.mxu0
  %v2610 = vadd.f32 %v2417, %v2609
  %v2611 = vpop.f32.mrf.mxu0
  %v2612 = vadd.f32 %v2419, %v2611
  %v2613 = vpop.f32.mrf.mxu0
  %v2614 = vadd.f32 %v2421, %v2613
  %v2615 = vpop.f32.mrf.mxu0
  %v2616 = vadd.f32 %v2423, %v2615
  %2617 = vmatprep.mubr.bf16.mxu0 0
  %2618 = vmatmul.mubr.bf16.gmra.mxu0 %v1924
  %v2619 = vpop.f32.mrf.mxu0
  %v2620 = vadd.f32 %v2427, %v2619
  %v2621 = vpop.f32.mrf.mxu0
  %v2622 = vadd.f32 %v2429, %v2621
  %v2623 = vpop.f32.mrf.mxu0
  %v2624 = vadd.f32 %v2431, %v2623
  %v2625 = vpop.f32.mrf.mxu0
  %v2626 = vadd.f32 %v2433, %v2625
  %2627 = vmatprep.mubr.bf16.mxu0 0
  %2628 = vmatmul.mubr.bf16.gmra.mxu0 %v1927
  %v2629 = vpop.f32.mrf.mxu0
  %v2630 = vadd.f32 %v2437, %v2629
  %v2631 = vpop.f32.mrf.mxu0
  %v2632 = vadd.f32 %v2439, %v2631
  %v2633 = vpop.f32.mrf.mxu0
  %v2634 = vadd.f32 %v2441, %v2633
  %v2635 = vpop.f32.mrf.mxu0
  %v2636 = vadd.f32 %v2443, %v2635
  %2637 = vmatprep.mubr.bf16.mxu0 0
  %2638 = vmatmul.mubr.bf16.gmra.mxu0 %v1930
  %v2639 = vpop.f32.mrf.mxu0
  %v2640 = vadd.f32 %v2447, %v2639
  %v2641 = vpop.f32.mrf.mxu0
  %v2642 = vadd.f32 %v2449, %v2641
  %v2643 = vpop.f32.mrf.mxu0
  %v2644 = vadd.f32 %v2451, %v2643
  %v2645 = vpop.f32.mrf.mxu0
  %v2646 = vadd.f32 %v2453, %v2645
  %2647 = vmatprep.mubr.bf16.mxu0 0
  %2648 = vmatmul.mubr.bf16.gmra.mxu0 %v1933
  %v2649 = vpop.f32.mrf.mxu0
  %v2650 = vadd.f32 %v2457, %v2649
  %v2651 = vpop.f32.mrf.mxu0
  %v2652 = vadd.f32 %v2459, %v2651
  %v2653 = vpop.f32.mrf.mxu0
  %v2654 = vadd.f32 %v2461, %v2653
  %v2655 = vpop.f32.mrf.mxu0
  %v2656 = vadd.f32 %v2463, %v2655
  %2657 = vmatprep.mubr.bf16.mxu0 0
  %2658 = vmatmul.mubr.bf16.gmra.mxu0 %v1936
  %v2659 = vpop.f32.mrf.mxu0
  %v2660 = vadd.f32 %v2467, %v2659
  %v2661 = vpop.f32.mrf.mxu0
  %v2662 = vadd.f32 %v2469, %v2661
  %v2663 = vpop.f32.mrf.mxu0
  %v2664 = vadd.f32 %v2471, %v2663
  %v2665 = vpop.f32.mrf.mxu0
  %v2666 = vadd.f32 %v2473, %v2665
  %2667 = vmatprep.mubr.bf16.mxu0 0
  %2668 = vmatmul.mubr.bf16.gmra.mxu0 %v1939
  %v2669 = vpop.f32.mrf.mxu0
  %v2670 = vadd.f32 %v2477, %v2669
  %v2671 = vpop.f32.mrf.mxu0
  %v2672 = vadd.f32 %v2479, %v2671
  %v2673 = vpop.f32.mrf.mxu0
  %v2674 = vadd.f32 %v2481, %v2673
  %v2675 = vpop.f32.mrf.mxu0
  %v2676 = vadd.f32 %v2483, %v2675
  %2677 = vmatprep.mubr.bf16.mxu0 0
  %2678 = vmatmul.mubr.bf16.gmra.mxu0 %v1942
  %v2679 = vpop.f32.mrf.mxu0
  %v2680 = vadd.f32 %v2487, %v2679
  %v2681 = vpop.f32.mrf.mxu0
  %v2682 = vadd.f32 %v2489, %v2681
  %v2683 = vpop.f32.mrf.mxu0
  %v2684 = vadd.f32 %v2491, %v2683
  %v2685 = vpop.f32.mrf.mxu0
  %v2686 = vadd.f32 %v2493, %v2685
  %2687 = vmatprep.mubr.bf16.mxu0 0
  %2688 = vmatmul.mubr.bf16.gmra.mxu0 %v1945
  %v2689 = vpop.f32.mrf.mxu0
  %v2690 = vadd.f32 %v2497, %v2689
  %v2691 = vpop.f32.mrf.mxu0
  %v2692 = vadd.f32 %v2499, %v2691
  %v2693 = vpop.f32.mrf.mxu0
  %v2694 = vadd.f32 %v2501, %v2693
  %v2695 = vpop.f32.mrf.mxu0
  %v2696 = vadd.f32 %v2503, %v2695
  %2697 = vmatprep.mubr.bf16.mxu0 0
  %2698 = vmatmul.mubr.bf16.gmra.mxu0 %v1948
  %v2699 = vpop.f32.mrf.mxu0
  %v2700 = vadd.f32 %v2507, %v2699
  %v2701 = vpop.f32.mrf.mxu0
  %v2702 = vadd.f32 %v2509, %v2701
  %v2703 = vpop.f32.mrf.mxu0
  %v2704 = vadd.f32 %v2511, %v2703
  %v2705 = vpop.f32.mrf.mxu0
  %v2706 = vadd.f32 %v2513, %v2705
  %2707 = vmatprep.mubr.bf16.mxu0 0
  %2708 = vmatmul.mubr.bf16.gmra.mxu0 %v1951
  %v2709 = vpop.f32.mrf.mxu0
  %v2710 = vadd.f32 %v2517, %v2709
  %v2711 = vpop.f32.mrf.mxu0
  %v2712 = vadd.f32 %v2519, %v2711
  %v2713 = vpop.f32.mrf.mxu0
  %v2714 = vadd.f32 %v2521, %v2713
  %v2715 = vpop.f32.mrf.mxu0
  %v2716 = vadd.f32 %v2523, %v2715
  %2717 = vmatprep.mubr.bf16.mxu0 0
  %2718 = vmatmul.mubr.bf16.gmra.mxu0 %v1954
  %v2719 = vpop.f32.mrf.mxu0
  %v2720 = vadd.f32 %v2527, %v2719
  %v2721 = vpop.f32.mrf.mxu0
  %v2722 = vadd.f32 %v2529, %v2721
  %v2723 = vpop.f32.mrf.mxu0
  %v2724 = vadd.f32 %v2531, %v2723
  %v2725 = vpop.f32.mrf.mxu0
  %v2726 = vadd.f32 %v2533, %v2725
  %2727 = vdwg.mxu0
  %2728 = vmatprep.subr.bf16.mxu0 %v1546
  %2729 = vmatpush1.bf16.msra.mxu0 %v1545
  %2730 = vmatprep.subr.bf16.mxu0 %v1542
  %2731 = vmatpush1.bf16.msra.mxu0 %v1541
  %2732 = vmatprep.subr.bf16.mxu0 %v1538
  %2733 = vmatpush1.bf16.msra.mxu0 %v1537
  %2734 = vmatprep.subr.bf16.mxu0 %v1534
  %2735 = vmatpush1.bf16.msra.mxu0 %v1533
  %2736 = vmatprep.subr.bf16.mxu0 %v1530
  %2737 = vmatpush1.bf16.msra.mxu0 %v1529
  %2738 = vmatprep.subr.bf16.mxu0 %v1526
  %2739 = vmatpush1.bf16.msra.mxu0 %v1525
  %2740 = vmatprep.subr.bf16.mxu0 %v1522
  %2741 = vmatpush1.bf16.msra.mxu0 %v1521
  %2742 = vmatprep.subr.bf16.mxu0 %v1518
  %2743 = vmatpush1.bf16.msra.mxu0 %v1517
  %2744 = vmatprep.subr.bf16.mxu0 %v1578
  %2745 = vmatpush2.bf16.msra.mxu0 %v1577
  %2746 = vmatprep.subr.bf16.mxu0 %v1574
  %2747 = vmatpush2.bf16.msra.mxu0 %v1573
  %2748 = vmatprep.subr.bf16.mxu0 %v1570
  %2749 = vmatpush2.bf16.msra.mxu0 %v1569
  %2750 = vmatprep.subr.bf16.mxu0 %v1566
  %2751 = vmatpush2.bf16.msra.mxu0 %v1565
  %2752 = vmatprep.subr.bf16.mxu0 %v1562
  %2753 = vmatpush2.bf16.msra.mxu0 %v1561
  %2754 = vmatprep.subr.bf16.mxu0 %v1558
  %2755 = vmatpush2.bf16.msra.mxu0 %v1557
  %2756 = vmatprep.subr.bf16.mxu0 %v1554
  %2757 = vmatpush2.bf16.msra.mxu0 %v1553
  %2758 = vmatprep.subr.bf16.mxu0 %v1550
  %2759 = vmatpush2.bf16.msra.mxu0 %v1549
  %2760 = vmatprep.mubr.bf16.mxu0 %v720
  %2761 = vmatmul.mubr.bf16.gmra.mxu0 %v719
  %v2762 = vpop.f32.mrf.mxu0
  %v2763 = vadd.f32 %v358, %v2762
  %v2764 = vpop.f32.mrf.mxu0
  %v2765 = vadd.f32 %v362, %v2764
  %v2766 = vpop.f32.mrf.mxu0
  %v2767 = vadd.f32 %v358, %v2766
  %v2768 = vpop.f32.mrf.mxu0
  %v2769 = vadd.f32 %v362, %v2768
  %2770 = vmatprep.mubr.bf16.mxu0 %v727
  %2771 = vmatmul.mubr.bf16.gmra.mxu0 %v726
  %v2772 = vpop.f32.mrf.mxu0
  %v2773 = vadd.f32 %v358, %v2772
  %v2774 = vpop.f32.mrf.mxu0
  %v2775 = vadd.f32 %v362, %v2774
  %v2776 = vpop.f32.mrf.mxu0
  %v2777 = vadd.f32 %v358, %v2776
  %v2778 = vpop.f32.mrf.mxu0
  %v2779 = vadd.f32 %v362, %v2778
  %2780 = vmatprep.mubr.bf16.mxu0 %v734
  %2781 = vmatmul.mubr.bf16.gmra.mxu0 %v733
  %v2782 = vpop.f32.mrf.mxu0
  %v2783 = vadd.f32 %v358, %v2782
  %v2784 = vpop.f32.mrf.mxu0
  %v2785 = vadd.f32 %v362, %v2784
  %v2786 = vpop.f32.mrf.mxu0
  %v2787 = vadd.f32 %v358, %v2786
  %v2788 = vpop.f32.mrf.mxu0
  %v2789 = vadd.f32 %v362, %v2788
  %2790 = vmatprep.mubr.bf16.mxu0 %v741
  %2791 = vmatmul.mubr.bf16.gmra.mxu0 %v740
  %v2792 = vpop.f32.mrf.mxu0
  %v2793 = vadd.f32 %v358, %v2792
  %v2794 = vpop.f32.mrf.mxu0
  %v2795 = vadd.f32 %v362, %v2794
  %v2796 = vpop.f32.mrf.mxu0
  %v2797 = vadd.f32 %v358, %v2796
  %v2798 = vpop.f32.mrf.mxu0
  %v2799 = vadd.f32 %v362, %v2798
  %2800 = vmatprep.mubr.bf16.mxu0 %v748
  %2801 = vmatmul.mubr.bf16.gmra.mxu0 %v747
  %v2802 = vpop.f32.mrf.mxu0
  %v2803 = vadd.f32 %v358, %v2802
  %v2804 = vpop.f32.mrf.mxu0
  %v2805 = vadd.f32 %v362, %v2804
  %v2806 = vpop.f32.mrf.mxu0
  %v2807 = vadd.f32 %v358, %v2806
  %v2808 = vpop.f32.mrf.mxu0
  %v2809 = vadd.f32 %v362, %v2808
  %2810 = vmatprep.mubr.bf16.mxu0 %v755
  %2811 = vmatmul.mubr.bf16.gmra.mxu0 %v754
  %v2812 = vpop.f32.mrf.mxu0
  %v2813 = vadd.f32 %v358, %v2812
  %v2814 = vpop.f32.mrf.mxu0
  %v2815 = vadd.f32 %v362, %v2814
  %v2816 = vpop.f32.mrf.mxu0
  %v2817 = vadd.f32 %v358, %v2816
  %v2818 = vpop.f32.mrf.mxu0
  %v2819 = vadd.f32 %v362, %v2818
  %2820 = vmatprep.mubr.bf16.mxu0 %v762
  %2821 = vmatmul.mubr.bf16.gmra.mxu0 %v761
  %v2822 = vpop.f32.mrf.mxu0
  %v2823 = vadd.f32 %v358, %v2822
  %v2824 = vpop.f32.mrf.mxu0
  %v2825 = vadd.f32 %v362, %v2824
  %v2826 = vpop.f32.mrf.mxu0
  %v2827 = vadd.f32 %v358, %v2826
  %v2828 = vpop.f32.mrf.mxu0
  %v2829 = vadd.f32 %v362, %v2828
  %2830 = vmatprep.mubr.bf16.mxu0 %v769
  %2831 = vmatmul.mubr.bf16.gmra.mxu0 %v768
  %v2832 = vpop.f32.mrf.mxu0
  %v2833 = vadd.f32 %v358, %v2832
  %v2834 = vpop.f32.mrf.mxu0
  %v2835 = vadd.f32 %v362, %v2834
  %v2836 = vpop.f32.mrf.mxu0
  %v2837 = vadd.f32 %v358, %v2836
  %v2838 = vpop.f32.mrf.mxu0
  %v2839 = vadd.f32 %v362, %v2838
  %2840 = vmatprep.mubr.bf16.mxu0 %v776
  %2841 = vmatmul.mubr.bf16.gmra.mxu0 %v775
  %v2842 = vpop.f32.mrf.mxu0
  %v2843 = vadd.f32 %v358, %v2842
  %v2844 = vpop.f32.mrf.mxu0
  %v2845 = vadd.f32 %v362, %v2844
  %v2846 = vpop.f32.mrf.mxu0
  %v2847 = vadd.f32 %v358, %v2846
  %v2848 = vpop.f32.mrf.mxu0
  %v2849 = vadd.f32 %v362, %v2848
  %2850 = vmatprep.mubr.bf16.mxu0 %v783
  %2851 = vmatmul.mubr.bf16.gmra.mxu0 %v782
  %v2852 = vpop.f32.mrf.mxu0
  %v2853 = vadd.f32 %v358, %v2852
  %v2854 = vpop.f32.mrf.mxu0
  %v2855 = vadd.f32 %v362, %v2854
  %v2856 = vpop.f32.mrf.mxu0
  %v2857 = vadd.f32 %v358, %v2856
  %v2858 = vpop.f32.mrf.mxu0
  %v2859 = vadd.f32 %v362, %v2858
  %2860 = vmatprep.mubr.bf16.mxu0 %v790
  %2861 = vmatmul.mubr.bf16.gmra.mxu0 %v789
  %v2862 = vpop.f32.mrf.mxu0
  %v2863 = vadd.f32 %v358, %v2862
  %v2864 = vpop.f32.mrf.mxu0
  %v2865 = vadd.f32 %v362, %v2864
  %v2866 = vpop.f32.mrf.mxu0
  %v2867 = vadd.f32 %v358, %v2866
  %v2868 = vpop.f32.mrf.mxu0
  %v2869 = vadd.f32 %v362, %v2868
  %2870 = vmatprep.mubr.bf16.mxu0 %v797
  %2871 = vmatmul.mubr.bf16.gmra.mxu0 %v796
  %v2872 = vpop.f32.mrf.mxu0
  %v2873 = vadd.f32 %v358, %v2872
  %v2874 = vpop.f32.mrf.mxu0
  %v2875 = vadd.f32 %v362, %v2874
  %v2876 = vpop.f32.mrf.mxu0
  %v2877 = vadd.f32 %v358, %v2876
  %v2878 = vpop.f32.mrf.mxu0
  %v2879 = vadd.f32 %v362, %v2878
  %2880 = vmatprep.mubr.bf16.mxu0 %v804
  %2881 = vmatmul.mubr.bf16.gmra.mxu0 %v803
  %v2882 = vpop.f32.mrf.mxu0
  %v2883 = vadd.f32 %v358, %v2882
  %v2884 = vpop.f32.mrf.mxu0
  %v2885 = vadd.f32 %v362, %v2884
  %v2886 = vpop.f32.mrf.mxu0
  %v2887 = vadd.f32 %v358, %v2886
  %v2888 = vpop.f32.mrf.mxu0
  %v2889 = vadd.f32 %v362, %v2888
  %2890 = vmatprep.mubr.bf16.mxu0 %v811
  %2891 = vmatmul.mubr.bf16.gmra.mxu0 %v810
  %v2892 = vpop.f32.mrf.mxu0
  %v2893 = vadd.f32 %v358, %v2892
  %v2894 = vpop.f32.mrf.mxu0
  %v2895 = vadd.f32 %v362, %v2894
  %v2896 = vpop.f32.mrf.mxu0
  %v2897 = vadd.f32 %v358, %v2896
  %v2898 = vpop.f32.mrf.mxu0
  %v2899 = vadd.f32 %v362, %v2898
  %2900 = vmatprep.mubr.bf16.mxu0 %v818
  %2901 = vmatmul.mubr.bf16.gmra.mxu0 %v817
  %v2902 = vpop.f32.mrf.mxu0
  %v2903 = vadd.f32 %v358, %v2902
  %v2904 = vpop.f32.mrf.mxu0
  %v2905 = vadd.f32 %v362, %v2904
  %v2906 = vpop.f32.mrf.mxu0
  %v2907 = vadd.f32 %v358, %v2906
  %v2908 = vpop.f32.mrf.mxu0
  %v2909 = vadd.f32 %v362, %v2908
  %2910 = vmatprep.mubr.bf16.mxu0 %v825
  %2911 = vmatmul.mubr.bf16.gmra.mxu0 %v824
  %v2912 = vpop.f32.mrf.mxu0
  %v2913 = vadd.f32 %v358, %v2912
  %v2914 = vpop.f32.mrf.mxu0
  %v2915 = vadd.f32 %v362, %v2914
  %v2916 = vpop.f32.mrf.mxu0
  %v2917 = vadd.f32 %v358, %v2916
  %v2918 = vpop.f32.mrf.mxu0
  %v2919 = vadd.f32 %v362, %v2918
  %2920 = vdwg.mxu0
  %2921 = vmatprep.subr.bf16.mxu0 %v1610
  %2922 = vmatpush1.bf16.msra.mxu0 %v1609
  %2923 = vmatprep.subr.bf16.mxu0 %v1606
  %2924 = vmatpush1.bf16.msra.mxu0 %v1605
  %2925 = vmatprep.subr.bf16.mxu0 %v1602
  %2926 = vmatpush1.bf16.msra.mxu0 %v1601
  %2927 = vmatprep.subr.bf16.mxu0 %v1598
  %2928 = vmatpush1.bf16.msra.mxu0 %v1597
  %2929 = vmatprep.subr.bf16.mxu0 %v1594
  %2930 = vmatpush1.bf16.msra.mxu0 %v1593
  %2931 = vmatprep.subr.bf16.mxu0 %v1590
  %2932 = vmatpush1.bf16.msra.mxu0 %v1589
  %2933 = vmatprep.subr.bf16.mxu0 %v1586
  %2934 = vmatpush1.bf16.msra.mxu0 %v1585
  %2935 = vmatprep.subr.bf16.mxu0 %v1582
  %2936 = vmatpush1.bf16.msra.mxu0 %v1581
  %2937 = vmatprep.subr.bf16.mxu0 %v1642
  %2938 = vmatpush2.bf16.msra.mxu0 %v1641
  %2939 = vmatprep.subr.bf16.mxu0 %v1638
  %2940 = vmatpush2.bf16.msra.mxu0 %v1637
  %2941 = vmatprep.subr.bf16.mxu0 %v1634
  %2942 = vmatpush2.bf16.msra.mxu0 %v1633
  %2943 = vmatprep.subr.bf16.mxu0 %v1630
  %2944 = vmatpush2.bf16.msra.mxu0 %v1629
  %2945 = vmatprep.subr.bf16.mxu0 %v1626
  %2946 = vmatpush2.bf16.msra.mxu0 %v1625
  %2947 = vmatprep.subr.bf16.mxu0 %v1622
  %2948 = vmatpush2.bf16.msra.mxu0 %v1621
  %2949 = vmatprep.subr.bf16.mxu0 %v1618
  %2950 = vmatpush2.bf16.msra.mxu0 %v1617
  %2951 = vmatprep.subr.bf16.mxu0 %v1614
  %2952 = vmatpush2.bf16.msra.mxu0 %v1613
  %2953 = vmatprep.mubr.bf16.mxu0 %v722
  %2954 = vmatmul.mubr.bf16.gmra.mxu0 %v721
  %v2955 = vpop.f32.mrf.mxu0
  %v2956 = vadd.f32 %v2763, %v2955
  %v2957 = vpop.f32.mrf.mxu0
  %v2958 = vadd.f32 %v2765, %v2957
  %v2959 = vpop.f32.mrf.mxu0
  %v2960 = vadd.f32 %v2767, %v2959
  %v2961 = vpop.f32.mrf.mxu0
  %v2962 = vadd.f32 %v2769, %v2961
  %2963 = vmatprep.mubr.bf16.mxu0 %v729
  %2964 = vmatmul.mubr.bf16.gmra.mxu0 %v728
  %v2965 = vpop.f32.mrf.mxu0
  %v2966 = vadd.f32 %v2773, %v2965
  %v2967 = vpop.f32.mrf.mxu0
  %v2968 = vadd.f32 %v2775, %v2967
  %v2969 = vpop.f32.mrf.mxu0
  %v2970 = vadd.f32 %v2777, %v2969
  %v2971 = vpop.f32.mrf.mxu0
  %v2972 = vadd.f32 %v2779, %v2971
  %2973 = vmatprep.mubr.bf16.mxu0 %v736
  %2974 = vmatmul.mubr.bf16.gmra.mxu0 %v735
  %v2975 = vpop.f32.mrf.mxu0
  %v2976 = vadd.f32 %v2783, %v2975
  %v2977 = vpop.f32.mrf.mxu0
  %v2978 = vadd.f32 %v2785, %v2977
  %v2979 = vpop.f32.mrf.mxu0
  %v2980 = vadd.f32 %v2787, %v2979
  %v2981 = vpop.f32.mrf.mxu0
  %v2982 = vadd.f32 %v2789, %v2981
  %2983 = vmatprep.mubr.bf16.mxu0 %v743
  %2984 = vmatmul.mubr.bf16.gmra.mxu0 %v742
  %v2985 = vpop.f32.mrf.mxu0
  %v2986 = vadd.f32 %v2793, %v2985
  %v2987 = vpop.f32.mrf.mxu0
  %v2988 = vadd.f32 %v2795, %v2987
  %v2989 = vpop.f32.mrf.mxu0
  %v2990 = vadd.f32 %v2797, %v2989
  %v2991 = vpop.f32.mrf.mxu0
  %v2992 = vadd.f32 %v2799, %v2991
  %2993 = vmatprep.mubr.bf16.mxu0 %v750
  %2994 = vmatmul.mubr.bf16.gmra.mxu0 %v749
  %v2995 = vpop.f32.mrf.mxu0
  %v2996 = vadd.f32 %v2803, %v2995
  %v2997 = vpop.f32.mrf.mxu0
  %v2998 = vadd.f32 %v2805, %v2997
  %v2999 = vpop.f32.mrf.mxu0
  %v3000 = vadd.f32 %v2807, %v2999
  %v3001 = vpop.f32.mrf.mxu0
  %v3002 = vadd.f32 %v2809, %v3001
  %3003 = vmatprep.mubr.bf16.mxu0 %v757
  %3004 = vmatmul.mubr.bf16.gmra.mxu0 %v756
  %v3005 = vpop.f32.mrf.mxu0
  %v3006 = vadd.f32 %v2813, %v3005
  %v3007 = vpop.f32.mrf.mxu0
  %v3008 = vadd.f32 %v2815, %v3007
  %v3009 = vpop.f32.mrf.mxu0
  %v3010 = vadd.f32 %v2817, %v3009
  %v3011 = vpop.f32.mrf.mxu0
  %v3012 = vadd.f32 %v2819, %v3011
  %3013 = vmatprep.mubr.bf16.mxu0 %v764
  %3014 = vmatmul.mubr.bf16.gmra.mxu0 %v763
  %v3015 = vpop.f32.mrf.mxu0
  %v3016 = vadd.f32 %v2823, %v3015
  %v3017 = vpop.f32.mrf.mxu0
  %v3018 = vadd.f32 %v2825, %v3017
  %v3019 = vpop.f32.mrf.mxu0
  %v3020 = vadd.f32 %v2827, %v3019
  %v3021 = vpop.f32.mrf.mxu0
  %v3022 = vadd.f32 %v2829, %v3021
  %3023 = vmatprep.mubr.bf16.mxu0 %v771
  %3024 = vmatmul.mubr.bf16.gmra.mxu0 %v770
  %v3025 = vpop.f32.mrf.mxu0
  %v3026 = vadd.f32 %v2833, %v3025
  %v3027 = vpop.f32.mrf.mxu0
  %v3028 = vadd.f32 %v2835, %v3027
  %v3029 = vpop.f32.mrf.mxu0
  %v3030 = vadd.f32 %v2837, %v3029
  %v3031 = vpop.f32.mrf.mxu0
  %v3032 = vadd.f32 %v2839, %v3031
  %3033 = vmatprep.mubr.bf16.mxu0 %v778
  %3034 = vmatmul.mubr.bf16.gmra.mxu0 %v777
  %v3035 = vpop.f32.mrf.mxu0
  %v3036 = vadd.f32 %v2843, %v3035
  %v3037 = vpop.f32.mrf.mxu0
  %v3038 = vadd.f32 %v2845, %v3037
  %v3039 = vpop.f32.mrf.mxu0
  %v3040 = vadd.f32 %v2847, %v3039
  %v3041 = vpop.f32.mrf.mxu0
  %v3042 = vadd.f32 %v2849, %v3041
  %3043 = vmatprep.mubr.bf16.mxu0 %v785
  %3044 = vmatmul.mubr.bf16.gmra.mxu0 %v784
  %v3045 = vpop.f32.mrf.mxu0
  %v3046 = vadd.f32 %v2853, %v3045
  %v3047 = vpop.f32.mrf.mxu0
  %v3048 = vadd.f32 %v2855, %v3047
  %v3049 = vpop.f32.mrf.mxu0
  %v3050 = vadd.f32 %v2857, %v3049
  %v3051 = vpop.f32.mrf.mxu0
  %v3052 = vadd.f32 %v2859, %v3051
  %3053 = vmatprep.mubr.bf16.mxu0 %v792
  %3054 = vmatmul.mubr.bf16.gmra.mxu0 %v791
  %v3055 = vpop.f32.mrf.mxu0
  %v3056 = vadd.f32 %v2863, %v3055
  %v3057 = vpop.f32.mrf.mxu0
  %v3058 = vadd.f32 %v2865, %v3057
  %v3059 = vpop.f32.mrf.mxu0
  %v3060 = vadd.f32 %v2867, %v3059
  %v3061 = vpop.f32.mrf.mxu0
  %v3062 = vadd.f32 %v2869, %v3061
  %3063 = vmatprep.mubr.bf16.mxu0 %v799
  %3064 = vmatmul.mubr.bf16.gmra.mxu0 %v798
  %v3065 = vpop.f32.mrf.mxu0
  %v3066 = vadd.f32 %v2873, %v3065
  %v3067 = vpop.f32.mrf.mxu0
  %v3068 = vadd.f32 %v2875, %v3067
  %v3069 = vpop.f32.mrf.mxu0
  %v3070 = vadd.f32 %v2877, %v3069
  %v3071 = vpop.f32.mrf.mxu0
  %v3072 = vadd.f32 %v2879, %v3071
  %3073 = vmatprep.mubr.bf16.mxu0 %v806
  %3074 = vmatmul.mubr.bf16.gmra.mxu0 %v805
  %v3075 = vpop.f32.mrf.mxu0
  %v3076 = vadd.f32 %v2883, %v3075
  %v3077 = vpop.f32.mrf.mxu0
  %v3078 = vadd.f32 %v2885, %v3077
  %v3079 = vpop.f32.mrf.mxu0
  %v3080 = vadd.f32 %v2887, %v3079
  %v3081 = vpop.f32.mrf.mxu0
  %v3082 = vadd.f32 %v2889, %v3081
  %3083 = vmatprep.mubr.bf16.mxu0 %v813
  %3084 = vmatmul.mubr.bf16.gmra.mxu0 %v812
  %v3085 = vpop.f32.mrf.mxu0
  %v3086 = vadd.f32 %v2893, %v3085
  %v3087 = vpop.f32.mrf.mxu0
  %v3088 = vadd.f32 %v2895, %v3087
  %v3089 = vpop.f32.mrf.mxu0
  %v3090 = vadd.f32 %v2897, %v3089
  %v3091 = vpop.f32.mrf.mxu0
  %v3092 = vadd.f32 %v2899, %v3091
  %3093 = vmatprep.mubr.bf16.mxu0 %v820
  %3094 = vmatmul.mubr.bf16.gmra.mxu0 %v819
  %v3095 = vpop.f32.mrf.mxu0
  %v3096 = vadd.f32 %v2903, %v3095
  %v3097 = vpop.f32.mrf.mxu0
  %v3098 = vadd.f32 %v2905, %v3097
  %v3099 = vpop.f32.mrf.mxu0
  %v3100 = vadd.f32 %v2907, %v3099
  %v3101 = vpop.f32.mrf.mxu0
  %v3102 = vadd.f32 %v2909, %v3101
  %3103 = vmatprep.mubr.bf16.mxu0 %v827
  %3104 = vmatmul.mubr.bf16.gmra.mxu0 %v826
  %v3105 = vpop.f32.mrf.mxu0
  %v3106 = vadd.f32 %v2913, %v3105
  %v3107 = vpop.f32.mrf.mxu0
  %v3108 = vadd.f32 %v2915, %v3107
  %v3109 = vpop.f32.mrf.mxu0
  %v3110 = vadd.f32 %v2917, %v3109
  %v3111 = vpop.f32.mrf.mxu0
  %v3112 = vadd.f32 %v2919, %v3111
  %3113 = vdwg.mxu0
  %3114 = vmatprep.subr.bf16.mxu0 %v1674
  %3115 = vmatpush1.bf16.msra.mxu0 %v1673
  %3116 = vmatprep.subr.bf16.mxu0 %v1670
  %3117 = vmatpush1.bf16.msra.mxu0 %v1669
  %3118 = vmatprep.subr.bf16.mxu0 %v1666
  %3119 = vmatpush1.bf16.msra.mxu0 %v1665
  %3120 = vmatprep.subr.bf16.mxu0 %v1662
  %3121 = vmatpush1.bf16.msra.mxu0 %v1661
  %3122 = vmatprep.subr.bf16.mxu0 %v1658
  %3123 = vmatpush1.bf16.msra.mxu0 %v1657
  %3124 = vmatprep.subr.bf16.mxu0 %v1654
  %3125 = vmatpush1.bf16.msra.mxu0 %v1653
  %3126 = vmatprep.subr.bf16.mxu0 %v1650
  %3127 = vmatpush1.bf16.msra.mxu0 %v1649
  %3128 = vmatprep.subr.bf16.mxu0 %v1646
  %3129 = vmatpush1.bf16.msra.mxu0 %v1645
  %3130 = vmatprep.subr.bf16.mxu0 %v1706
  %3131 = vmatpush2.bf16.msra.mxu0 %v1705
  %3132 = vmatprep.subr.bf16.mxu0 %v1702
  %3133 = vmatpush2.bf16.msra.mxu0 %v1701
  %3134 = vmatprep.subr.bf16.mxu0 %v1698
  %3135 = vmatpush2.bf16.msra.mxu0 %v1697
  %3136 = vmatprep.subr.bf16.mxu0 %v1694
  %3137 = vmatpush2.bf16.msra.mxu0 %v1693
  %3138 = vmatprep.subr.bf16.mxu0 %v1690
  %3139 = vmatpush2.bf16.msra.mxu0 %v1689
  %3140 = vmatprep.subr.bf16.mxu0 %v1686
  %3141 = vmatpush2.bf16.msra.mxu0 %v1685
  %3142 = vmatprep.subr.bf16.mxu0 %v1682
  %3143 = vmatpush2.bf16.msra.mxu0 %v1681
  %3144 = vmatprep.subr.bf16.mxu0 %v1678
  %3145 = vmatpush2.bf16.msra.mxu0 %v1677
  %3146 = vmatprep.mubr.bf16.mxu0 %v724
  %3147 = vmatmul.mubr.bf16.gmra.mxu0 %v723
  %v3148 = vpop.f32.mrf.mxu0
  %v3149 = vadd.f32 %v2956, %v3148
  %v3150 = vpop.f32.mrf.mxu0
  %v3151 = vadd.f32 %v2958, %v3150
  %v3152 = vpop.f32.mrf.mxu0
  %v3153 = vadd.f32 %v2960, %v3152
  %v3154 = vpop.f32.mrf.mxu0
  %v3155 = vadd.f32 %v2962, %v3154
  %3156 = vmatprep.mubr.bf16.mxu0 %v731
  %3157 = vmatmul.mubr.bf16.gmra.mxu0 %v730
  %v3158 = vpop.f32.mrf.mxu0
  %v3159 = vadd.f32 %v2966, %v3158
  %v3160 = vpop.f32.mrf.mxu0
  %v3161 = vadd.f32 %v2968, %v3160
  %v3162 = vpop.f32.mrf.mxu0
  %v3163 = vadd.f32 %v2970, %v3162
  %v3164 = vpop.f32.mrf.mxu0
  %v3165 = vadd.f32 %v2972, %v3164
  %3166 = vmatprep.mubr.bf16.mxu0 %v738
  %3167 = vmatmul.mubr.bf16.gmra.mxu0 %v737
  %v3168 = vpop.f32.mrf.mxu0
  %v3169 = vadd.f32 %v2976, %v3168
  %v3170 = vpop.f32.mrf.mxu0
  %v3171 = vadd.f32 %v2978, %v3170
  %v3172 = vpop.f32.mrf.mxu0
  %v3173 = vadd.f32 %v2980, %v3172
  %v3174 = vpop.f32.mrf.mxu0
  %v3175 = vadd.f32 %v2982, %v3174
  %3176 = vmatprep.mubr.bf16.mxu0 %v745
  %3177 = vmatmul.mubr.bf16.gmra.mxu0 %v744
  %v3178 = vpop.f32.mrf.mxu0
  %v3179 = vadd.f32 %v2986, %v3178
  %v3180 = vpop.f32.mrf.mxu0
  %v3181 = vadd.f32 %v2988, %v3180
  %v3182 = vpop.f32.mrf.mxu0
  %v3183 = vadd.f32 %v2990, %v3182
  %v3184 = vpop.f32.mrf.mxu0
  %v3185 = vadd.f32 %v2992, %v3184
  %3186 = vmatprep.mubr.bf16.mxu0 %v752
  %3187 = vmatmul.mubr.bf16.gmra.mxu0 %v751
  %v3188 = vpop.f32.mrf.mxu0
  %v3189 = vadd.f32 %v2996, %v3188
  %v3190 = vpop.f32.mrf.mxu0
  %v3191 = vadd.f32 %v2998, %v3190
  %v3192 = vpop.f32.mrf.mxu0
  %v3193 = vadd.f32 %v3000, %v3192
  %v3194 = vpop.f32.mrf.mxu0
  %v3195 = vadd.f32 %v3002, %v3194
  %3196 = vmatprep.mubr.bf16.mxu0 %v759
  %3197 = vmatmul.mubr.bf16.gmra.mxu0 %v758
  %v3198 = vpop.f32.mrf.mxu0
  %v3199 = vadd.f32 %v3006, %v3198
  %v3200 = vpop.f32.mrf.mxu0
  %v3201 = vadd.f32 %v3008, %v3200
  %v3202 = vpop.f32.mrf.mxu0
  %v3203 = vadd.f32 %v3010, %v3202
  %v3204 = vpop.f32.mrf.mxu0
  %v3205 = vadd.f32 %v3012, %v3204
  %3206 = vmatprep.mubr.bf16.mxu0 %v766
  %3207 = vmatmul.mubr.bf16.gmra.mxu0 %v765
  %v3208 = vpop.f32.mrf.mxu0
  %v3209 = vadd.f32 %v3016, %v3208
  %v3210 = vpop.f32.mrf.mxu0
  %v3211 = vadd.f32 %v3018, %v3210
  %v3212 = vpop.f32.mrf.mxu0
  %v3213 = vadd.f32 %v3020, %v3212
  %v3214 = vpop.f32.mrf.mxu0
  %v3215 = vadd.f32 %v3022, %v3214
  %3216 = vmatprep.mubr.bf16.mxu0 %v773
  %3217 = vmatmul.mubr.bf16.gmra.mxu0 %v772
  %v3218 = vpop.f32.mrf.mxu0
  %v3219 = vadd.f32 %v3026, %v3218
  %v3220 = vpop.f32.mrf.mxu0
  %v3221 = vadd.f32 %v3028, %v3220
  %v3222 = vpop.f32.mrf.mxu0
  %v3223 = vadd.f32 %v3030, %v3222
  %v3224 = vpop.f32.mrf.mxu0
  %v3225 = vadd.f32 %v3032, %v3224
  %3226 = vmatprep.mubr.bf16.mxu0 %v780
  %3227 = vmatmul.mubr.bf16.gmra.mxu0 %v779
  %v3228 = vpop.f32.mrf.mxu0
  %v3229 = vadd.f32 %v3036, %v3228
  %v3230 = vpop.f32.mrf.mxu0
  %v3231 = vadd.f32 %v3038, %v3230
  %v3232 = vpop.f32.mrf.mxu0
  %v3233 = vadd.f32 %v3040, %v3232
  %v3234 = vpop.f32.mrf.mxu0
  %v3235 = vadd.f32 %v3042, %v3234
  %3236 = vmatprep.mubr.bf16.mxu0 %v787
  %3237 = vmatmul.mubr.bf16.gmra.mxu0 %v786
  %v3238 = vpop.f32.mrf.mxu0
  %v3239 = vadd.f32 %v3046, %v3238
  %v3240 = vpop.f32.mrf.mxu0
  %v3241 = vadd.f32 %v3048, %v3240
  %v3242 = vpop.f32.mrf.mxu0
  %v3243 = vadd.f32 %v3050, %v3242
  %v3244 = vpop.f32.mrf.mxu0
  %v3245 = vadd.f32 %v3052, %v3244
  %3246 = vmatprep.mubr.bf16.mxu0 %v794
  %3247 = vmatmul.mubr.bf16.gmra.mxu0 %v793
  %v3248 = vpop.f32.mrf.mxu0
  %v3249 = vadd.f32 %v3056, %v3248
  %v3250 = vpop.f32.mrf.mxu0
  %v3251 = vadd.f32 %v3058, %v3250
  %v3252 = vpop.f32.mrf.mxu0
  %v3253 = vadd.f32 %v3060, %v3252
  %v3254 = vpop.f32.mrf.mxu0
  %v3255 = vadd.f32 %v3062, %v3254
  %3256 = vmatprep.mubr.bf16.mxu0 %v801
  %3257 = vmatmul.mubr.bf16.gmra.mxu0 %v800
  %v3258 = vpop.f32.mrf.mxu0
  %v3259 = vadd.f32 %v3066, %v3258
  %v3260 = vpop.f32.mrf.mxu0
  %v3261 = vadd.f32 %v3068, %v3260
  %v3262 = vpop.f32.mrf.mxu0
  %v3263 = vadd.f32 %v3070, %v3262
  %v3264 = vpop.f32.mrf.mxu0
  %v3265 = vadd.f32 %v3072, %v3264
  %3266 = vmatprep.mubr.bf16.mxu0 %v808
  %3267 = vmatmul.mubr.bf16.gmra.mxu0 %v807
  %v3268 = vpop.f32.mrf.mxu0
  %v3269 = vadd.f32 %v3076, %v3268
  %v3270 = vpop.f32.mrf.mxu0
  %v3271 = vadd.f32 %v3078, %v3270
  %v3272 = vpop.f32.mrf.mxu0
  %v3273 = vadd.f32 %v3080, %v3272
  %v3274 = vpop.f32.mrf.mxu0
  %v3275 = vadd.f32 %v3082, %v3274
  %3276 = vmatprep.mubr.bf16.mxu0 %v815
  %3277 = vmatmul.mubr.bf16.gmra.mxu0 %v814
  %v3278 = vpop.f32.mrf.mxu0
  %v3279 = vadd.f32 %v3086, %v3278
  %v3280 = vpop.f32.mrf.mxu0
  %v3281 = vadd.f32 %v3088, %v3280
  %v3282 = vpop.f32.mrf.mxu0
  %v3283 = vadd.f32 %v3090, %v3282
  %v3284 = vpop.f32.mrf.mxu0
  %v3285 = vadd.f32 %v3092, %v3284
  %3286 = vmatprep.mubr.bf16.mxu0 %v822
  %3287 = vmatmul.mubr.bf16.gmra.mxu0 %v821
  %v3288 = vpop.f32.mrf.mxu0
  %v3289 = vadd.f32 %v3096, %v3288
  %v3290 = vpop.f32.mrf.mxu0
  %v3291 = vadd.f32 %v3098, %v3290
  %v3292 = vpop.f32.mrf.mxu0
  %v3293 = vadd.f32 %v3100, %v3292
  %v3294 = vpop.f32.mrf.mxu0
  %v3295 = vadd.f32 %v3102, %v3294
  %3296 = vmatprep.mubr.bf16.mxu0 %v829
  %3297 = vmatmul.mubr.bf16.gmra.mxu0 %v828
  %v3298 = vpop.f32.mrf.mxu0
  %v3299 = vadd.f32 %v3106, %v3298
  %v3300 = vpop.f32.mrf.mxu0
  %v3301 = vadd.f32 %v3108, %v3300
  %v3302 = vpop.f32.mrf.mxu0
  %v3303 = vadd.f32 %v3110, %v3302
  %v3304 = vpop.f32.mrf.mxu0
  %v3305 = vadd.f32 %v3112, %v3304
  %3306 = vdwg.mxu0
  %3307 = vmatprep.subr.bf16.mxu0 0
  %3308 = vmatpush1.bf16.msra.mxu0 0
  %3309 = vmatprep.subr.bf16.mxu0 0
  %3310 = vmatpush1.bf16.msra.mxu0 0
  %3311 = vmatprep.subr.bf16.mxu0 0
  %3312 = vmatpush1.bf16.msra.mxu0 0
  %3313 = vmatprep.subr.bf16.mxu0 0
  %3314 = vmatpush1.bf16.msra.mxu0 0
  %3315 = vmatprep.subr.bf16.mxu0 0
  %3316 = vmatpush1.bf16.msra.mxu0 0
  %3317 = vmatprep.subr.bf16.mxu0 0
  %3318 = vmatpush1.bf16.msra.mxu0 0
  %3319 = vmatprep.subr.bf16.mxu0 0
  %3320 = vmatpush1.bf16.msra.mxu0 0
  %3321 = vmatprep.subr.bf16.mxu0 %v1710
  %3322 = vmatpush1.bf16.msra.mxu0 %v1709
  %3323 = vmatprep.subr.bf16.mxu0 0
  %3324 = vmatpush2.bf16.msra.mxu0 0
  %3325 = vmatprep.subr.bf16.mxu0 0
  %3326 = vmatpush2.bf16.msra.mxu0 0
  %3327 = vmatprep.subr.bf16.mxu0 0
  %3328 = vmatpush2.bf16.msra.mxu0 0
  %3329 = vmatprep.subr.bf16.mxu0 0
  %3330 = vmatpush2.bf16.msra.mxu0 0
  %3331 = vmatprep.subr.bf16.mxu0 0
  %3332 = vmatpush2.bf16.msra.mxu0 0
  %3333 = vmatprep.subr.bf16.mxu0 0
  %3334 = vmatpush2.bf16.msra.mxu0 0
  %3335 = vmatprep.subr.bf16.mxu0 0
  %3336 = vmatpush2.bf16.msra.mxu0 0
  %3337 = vmatprep.subr.bf16.mxu0 0
  %3338 = vmatpush2.bf16.msra.mxu0 0
  %3339 = vmatprep.mubr.bf16.mxu0 0
  %3340 = vmatmul.mubr.bf16.gmra.mxu0 %v1909
  %v3341 = vpop.f32.mrf.mxu0
  %v3342 = vadd.f32 %v3149, %v3341
  %v3343 = vpop.f32.mrf.mxu0
  %v3344 = vadd.f32 %v3151, %v3343
  %v3345 = vpop.f32.mrf.mxu0
  %v3346 = vadd.f32 %v3153, %v3345
  %v3347 = vpop.f32.mrf.mxu0
  %v3348 = vadd.f32 %v3155, %v3347
  %3349 = vmatprep.mubr.bf16.mxu0 0
  %3350 = vmatmul.mubr.bf16.gmra.mxu0 %v1912
  %v3351 = vpop.f32.mrf.mxu0
  %v3352 = vadd.f32 %v3159, %v3351
  %v3353 = vpop.f32.mrf.mxu0
  %v3354 = vadd.f32 %v3161, %v3353
  %v3355 = vpop.f32.mrf.mxu0
  %v3356 = vadd.f32 %v3163, %v3355
  %v3357 = vpop.f32.mrf.mxu0
  %v3358 = vadd.f32 %v3165, %v3357
  %3359 = vmatprep.mubr.bf16.mxu0 0
  %3360 = vmatmul.mubr.bf16.gmra.mxu0 %v1915
  %v3361 = vpop.f32.mrf.mxu0
  %v3362 = vadd.f32 %v3169, %v3361
  %v3363 = vpop.f32.mrf.mxu0
  %v3364 = vadd.f32 %v3171, %v3363
  %v3365 = vpop.f32.mrf.mxu0
  %v3366 = vadd.f32 %v3173, %v3365
  %v3367 = vpop.f32.mrf.mxu0
  %v3368 = vadd.f32 %v3175, %v3367
  %3369 = vmatprep.mubr.bf16.mxu0 0
  %3370 = vmatmul.mubr.bf16.gmra.mxu0 %v1918
  %v3371 = vpop.f32.mrf.mxu0
  %v3372 = vadd.f32 %v3179, %v3371
  %v3373 = vpop.f32.mrf.mxu0
  %v3374 = vadd.f32 %v3181, %v3373
  %v3375 = vpop.f32.mrf.mxu0
  %v3376 = vadd.f32 %v3183, %v3375
  %v3377 = vpop.f32.mrf.mxu0
  %v3378 = vadd.f32 %v3185, %v3377
  %3379 = vmatprep.mubr.bf16.mxu0 0
  %3380 = vmatmul.mubr.bf16.gmra.mxu0 %v1921
  %v3381 = vpop.f32.mrf.mxu0
  %v3382 = vadd.f32 %v3189, %v3381
  %v3383 = vpop.f32.mrf.mxu0
  %v3384 = vadd.f32 %v3191, %v3383
  %v3385 = vpop.f32.mrf.mxu0
  %v3386 = vadd.f32 %v3193, %v3385
  %v3387 = vpop.f32.mrf.mxu0
  %v3388 = vadd.f32 %v3195, %v3387
  %3389 = vmatprep.mubr.bf16.mxu0 0
  %3390 = vmatmul.mubr.bf16.gmra.mxu0 %v1924
  %v3391 = vpop.f32.mrf.mxu0
  %v3392 = vadd.f32 %v3199, %v3391
  %v3393 = vpop.f32.mrf.mxu0
  %v3394 = vadd.f32 %v3201, %v3393
  %v3395 = vpop.f32.mrf.mxu0
  %v3396 = vadd.f32 %v3203, %v3395
  %v3397 = vpop.f32.mrf.mxu0
  %v3398 = vadd.f32 %v3205, %v3397
  %3399 = vmatprep.mubr.bf16.mxu0 0
  %3400 = vmatmul.mubr.bf16.gmra.mxu0 %v1927
  %v3401 = vpop.f32.mrf.mxu0
  %v3402 = vadd.f32 %v3209, %v3401
  %v3403 = vpop.f32.mrf.mxu0
  %v3404 = vadd.f32 %v3211, %v3403
  %v3405 = vpop.f32.mrf.mxu0
  %v3406 = vadd.f32 %v3213, %v3405
  %v3407 = vpop.f32.mrf.mxu0
  %v3408 = vadd.f32 %v3215, %v3407
  %3409 = vmatprep.mubr.bf16.mxu0 0
  %3410 = vmatmul.mubr.bf16.gmra.mxu0 %v1930
  %v3411 = vpop.f32.mrf.mxu0
  %v3412 = vadd.f32 %v3219, %v3411
  %v3413 = vpop.f32.mrf.mxu0
  %v3414 = vadd.f32 %v3221, %v3413
  %v3415 = vpop.f32.mrf.mxu0
  %v3416 = vadd.f32 %v3223, %v3415
  %v3417 = vpop.f32.mrf.mxu0
  %v3418 = vadd.f32 %v3225, %v3417
  %3419 = vmatprep.mubr.bf16.mxu0 0
  %3420 = vmatmul.mubr.bf16.gmra.mxu0 %v1933
  %v3421 = vpop.f32.mrf.mxu0
  %v3422 = vadd.f32 %v3229, %v3421
  %v3423 = vpop.f32.mrf.mxu0
  %v3424 = vadd.f32 %v3231, %v3423
  %v3425 = vpop.f32.mrf.mxu0
  %v3426 = vadd.f32 %v3233, %v3425
  %v3427 = vpop.f32.mrf.mxu0
  %v3428 = vadd.f32 %v3235, %v3427
  %3429 = vmatprep.mubr.bf16.mxu0 0
  %3430 = vmatmul.mubr.bf16.gmra.mxu0 %v1936
  %v3431 = vpop.f32.mrf.mxu0
  %v3432 = vadd.f32 %v3239, %v3431
  %v3433 = vpop.f32.mrf.mxu0
  %v3434 = vadd.f32 %v3241, %v3433
  %v3435 = vpop.f32.mrf.mxu0
  %v3436 = vadd.f32 %v3243, %v3435
  %v3437 = vpop.f32.mrf.mxu0
  %v3438 = vadd.f32 %v3245, %v3437
  %3439 = vmatprep.mubr.bf16.mxu0 0
  %3440 = vmatmul.mubr.bf16.gmra.mxu0 %v1939
  %v3441 = vpop.f32.mrf.mxu0
  %v3442 = vadd.f32 %v3249, %v3441
  %v3443 = vpop.f32.mrf.mxu0
  %v3444 = vadd.f32 %v3251, %v3443
  %v3445 = vpop.f32.mrf.mxu0
  %v3446 = vadd.f32 %v3253, %v3445
  %v3447 = vpop.f32.mrf.mxu0
  %v3448 = vadd.f32 %v3255, %v3447
  %3449 = vmatprep.mubr.bf16.mxu0 0
  %3450 = vmatmul.mubr.bf16.gmra.mxu0 %v1942
  %v3451 = vpop.f32.mrf.mxu0
  %v3452 = vadd.f32 %v3259, %v3451
  %v3453 = vpop.f32.mrf.mxu0
  %v3454 = vadd.f32 %v3261, %v3453
  %v3455 = vpop.f32.mrf.mxu0
  %v3456 = vadd.f32 %v3263, %v3455
  %v3457 = vpop.f32.mrf.mxu0
  %v3458 = vadd.f32 %v3265, %v3457
  %3459 = vmatprep.mubr.bf16.mxu0 0
  %3460 = vmatmul.mubr.bf16.gmra.mxu0 %v1945
  %v3461 = vpop.f32.mrf.mxu0
  %v3462 = vadd.f32 %v3269, %v3461
  %v3463 = vpop.f32.mrf.mxu0
  %v3464 = vadd.f32 %v3271, %v3463
  %v3465 = vpop.f32.mrf.mxu0
  %v3466 = vadd.f32 %v3273, %v3465
  %v3467 = vpop.f32.mrf.mxu0
  %v3468 = vadd.f32 %v3275, %v3467
  %3469 = vmatprep.mubr.bf16.mxu0 0
  %3470 = vmatmul.mubr.bf16.gmra.mxu0 %v1948
  %v3471 = vpop.f32.mrf.mxu0
  %v3472 = vadd.f32 %v3279, %v3471
  %v3473 = vpop.f32.mrf.mxu0
  %v3474 = vadd.f32 %v3281, %v3473
  %v3475 = vpop.f32.mrf.mxu0
  %v3476 = vadd.f32 %v3283, %v3475
  %v3477 = vpop.f32.mrf.mxu0
  %v3478 = vadd.f32 %v3285, %v3477
  %3479 = vmatprep.mubr.bf16.mxu0 0
  %3480 = vmatmul.mubr.bf16.gmra.mxu0 %v1951
  %v3481 = vpop.f32.mrf.mxu0
  %v3482 = vadd.f32 %v3289, %v3481
  %v3483 = vpop.f32.mrf.mxu0
  %v3484 = vadd.f32 %v3291, %v3483
  %v3485 = vpop.f32.mrf.mxu0
  %v3486 = vadd.f32 %v3293, %v3485
  %v3487 = vpop.f32.mrf.mxu0
  %v3488 = vadd.f32 %v3295, %v3487
  %3489 = vmatprep.mubr.bf16.mxu0 0
  %3490 = vmatmul.mubr.bf16.gmra.mxu0 %v1954
  %v3491 = vpop.f32.mrf.mxu0
  %v3492 = vadd.f32 %v3299, %v3491
  %v3493 = vpop.f32.mrf.mxu0
  %v3494 = vadd.f32 %v3301, %v3493
  %v3495 = vpop.f32.mrf.mxu0
  %v3496 = vadd.f32 %v3303, %v3495
  %v3497 = vpop.f32.mrf.mxu0
  %v3498 = vadd.f32 %v3305, %v3497
  %3499 = vdwg.mxu0
  %v3500 = vmax.f32 %v2570, 0.0
  %v3501 = vmax.f32 %v2572, 0.0
  %v3502 = vmax.f32 %v3342, 0.0
  %v3503 = vmax.f32 %v3344, 0.0
  %v3504 = vmax.f32 %v2574, 0.0
  %v3505 = vmax.f32 %v2576, 0.0
  %v3506 = vmax.f32 %v3346, 0.0
  %v3507 = vmax.f32 %v3348, 0.0
  %v3508 = vmax.f32 %v2580, 0.0
  %v3509 = vmax.f32 %v2582, 0.0
  %v3510 = vmax.f32 %v3352, 0.0
  %v3511 = vmax.f32 %v3354, 0.0
  %v3512 = vmax.f32 %v2584, 0.0
  %v3513 = vmax.f32 %v2586, 0.0
  %v3514 = vmax.f32 %v3356, 0.0
  %v3515 = vmax.f32 %v3358, 0.0
  %v3516 = vmax.f32 %v2590, 0.0
  %v3517 = vmax.f32 %v2592, 0.0
  %v3518 = vmax.f32 %v3362, 0.0
  %v3519 = vmax.f32 %v3364, 0.0
  %v3520 = vmax.f32 %v2594, 0.0
  %v3521 = vmax.f32 %v2596, 0.0
  %v3522 = vmax.f32 %v3366, 0.0
  %v3523 = vmax.f32 %v3368, 0.0
  %v3524 = vmax.f32 %v2600, 0.0
  %v3525 = vmax.f32 %v2602, 0.0
  %v3526 = vmax.f32 %v3372, 0.0
  %v3527 = vmax.f32 %v3374, 0.0
  %v3528 = vmax.f32 %v2604, 0.0
  %v3529 = vmax.f32 %v2606, 0.0
  %v3530 = vmax.f32 %v3376, 0.0
  %v3531 = vmax.f32 %v3378, 0.0
  %v3532 = vmax.f32 %v2610, 0.0
  %v3533 = vmax.f32 %v2612, 0.0
  %v3534 = vmax.f32 %v3382, 0.0
  %v3535 = vmax.f32 %v3384, 0.0
  %v3536 = vmax.f32 %v2614, 0.0
  %v3537 = vmax.f32 %v2616, 0.0
  %v3538 = vmax.f32 %v3386, 0.0
  %v3539 = vmax.f32 %v3388, 0.0
  %v3540 = vmax.f32 %v2620, 0.0
  %v3541 = vmax.f32 %v2622, 0.0
  %v3542 = vmax.f32 %v3392, 0.0
  %v3543 = vmax.f32 %v3394, 0.0
  %v3544 = vmax.f32 %v2624, 0.0
  %v3545 = vmax.f32 %v2626, 0.0
  %v3546 = vmax.f32 %v3396, 0.0
  %v3547 = vmax.f32 %v3398, 0.0
  %v3548 = vmax.f32 %v2630, 0.0
  %v3549 = vmax.f32 %v2632, 0.0
  %v3550 = vmax.f32 %v3402, 0.0
  %v3551 = vmax.f32 %v3404, 0.0
  %v3552 = vmax.f32 %v2634, 0.0
  %v3553 = vmax.f32 %v2636, 0.0
  %v3554 = vmax.f32 %v3406, 0.0
  %v3555 = vmax.f32 %v3408, 0.0
  %v3556 = vmax.f32 %v2640, 0.0
  %v3557 = vmax.f32 %v2642, 0.0
  %v3558 = vmax.f32 %v3412, 0.0
  %v3559 = vmax.f32 %v3414, 0.0
  %v3560 = vmax.f32 %v2644, 0.0
  %v3561 = vmax.f32 %v2646, 0.0
  %v3562 = vmax.f32 %v3416, 0.0
  %v3563 = vmax.f32 %v3418, 0.0
  %v3564 = vmax.f32 %v2650, 0.0
  %v3565 = vmax.f32 %v2652, 0.0
  %v3566 = vmax.f32 %v3422, 0.0
  %v3567 = vmax.f32 %v3424, 0.0
  %v3568 = vmax.f32 %v2654, 0.0
  %v3569 = vmax.f32 %v2656, 0.0
  %v3570 = vmax.f32 %v3426, 0.0
  %v3571 = vmax.f32 %v3428, 0.0
  %v3572 = vmax.f32 %v2660, 0.0
  %v3573 = vmax.f32 %v2662, 0.0
  %v3574 = vmax.f32 %v3432, 0.0
  %v3575 = vmax.f32 %v3434, 0.0
  %v3576 = vmax.f32 %v2664, 0.0
  %v3577 = vmax.f32 %v2666, 0.0
  %v3578 = vmax.f32 %v3436, 0.0
  %v3579 = vmax.f32 %v3438, 0.0
  %v3580 = vmax.f32 %v2670, 0.0
  %v3581 = vmax.f32 %v2672, 0.0
  %v3582 = vmax.f32 %v3442, 0.0
  %v3583 = vmax.f32 %v3444, 0.0
  %v3584 = vmax.f32 %v2674, 0.0
  %v3585 = vmax.f32 %v2676, 0.0
  %v3586 = vmax.f32 %v3446, 0.0
  %v3587 = vmax.f32 %v3448, 0.0
  %v3588 = vmax.f32 %v2680, 0.0
  %v3589 = vmax.f32 %v2682, 0.0
  %v3590 = vmax.f32 %v3452, 0.0
  %v3591 = vmax.f32 %v3454, 0.0
  %v3592 = vmax.f32 %v2684, 0.0
  %v3593 = vmax.f32 %v2686, 0.0
  %v3594 = vmax.f32 %v3456, 0.0
  %v3595 = vmax.f32 %v3458, 0.0
  %v3596 = vmax.f32 %v2690, 0.0
  %v3597 = vmax.f32 %v2692, 0.0
  %v3598 = vmax.f32 %v3462, 0.0
  %v3599 = vmax.f32 %v3464, 0.0
  %v3600 = vmax.f32 %v2694, 0.0
  %v3601 = vmax.f32 %v2696, 0.0
  %v3602 = vmax.f32 %v3466, 0.0
  %v3603 = vmax.f32 %v3468, 0.0
  %v3604 = vmax.f32 %v2700, 0.0
  %v3605 = vmax.f32 %v2702, 0.0
  %v3606 = vmax.f32 %v3472, 0.0
  %v3607 = vmax.f32 %v3474, 0.0
  %v3608 = vmax.f32 %v2704, 0.0
  %v3609 = vmax.f32 %v2706, 0.0
  %v3610 = vmax.f32 %v3476, 0.0
  %v3611 = vmax.f32 %v3478, 0.0
  %v3612 = vmax.f32 %v2710, 0.0
  %v3613 = vmax.f32 %v2712, 0.0
  %v3614 = vmax.f32 %v3482, 0.0
  %v3615 = vmax.f32 %v3484, 0.0
  %v3616 = vmax.f32 %v2714, 0.0
  %v3617 = vmax.f32 %v2716, 0.0
  %v3618 = vmax.f32 %v3486, 0.0
  %v3619 = vmax.f32 %v3488, 0.0
  %v3620 = vmax.f32 %v2720, 0.0
  %v3621 = vmax.f32 %v2722, 0.0
  %v3622 = vmax.f32 %v3492, 0.0
  %v3623 = vmax.f32 %v3494, 0.0
  %v3624 = vmax.f32 %v2724, 0.0
  %v3625 = vmax.f32 %v2726, 0.0
  %v3626 = vmax.f32 %v3496, 0.0
  %v3627 = vmax.f32 %v3498, 0.0
  %v3628 = vld [vmem:[%s3] sm:$0xff]
  %v3629 = vld [vmem:[%s3 + $0x8] sm:$0xff]
  %v3630 = vld [vmem:[%s3 + $0x10] sm:$0xff]
  %v3631 = vld [vmem:[%s3 + $0x18] sm:$0xff]
  %v3632 = vld [vmem:[%s3 + $0x20] sm:$0xff]
  %v3633 = vld [vmem:[%s3 + $0x28] sm:$0xff]
  %v3634 = vld [vmem:[%s3 + $0x30] sm:$0xff]
  %v3635 = vld [vmem:[%s3 + $0x38] sm:$0xff]
  %v3636 = vld [vmem:[%s3 + $0x40] sm:$0xff]
  %v3637 = vld [vmem:[%s3 + $0x48] sm:$0xff]
  %v3638 = vld [vmem:[%s3 + $0x50] sm:$0xff]
  %v3639 = vld [vmem:[%s3 + $0x58] sm:$0xff]
  %v3640 = vld [vmem:[%s3 + $0x60] sm:$0xff]
  %v3641 = vld [vmem:[%s3 + $0x68] sm:$0xff]
  %v3642 = vld [vmem:[%s3 + $0x70] sm:$0xff]
  %v3643 = vld [vmem:[%s3 + $0x78] sm:$0xff]
  %v3644 = vld [vmem:[%s3 + $0x80] sm:$0xff]
  %v3645 = vld [vmem:[%s3 + $0x88] sm:$0xff]
  %v3646 = vld [vmem:[%s3 + $0x90] sm:$0xff]
  %v3647 = vld [vmem:[%s3 + $0x98] sm:$0xff]
  %v3648 = vld [vmem:[%s3 + $0xa0] sm:$0xff]
  %v3649 = vld [vmem:[%s3 + $0xa8] sm:$0xff]
  %v3650 = vld [vmem:[%s3 + $0xb0] sm:$0xff]
  %v3651 = vld [vmem:[%s3 + $0xb8] sm:$0xff]
  %v3652 = vld [vmem:[%s3 + $0xc0] sm:$0xff]
  %v3653 = vld [vmem:[%s3 + $0xc8] sm:$0xff]
  %v3654 = vld [vmem:[%s3 + $0xd0] sm:$0xff]
  %v3655 = vld [vmem:[%s3 + $0xd8] sm:$0xff]
  %v3656 = vld [vmem:[%s3 + $0xe0] sm:$0xff]
  %v3657 = vld [vmem:[%s3 + $0xe8] sm:$0xff]
  %v3658 = vld [vmem:[%s3 + $0xf0] sm:$0xff]
  %v3659 = vld [vmem:[%s3 + $0xf8] sm:$0xff]
  %v3660 = vld [vmem:[%s3 + $0x100] sm:$0xff]
  %v3661 = vld [vmem:[%s3 + $0x108] sm:$0xff]
  %v3662 = vld [vmem:[%s3 + $0x110] sm:$0xff]
  %v3663 = vld [vmem:[%s3 + $0x118] sm:$0xff]
  %v3664 = vld [vmem:[%s3 + $0x120] sm:$0xff]
  %v3665 = vld [vmem:[%s3 + $0x128] sm:$0xff]
  %v3666 = vld [vmem:[%s3 + $0x130] sm:$0xff]
  %v3667 = vld [vmem:[%s3 + $0x138] sm:$0xff]
  %v3668 = vld [vmem:[%s3 + $0x140] sm:$0xff]
  %v3669 = vld [vmem:[%s3 + $0x148] sm:$0xff]
  %v3670 = vld [vmem:[%s3 + $0x150] sm:$0xff]
  %v3671 = vld [vmem:[%s3 + $0x158] sm:$0xff]
  %v3672 = vld [vmem:[%s3 + $0x160] sm:$0xff]
  %v3673 = vld [vmem:[%s3 + $0x168] sm:$0xff]
  %v3674 = vld [vmem:[%s3 + $0x170] sm:$0xff]
  %v3675 = vld [vmem:[%s3 + $0x178] sm:$0xff]
  %v3676 = vld [vmem:[%s3 + $0x180] sm:$0xff]
  %v3677 = vld [vmem:[%s3 + $0x188] sm:$0xff]
  %v3678 = vld [vmem:[%s4] sm:$0x1]
  %v3680 = vlaneseq
  %v3681 = vshrl.u32 %v3680, 7
  %v3682 = vsub.s32 0, %v3681
  %v3683 = vrot.slane %v3678, %v3682
  %v3686 = vsel %vm1907, %v3503, 0
  %v3689 = vsel %vm1907, %v3507, 0
  %v3692 = vsel %vm1907, %v3511, 0
  %v3695 = vsel %vm1907, %v3515, 0
  %v3698 = vsel %vm1907, %v3519, 0
  %v3701 = vsel %vm1907, %v3523, 0
  %v3704 = vsel %vm1907, %v3527, 0
  %v3707 = vsel %vm1907, %v3531, 0
  %v3710 = vsel %vm1907, %v3535, 0
  %v3713 = vsel %vm1907, %v3539, 0
  %v3716 = vsel %vm1907, %v3543, 0
  %v3719 = vsel %vm1907, %v3547, 0
  %v3722 = vsel %vm1907, %v3551, 0
  %v3725 = vsel %vm1907, %v3555, 0
  %v3728 = vsel %vm1907, %v3559, 0
  %v3731 = vsel %vm1907, %v3563, 0
  %v3734 = vsel %vm1907, %v3567, 0
  %v3737 = vsel %vm1907, %v3571, 0
  %v3740 = vsel %vm1907, %v3575, 0
  %v3743 = vsel %vm1907, %v3579, 0
  %v3746 = vsel %vm1907, %v3583, 0
  %v3749 = vsel %vm1907, %v3587, 0
  %v3752 = vsel %vm1907, %v3591, 0
  %v3755 = vsel %vm1907, %v3595, 0
  %v3758 = vsel %vm1907, %v3599, 0
  %v3761 = vsel %vm1907, %v3603, 0
  %v3764 = vsel %vm1907, %v3607, 0
  %v3767 = vsel %vm1907, %v3611, 0
  %v3770 = vsel %vm1907, %v3615, 0
  %v3773 = vsel %vm1907, %v3619, 0
  %v3776 = vsel %vm1907, %v3623, 0
  %v3779 = vsel %vm1907, %v3627, 0
  %3781 = vmatprep.subr.mxu0 0.0
  %3782 = vmatpush1.msra.mxu0 %v3643
  %3783 = vmatprep.subr.mxu0 0.0
  %3784 = vmatpush1.msra.mxu0 %v3642
  %3785 = vmatprep.subr.mxu0 0.0
  %3786 = vmatpush1.msra.mxu0 %v3641
  %3787 = vmatprep.subr.mxu0 0.0
  %3788 = vmatpush1.msra.mxu0 %v3640
  %3789 = vmatprep.subr.mxu0 0.0
  %3790 = vmatpush1.msra.mxu0 %v3639
  %3791 = vmatprep.subr.mxu0 0.0
  %3792 = vmatpush1.msra.mxu0 %v3638
  %3793 = vmatprep.subr.mxu0 0.0
  %3794 = vmatpush1.msra.mxu0 %v3637
  %3795 = vmatprep.subr.mxu0 0.0
  %3796 = vmatpush1.msra.mxu0 %v3636
  %3797 = vmatprep.subr.mxu0 0.0
  %3798 = vmatpush1.msra.mxu0 %v3635
  %3799 = vmatprep.subr.mxu0 0.0
  %3800 = vmatpush1.msra.mxu0 %v3634
  %3801 = vmatprep.subr.mxu0 0.0
  %3802 = vmatpush1.msra.mxu0 %v3633
  %3803 = vmatprep.subr.mxu0 0.0
  %3804 = vmatpush1.msra.mxu0 %v3632
  %3805 = vmatprep.subr.mxu0 0.0
  %3806 = vmatpush1.msra.mxu0 %v3631
  %3807 = vmatprep.subr.mxu0 0.0
  %3808 = vmatpush1.msra.mxu0 %v3630
  %3809 = vmatprep.subr.mxu0 0.0
  %3810 = vmatpush1.msra.mxu0 %v3629
  %3811 = vmatprep.subr.mxu0 0.0
  %3812 = vmatpush1.msra.mxu0 %v3628
  %3813 = vmatprep.subr.mxu0 0.0
  %3814 = vmatpush2.msra.mxu0 %v3659
  %3815 = vmatprep.subr.mxu0 0.0
  %3816 = vmatpush2.msra.mxu0 %v3658
  %3817 = vmatprep.subr.mxu0 0.0
  %3818 = vmatpush2.msra.mxu0 %v3657
  %3819 = vmatprep.subr.mxu0 0.0
  %3820 = vmatpush2.msra.mxu0 %v3656
  %3821 = vmatprep.subr.mxu0 0.0
  %3822 = vmatpush2.msra.mxu0 %v3655
  %3823 = vmatprep.subr.mxu0 0.0
  %3824 = vmatpush2.msra.mxu0 %v3654
  %3825 = vmatprep.subr.mxu0 0.0
  %3826 = vmatpush2.msra.mxu0 %v3653
  %3827 = vmatprep.subr.mxu0 0.0
  %3828 = vmatpush2.msra.mxu0 %v3652
  %3829 = vmatprep.subr.mxu0 0.0
  %3830 = vmatpush2.msra.mxu0 %v3651
  %3831 = vmatprep.subr.mxu0 0.0
  %3832 = vmatpush2.msra.mxu0 %v3650
  %3833 = vmatprep.subr.mxu0 0.0
  %3834 = vmatpush2.msra.mxu0 %v3649
  %3835 = vmatprep.subr.mxu0 0.0
  %3836 = vmatpush2.msra.mxu0 %v3648
  %3837 = vmatprep.subr.mxu0 0.0
  %3838 = vmatpush2.msra.mxu0 %v3647
  %3839 = vmatprep.subr.mxu0 0.0
  %3840 = vmatpush2.msra.mxu0 %v3646
  %3841 = vmatprep.subr.mxu0 0.0
  %3842 = vmatpush2.msra.mxu0 %v3645
  %3843 = vmatprep.subr.mxu0 0.0
  %3844 = vmatpush2.msra.mxu0 %v3644
  %3845 = vmatprep.mubr.f32.mxu0 %v3501
  %3846 = vmatmul.mubr.f32.gmra.mxu0 %v3500
  %v3847 = vpop.f32.mrf.mxu0
  %v3848 = vadd.f32 %v3683, %v3847
  %v3849 = vpop.f32.mrf.mxu0
  %3850 = vmatprep.mubr.f32.mxu0 %v3505
  %3851 = vmatmul.mubr.f32.gmra.mxu0 %v3504
  %v3852 = vpop.f32.mrf.mxu0
  %v3853 = vadd.f32 %v3683, %v3852
  %v3854 = vpop.f32.mrf.mxu0
  %3855 = vmatprep.mubr.f32.mxu0 %v3509
  %3856 = vmatmul.mubr.f32.gmra.mxu0 %v3508
  %v3857 = vpop.f32.mrf.mxu0
  %v3858 = vadd.f32 %v3683, %v3857
  %v3859 = vpop.f32.mrf.mxu0
  %3860 = vmatprep.mubr.f32.mxu0 %v3513
  %3861 = vmatmul.mubr.f32.gmra.mxu0 %v3512
  %v3862 = vpop.f32.mrf.mxu0
  %v3863 = vadd.f32 %v3683, %v3862
  %v3864 = vpop.f32.mrf.mxu0
  %3865 = vmatprep.mubr.f32.mxu0 %v3517
  %3866 = vmatmul.mubr.f32.gmra.mxu0 %v3516
  %v3867 = vpop.f32.mrf.mxu0
  %v3868 = vadd.f32 %v3683, %v3867
  %v3869 = vpop.f32.mrf.mxu0
  %3870 = vmatprep.mubr.f32.mxu0 %v3521
  %3871 = vmatmul.mubr.f32.gmra.mxu0 %v3520
  %v3872 = vpop.f32.mrf.mxu0
  %v3873 = vadd.f32 %v3683, %v3872
  %v3874 = vpop.f32.mrf.mxu0
  %3875 = vmatprep.mubr.f32.mxu0 %v3525
  %3876 = vmatmul.mubr.f32.gmra.mxu0 %v3524
  %v3877 = vpop.f32.mrf.mxu0
  %v3878 = vadd.f32 %v3683, %v3877
  %v3879 = vpop.f32.mrf.mxu0
  %3880 = vmatprep.mubr.f32.mxu0 %v3529
  %3881 = vmatmul.mubr.f32.gmra.mxu0 %v3528
  %v3882 = vpop.f32.mrf.mxu0
  %v3883 = vadd.f32 %v3683, %v3882
  %v3884 = vpop.f32.mrf.mxu0
  %3885 = vmatprep.mubr.f32.mxu0 %v3533
  %3886 = vmatmul.mubr.f32.gmra.mxu0 %v3532
  %v3887 = vpop.f32.mrf.mxu0
  %v3888 = vadd.f32 %v3683, %v3887
  %v3889 = vpop.f32.mrf.mxu0
  %3890 = vmatprep.mubr.f32.mxu0 %v3537
  %3891 = vmatmul.mubr.f32.gmra.mxu0 %v3536
  %v3892 = vpop.f32.mrf.mxu0
  %v3893 = vadd.f32 %v3683, %v3892
  %v3894 = vpop.f32.mrf.mxu0
  %3895 = vmatprep.mubr.f32.mxu0 %v3541
  %3896 = vmatmul.mubr.f32.gmra.mxu0 %v3540
  %v3897 = vpop.f32.mrf.mxu0
  %v3898 = vadd.f32 %v3683, %v3897
  %v3899 = vpop.f32.mrf.mxu0
  %3900 = vmatprep.mubr.f32.mxu0 %v3545
  %3901 = vmatmul.mubr.f32.gmra.mxu0 %v3544
  %v3902 = vpop.f32.mrf.mxu0
  %v3903 = vadd.f32 %v3683, %v3902
  %v3904 = vpop.f32.mrf.mxu0
  %3905 = vmatprep.mubr.f32.mxu0 %v3549
  %3906 = vmatmul.mubr.f32.gmra.mxu0 %v3548
  %v3907 = vpop.f32.mrf.mxu0
  %v3908 = vadd.f32 %v3683, %v3907
  %v3909 = vpop.f32.mrf.mxu0
  %3910 = vmatprep.mubr.f32.mxu0 %v3553
  %3911 = vmatmul.mubr.f32.gmra.mxu0 %v3552
  %v3912 = vpop.f32.mrf.mxu0
  %v3913 = vadd.f32 %v3683, %v3912
  %v3914 = vpop.f32.mrf.mxu0
  %3915 = vmatprep.mubr.f32.mxu0 %v3557
  %3916 = vmatmul.mubr.f32.gmra.mxu0 %v3556
  %v3917 = vpop.f32.mrf.mxu0
  %v3918 = vadd.f32 %v3683, %v3917
  %v3919 = vpop.f32.mrf.mxu0
  %3920 = vmatprep.mubr.f32.mxu0 %v3561
  %3921 = vmatmul.mubr.f32.gmra.mxu0 %v3560
  %v3922 = vpop.f32.mrf.mxu0
  %v3923 = vadd.f32 %v3683, %v3922
  %v3924 = vpop.f32.mrf.mxu0
  %3925 = vmatprep.mubr.f32.mxu0 %v3565
  %3926 = vmatmul.mubr.f32.gmra.mxu0 %v3564
  %v3927 = vpop.f32.mrf.mxu0
  %v3928 = vadd.f32 %v3683, %v3927
  %v3929 = vpop.f32.mrf.mxu0
  %3930 = vmatprep.mubr.f32.mxu0 %v3569
  %3931 = vmatmul.mubr.f32.gmra.mxu0 %v3568
  %v3932 = vpop.f32.mrf.mxu0
  %v3933 = vadd.f32 %v3683, %v3932
  %v3934 = vpop.f32.mrf.mxu0
  %3935 = vmatprep.mubr.f32.mxu0 %v3573
  %3936 = vmatmul.mubr.f32.gmra.mxu0 %v3572
  %v3937 = vpop.f32.mrf.mxu0
  %v3938 = vadd.f32 %v3683, %v3937
  %v3939 = vpop.f32.mrf.mxu0
  %3940 = vmatprep.mubr.f32.mxu0 %v3577
  %3941 = vmatmul.mubr.f32.gmra.mxu0 %v3576
  %v3942 = vpop.f32.mrf.mxu0
  %v3943 = vadd.f32 %v3683, %v3942
  %v3944 = vpop.f32.mrf.mxu0
  %3945 = vmatprep.mubr.f32.mxu0 %v3581
  %3946 = vmatmul.mubr.f32.gmra.mxu0 %v3580
  %v3947 = vpop.f32.mrf.mxu0
  %v3948 = vadd.f32 %v3683, %v3947
  %v3949 = vpop.f32.mrf.mxu0
  %3950 = vmatprep.mubr.f32.mxu0 %v3585
  %3951 = vmatmul.mubr.f32.gmra.mxu0 %v3584
  %v3952 = vpop.f32.mrf.mxu0
  %v3953 = vadd.f32 %v3683, %v3952
  %v3954 = vpop.f32.mrf.mxu0
  %3955 = vmatprep.mubr.f32.mxu0 %v3589
  %3956 = vmatmul.mubr.f32.gmra.mxu0 %v3588
  %v3957 = vpop.f32.mrf.mxu0
  %v3958 = vadd.f32 %v3683, %v3957
  %v3959 = vpop.f32.mrf.mxu0
  %3960 = vmatprep.mubr.f32.mxu0 %v3593
  %3961 = vmatmul.mubr.f32.gmra.mxu0 %v3592
  %v3962 = vpop.f32.mrf.mxu0
  %v3963 = vadd.f32 %v3683, %v3962
  %v3964 = vpop.f32.mrf.mxu0
  %3965 = vmatprep.mubr.f32.mxu0 %v3597
  %3966 = vmatmul.mubr.f32.gmra.mxu0 %v3596
  %v3967 = vpop.f32.mrf.mxu0
  %v3968 = vadd.f32 %v3683, %v3967
  %v3969 = vpop.f32.mrf.mxu0
  %3970 = vmatprep.mubr.f32.mxu0 %v3601
  %3971 = vmatmul.mubr.f32.gmra.mxu0 %v3600
  %v3972 = vpop.f32.mrf.mxu0
  %v3973 = vadd.f32 %v3683, %v3972
  %v3974 = vpop.f32.mrf.mxu0
  %3975 = vmatprep.mubr.f32.mxu0 %v3605
  %3976 = vmatmul.mubr.f32.gmra.mxu0 %v3604
  %v3977 = vpop.f32.mrf.mxu0
  %v3978 = vadd.f32 %v3683, %v3977
  %v3979 = vpop.f32.mrf.mxu0
  %3980 = vmatprep.mubr.f32.mxu0 %v3609
  %3981 = vmatmul.mubr.f32.gmra.mxu0 %v3608
  %v3982 = vpop.f32.mrf.mxu0
  %v3983 = vadd.f32 %v3683, %v3982
  %v3984 = vpop.f32.mrf.mxu0
  %3985 = vmatprep.mubr.f32.mxu0 %v3613
  %3986 = vmatmul.mubr.f32.gmra.mxu0 %v3612
  %v3987 = vpop.f32.mrf.mxu0
  %v3988 = vadd.f32 %v3683, %v3987
  %v3989 = vpop.f32.mrf.mxu0
  %3990 = vmatprep.mubr.f32.mxu0 %v3617
  %3991 = vmatmul.mubr.f32.gmra.mxu0 %v3616
  %v3992 = vpop.f32.mrf.mxu0
  %v3993 = vadd.f32 %v3683, %v3992
  %v3994 = vpop.f32.mrf.mxu0
  %3995 = vmatprep.mubr.f32.mxu0 %v3621
  %3996 = vmatmul.mubr.f32.gmra.mxu0 %v3620
  %v3997 = vpop.f32.mrf.mxu0
  %v3998 = vadd.f32 %v3683, %v3997
  %v3999 = vpop.f32.mrf.mxu0
  %4000 = vmatprep.mubr.f32.mxu0 %v3625
  %4001 = vmatmul.mubr.f32.gmra.mxu0 %v3624
  %v4002 = vpop.f32.mrf.mxu0
  %v4003 = vadd.f32 %v3683, %v4002
  %v4004 = vpop.f32.mrf.mxu0
  %4005 = vdwg.mxu0
  %4006 = vmatprep.subr.mxu0 0.0
  %4007 = vmatpush1.msra.mxu0 %v3675
  %4008 = vmatprep.subr.mxu0 0.0
  %4009 = vmatpush1.msra.mxu0 %v3674
  %4010 = vmatprep.subr.mxu0 0.0
  %4011 = vmatpush1.msra.mxu0 %v3673
  %4012 = vmatprep.subr.mxu0 0.0
  %4013 = vmatpush1.msra.mxu0 %v3672
  %4014 = vmatprep.subr.mxu0 0.0
  %4015 = vmatpush1.msra.mxu0 %v3671
  %4016 = vmatprep.subr.mxu0 0.0
  %4017 = vmatpush1.msra.mxu0 %v3670
  %4018 = vmatprep.subr.mxu0 0.0
  %4019 = vmatpush1.msra.mxu0 %v3669
  %4020 = vmatprep.subr.mxu0 0.0
  %4021 = vmatpush1.msra.mxu0 %v3668
  %4022 = vmatprep.subr.mxu0 0.0
  %4023 = vmatpush1.msra.mxu0 %v3667
  %4024 = vmatprep.subr.mxu0 0.0
  %4025 = vmatpush1.msra.mxu0 %v3666
  %4026 = vmatprep.subr.mxu0 0.0
  %4027 = vmatpush1.msra.mxu0 %v3665
  %4028 = vmatprep.subr.mxu0 0.0
  %4029 = vmatpush1.msra.mxu0 %v3664
  %4030 = vmatprep.subr.mxu0 0.0
  %4031 = vmatpush1.msra.mxu0 %v3663
  %4032 = vmatprep.subr.mxu0 0.0
  %4033 = vmatpush1.msra.mxu0 %v3662
  %4034 = vmatprep.subr.mxu0 0.0
  %4035 = vmatpush1.msra.mxu0 %v3661
  %4036 = vmatprep.subr.mxu0 0.0
  %4037 = vmatpush1.msra.mxu0 %v3660
  %4038 = vmatprep.subr.mxu0 0.0
  %4039 = vmatpush2.msra.mxu0 0.0
  %4040 = vmatprep.subr.mxu0 0.0
  %4041 = vmatpush2.msra.mxu0 0.0
  %4042 = vmatprep.subr.mxu0 0.0
  %4043 = vmatpush2.msra.mxu0 0.0
  %4044 = vmatprep.subr.mxu0 0.0
  %4045 = vmatpush2.msra.mxu0 0.0
  %4046 = vmatprep.subr.mxu0 0.0
  %4047 = vmatpush2.msra.mxu0 0.0
  %4048 = vmatprep.subr.mxu0 0.0
  %4049 = vmatpush2.msra.mxu0 0.0
  %4050 = vmatprep.subr.mxu0 0.0
  %4051 = vmatpush2.msra.mxu0 0.0
  %4052 = vmatprep.subr.mxu0 0.0
  %4053 = vmatpush2.msra.mxu0 0.0
  %4054 = vmatprep.subr.mxu0 0.0
  %4055 = vmatpush2.msra.mxu0 0.0
  %4056 = vmatprep.subr.mxu0 0.0
  %4057 = vmatpush2.msra.mxu0 0.0
  %4058 = vmatprep.subr.mxu0 0.0
  %4059 = vmatpush2.msra.mxu0 0.0
  %4060 = vmatprep.subr.mxu0 0.0
  %4061 = vmatpush2.msra.mxu0 0.0
  %4062 = vmatprep.subr.mxu0 0.0
  %4063 = vmatpush2.msra.mxu0 0.0
  %4064 = vmatprep.subr.mxu0 0.0
  %4065 = vmatpush2.msra.mxu0 0.0
  %4066 = vmatprep.subr.mxu0 0.0
  %4067 = vmatpush2.msra.mxu0 %v3677
  %4068 = vmatprep.subr.mxu0 0.0
  %4069 = vmatpush2.msra.mxu0 %v3676
  %4070 = vmatprep.mubr.f32.mxu0 %v3686
  %4071 = vmatmul.mubr.f32.gmra.mxu0 %v3502
  %v4072 = vpop.f32.mrf.mxu0
  %v4073 = vadd.f32 %v3848, %v4072
  %v4074 = vpop.f32.mrf.mxu0
  %4075 = vmatprep.mubr.f32.mxu0 %v3689
  %4076 = vmatmul.mubr.f32.gmra.mxu0 %v3506
  %v4077 = vpop.f32.mrf.mxu0
  %v4078 = vadd.f32 %v3853, %v4077
  %v4079 = vpop.f32.mrf.mxu0
  %4080 = vmatprep.mubr.f32.mxu0 %v3692
  %4081 = vmatmul.mubr.f32.gmra.mxu0 %v3510
  %v4082 = vpop.f32.mrf.mxu0
  %v4083 = vadd.f32 %v3858, %v4082
  %v4084 = vpop.f32.mrf.mxu0
  %4085 = vmatprep.mubr.f32.mxu0 %v3695
  %4086 = vmatmul.mubr.f32.gmra.mxu0 %v3514
  %v4087 = vpop.f32.mrf.mxu0
  %v4088 = vadd.f32 %v3863, %v4087
  %v4089 = vpop.f32.mrf.mxu0
  %4090 = vmatprep.mubr.f32.mxu0 %v3698
  %4091 = vmatmul.mubr.f32.gmra.mxu0 %v3518
  %v4092 = vpop.f32.mrf.mxu0
  %v4093 = vadd.f32 %v3868, %v4092
  %v4094 = vpop.f32.mrf.mxu0
  %4095 = vmatprep.mubr.f32.mxu0 %v3701
  %4096 = vmatmul.mubr.f32.gmra.mxu0 %v3522
  %v4097 = vpop.f32.mrf.mxu0
  %v4098 = vadd.f32 %v3873, %v4097
  %v4099 = vpop.f32.mrf.mxu0
  %4100 = vmatprep.mubr.f32.mxu0 %v3704
  %4101 = vmatmul.mubr.f32.gmra.mxu0 %v3526
  %v4102 = vpop.f32.mrf.mxu0
  %v4103 = vadd.f32 %v3878, %v4102
  %v4104 = vpop.f32.mrf.mxu0
  %4105 = vmatprep.mubr.f32.mxu0 %v3707
  %4106 = vmatmul.mubr.f32.gmra.mxu0 %v3530
  %v4107 = vpop.f32.mrf.mxu0
  %v4108 = vadd.f32 %v3883, %v4107
  %v4109 = vpop.f32.mrf.mxu0
  %4110 = vmatprep.mubr.f32.mxu0 %v3710
  %4111 = vmatmul.mubr.f32.gmra.mxu0 %v3534
  %v4112 = vpop.f32.mrf.mxu0
  %v4113 = vadd.f32 %v3888, %v4112
  %v4114 = vpop.f32.mrf.mxu0
  %4115 = vmatprep.mubr.f32.mxu0 %v3713
  %4116 = vmatmul.mubr.f32.gmra.mxu0 %v3538
  %v4117 = vpop.f32.mrf.mxu0
  %v4118 = vadd.f32 %v3893, %v4117
  %v4119 = vpop.f32.mrf.mxu0
  %4120 = vmatprep.mubr.f32.mxu0 %v3716
  %4121 = vmatmul.mubr.f32.gmra.mxu0 %v3542
  %v4122 = vpop.f32.mrf.mxu0
  %v4123 = vadd.f32 %v3898, %v4122
  %v4124 = vpop.f32.mrf.mxu0
  %4125 = vmatprep.mubr.f32.mxu0 %v3719
  %4126 = vmatmul.mubr.f32.gmra.mxu0 %v3546
  %v4127 = vpop.f32.mrf.mxu0
  %v4128 = vadd.f32 %v3903, %v4127
  %v4129 = vpop.f32.mrf.mxu0
  %4130 = vmatprep.mubr.f32.mxu0 %v3722
  %4131 = vmatmul.mubr.f32.gmra.mxu0 %v3550
  %v4132 = vpop.f32.mrf.mxu0
  %v4133 = vadd.f32 %v3908, %v4132
  %v4134 = vpop.f32.mrf.mxu0
  %4135 = vmatprep.mubr.f32.mxu0 %v3725
  %4136 = vmatmul.mubr.f32.gmra.mxu0 %v3554
  %v4137 = vpop.f32.mrf.mxu0
  %v4138 = vadd.f32 %v3913, %v4137
  %v4139 = vpop.f32.mrf.mxu0
  %4140 = vmatprep.mubr.f32.mxu0 %v3728
  %4141 = vmatmul.mubr.f32.gmra.mxu0 %v3558
  %v4142 = vpop.f32.mrf.mxu0
  %v4143 = vadd.f32 %v3918, %v4142
  %v4144 = vpop.f32.mrf.mxu0
  %4145 = vmatprep.mubr.f32.mxu0 %v3731
  %4146 = vmatmul.mubr.f32.gmra.mxu0 %v3562
  %v4147 = vpop.f32.mrf.mxu0
  %v4148 = vadd.f32 %v3923, %v4147
  %v4149 = vpop.f32.mrf.mxu0
  %4150 = vmatprep.mubr.f32.mxu0 %v3734
  %4151 = vmatmul.mubr.f32.gmra.mxu0 %v3566
  %v4152 = vpop.f32.mrf.mxu0
  %v4153 = vadd.f32 %v3928, %v4152
  %v4154 = vpop.f32.mrf.mxu0
  %4155 = vmatprep.mubr.f32.mxu0 %v3737
  %4156 = vmatmul.mubr.f32.gmra.mxu0 %v3570
  %v4157 = vpop.f32.mrf.mxu0
  %v4158 = vadd.f32 %v3933, %v4157
  %v4159 = vpop.f32.mrf.mxu0
  %4160 = vmatprep.mubr.f32.mxu0 %v3740
  %4161 = vmatmul.mubr.f32.gmra.mxu0 %v3574
  %v4162 = vpop.f32.mrf.mxu0
  %v4163 = vadd.f32 %v3938, %v4162
  %v4164 = vpop.f32.mrf.mxu0
  %4165 = vmatprep.mubr.f32.mxu0 %v3743
  %4166 = vmatmul.mubr.f32.gmra.mxu0 %v3578
  %v4167 = vpop.f32.mrf.mxu0
  %v4168 = vadd.f32 %v3943, %v4167
  %v4169 = vpop.f32.mrf.mxu0
  %4170 = vmatprep.mubr.f32.mxu0 %v3746
  %4171 = vmatmul.mubr.f32.gmra.mxu0 %v3582
  %v4172 = vpop.f32.mrf.mxu0
  %v4173 = vadd.f32 %v3948, %v4172
  %v4174 = vpop.f32.mrf.mxu0
  %4175 = vmatprep.mubr.f32.mxu0 %v3749
  %4176 = vmatmul.mubr.f32.gmra.mxu0 %v3586
  %v4177 = vpop.f32.mrf.mxu0
  %v4178 = vadd.f32 %v3953, %v4177
  %v4179 = vpop.f32.mrf.mxu0
  %4180 = vmatprep.mubr.f32.mxu0 %v3752
  %4181 = vmatmul.mubr.f32.gmra.mxu0 %v3590
  %v4182 = vpop.f32.mrf.mxu0
  %v4183 = vadd.f32 %v3958, %v4182
  %v4184 = vpop.f32.mrf.mxu0
  %4185 = vmatprep.mubr.f32.mxu0 %v3755
  %4186 = vmatmul.mubr.f32.gmra.mxu0 %v3594
  %v4187 = vpop.f32.mrf.mxu0
  %v4188 = vadd.f32 %v3963, %v4187
  %v4189 = vpop.f32.mrf.mxu0
  %4190 = vmatprep.mubr.f32.mxu0 %v3758
  %4191 = vmatmul.mubr.f32.gmra.mxu0 %v3598
  %v4192 = vpop.f32.mrf.mxu0
  %v4193 = vadd.f32 %v3968, %v4192
  %v4194 = vpop.f32.mrf.mxu0
  %4195 = vmatprep.mubr.f32.mxu0 %v3761
  %4196 = vmatmul.mubr.f32.gmra.mxu0 %v3602
  %v4197 = vpop.f32.mrf.mxu0
  %v4198 = vadd.f32 %v3973, %v4197
  %v4199 = vpop.f32.mrf.mxu0
  %4200 = vmatprep.mubr.f32.mxu0 %v3764
  %4201 = vmatmul.mubr.f32.gmra.mxu0 %v3606
  %v4202 = vpop.f32.mrf.mxu0
  %v4203 = vadd.f32 %v3978, %v4202
  %v4204 = vpop.f32.mrf.mxu0
  %4205 = vmatprep.mubr.f32.mxu0 %v3767
  %4206 = vmatmul.mubr.f32.gmra.mxu0 %v3610
  %v4207 = vpop.f32.mrf.mxu0
  %v4208 = vadd.f32 %v3983, %v4207
  %v4209 = vpop.f32.mrf.mxu0
  %4210 = vmatprep.mubr.f32.mxu0 %v3770
  %4211 = vmatmul.mubr.f32.gmra.mxu0 %v3614
  %v4212 = vpop.f32.mrf.mxu0
  %v4213 = vadd.f32 %v3988, %v4212
  %v4214 = vpop.f32.mrf.mxu0
  %4215 = vmatprep.mubr.f32.mxu0 %v3773
  %4216 = vmatmul.mubr.f32.gmra.mxu0 %v3618
  %v4217 = vpop.f32.mrf.mxu0
  %v4218 = vadd.f32 %v3993, %v4217
  %v4219 = vpop.f32.mrf.mxu0
  %4220 = vmatprep.mubr.f32.mxu0 %v3776
  %4221 = vmatmul.mubr.f32.gmra.mxu0 %v3622
  %v4222 = vpop.f32.mrf.mxu0
  %v4223 = vadd.f32 %v3998, %v4222
  %v4224 = vpop.f32.mrf.mxu0
  %4225 = vmatprep.mubr.f32.mxu0 %v3779
  %4226 = vmatmul.mubr.f32.gmra.mxu0 %v3626
  %v4227 = vpop.f32.mrf.mxu0
  %v4228 = vadd.f32 %v4003, %v4227
  %v4229 = vpop.f32.mrf.mxu0
  %4230 = vdwg.mxu0
  %v4231 = vmax.f32 %v4073, 0.0
  %v4232 = vmax.f32 %v4078, 0.0
  %v4233 = vmax.f32 %v4083, 0.0
  %v4234 = vmax.f32 %v4088, 0.0
  %v4235 = vmax.f32 %v4093, 0.0
  %v4236 = vmax.f32 %v4098, 0.0
  %v4237 = vmax.f32 %v4103, 0.0
  %v4238 = vmax.f32 %v4108, 0.0
  %v4239 = vmax.f32 %v4113, 0.0
  %v4240 = vmax.f32 %v4118, 0.0
  %v4241 = vmax.f32 %v4123, 0.0
  %v4242 = vmax.f32 %v4128, 0.0
  %v4243 = vmax.f32 %v4133, 0.0
  %v4244 = vmax.f32 %v4138, 0.0
  %v4245 = vmax.f32 %v4143, 0.0
  %v4246 = vmax.f32 %v4148, 0.0
  %v4247 = vmax.f32 %v4153, 0.0
  %v4248 = vmax.f32 %v4158, 0.0
  %v4249 = vmax.f32 %v4163, 0.0
  %v4250 = vmax.f32 %v4168, 0.0
  %v4251 = vmax.f32 %v4173, 0.0
  %v4252 = vmax.f32 %v4178, 0.0
  %v4253 = vmax.f32 %v4183, 0.0
  %v4254 = vmax.f32 %v4188, 0.0
  %v4255 = vmax.f32 %v4193, 0.0
  %v4256 = vmax.f32 %v4198, 0.0
  %v4257 = vmax.f32 %v4203, 0.0
  %v4258 = vmax.f32 %v4208, 0.0
  %v4259 = vmax.f32 %v4213, 0.0
  %v4260 = vmax.f32 %v4218, 0.0
  %v4261 = vmax.f32 %v4223, 0.0
  %v4262 = vmax.f32 %v4228, 0.0
  %v4263 = vxor.u32 %v4073, 2147483648
  %v4264 = vxor.u32 %v4078, 2147483648
  %v4265 = vxor.u32 %v4083, 2147483648
  %v4266 = vxor.u32 %v4088, 2147483648
  %v4267 = vxor.u32 %v4093, 2147483648
  %v4268 = vxor.u32 %v4098, 2147483648
  %v4269 = vxor.u32 %v4103, 2147483648
  %v4270 = vxor.u32 %v4108, 2147483648
  %v4271 = vxor.u32 %v4113, 2147483648
  %v4272 = vxor.u32 %v4118, 2147483648
  %v4273 = vxor.u32 %v4123, 2147483648
  %v4274 = vxor.u32 %v4128, 2147483648
  %v4275 = vxor.u32 %v4133, 2147483648
  %v4276 = vxor.u32 %v4138, 2147483648
  %v4277 = vxor.u32 %v4143, 2147483648
  %v4278 = vxor.u32 %v4148, 2147483648
  %v4279 = vxor.u32 %v4153, 2147483648
  %v4280 = vxor.u32 %v4158, 2147483648
  %v4281 = vxor.u32 %v4163, 2147483648
  %v4282 = vxor.u32 %v4168, 2147483648
  %v4283 = vxor.u32 %v4173, 2147483648
  %v4284 = vxor.u32 %v4178, 2147483648
  %v4285 = vxor.u32 %v4183, 2147483648
  %v4286 = vxor.u32 %v4188, 2147483648
  %v4287 = vxor.u32 %v4193, 2147483648
  %v4288 = vxor.u32 %v4198, 2147483648
  %v4289 = vxor.u32 %v4203, 2147483648
  %v4290 = vxor.u32 %v4208, 2147483648
  %v4291 = vxor.u32 %v4213, 2147483648
  %v4292 = vxor.u32 %v4218, 2147483648
  %v4293 = vxor.u32 %v4223, 2147483648
  %v4294 = vxor.u32 %v4228, 2147483648
  %v4295 = vmul.f32 %v4263, 1.442695
  %v4296 = vpow.pop %v4295
  %v4297 = vmul.f32 %v4264, 1.442695
  %v4298 = vpow.pop %v4297
  %v4299 = vmul.f32 %v4265, 1.442695
  %v4300 = vpow.pop %v4299
  %v4301 = vmul.f32 %v4266, 1.442695
  %v4302 = vpow.pop %v4301
  %v4303 = vmul.f32 %v4267, 1.442695
  %v4304 = vpow.pop %v4303
  %v4305 = vmul.f32 %v4268, 1.442695
  %v4306 = vpow.pop %v4305
  %v4307 = vmul.f32 %v4269, 1.442695
  %v4308 = vpow.pop %v4307
  %v4309 = vmul.f32 %v4270, 1.442695
  %v4310 = vpow.pop %v4309
  %v4311 = vmul.f32 %v4271, 1.442695
  %v4312 = vpow.pop %v4311
  %v4313 = vmul.f32 %v4272, 1.442695
  %v4314 = vpow.pop %v4313
  %v4315 = vmul.f32 %v4273, 1.442695
  %v4316 = vpow.pop %v4315
  %v4317 = vmul.f32 %v4274, 1.442695
  %v4318 = vpow.pop %v4317
  %v4319 = vmul.f32 %v4275, 1.442695
  %v4320 = vpow.pop %v4319
  %v4321 = vmul.f32 %v4276, 1.442695
  %v4322 = vpow.pop %v4321
  %v4323 = vmul.f32 %v4277, 1.442695
  %v4324 = vpow.pop %v4323
  %v4325 = vmul.f32 %v4278, 1.442695
  %v4326 = vpow.pop %v4325
  %v4327 = vmul.f32 %v4279, 1.442695
  %v4328 = vpow.pop %v4327
  %v4329 = vmul.f32 %v4280, 1.442695
  %v4330 = vpow.pop %v4329
  %v4331 = vmul.f32 %v4281, 1.442695
  %v4332 = vpow.pop %v4331
  %v4333 = vmul.f32 %v4282, 1.442695
  %v4334 = vpow.pop %v4333
  %v4335 = vmul.f32 %v4283, 1.442695
  %v4336 = vpow.pop %v4335
  %v4337 = vmul.f32 %v4284, 1.442695
  %v4338 = vpow.pop %v4337
  %v4339 = vmul.f32 %v4285, 1.442695
  %v4340 = vpow.pop %v4339
  %v4341 = vmul.f32 %v4286, 1.442695
  %v4342 = vpow.pop %v4341
  %v4343 = vmul.f32 %v4287, 1.442695
  %v4344 = vpow.pop %v4343
  %v4345 = vmul.f32 %v4288, 1.442695
  %v4346 = vpow.pop %v4345
  %v4347 = vmul.f32 %v4289, 1.442695
  %v4348 = vpow.pop %v4347
  %v4349 = vmul.f32 %v4290, 1.442695
  %v4350 = vpow.pop %v4349
  %v4351 = vmul.f32 %v4291, 1.442695
  %v4352 = vpow.pop %v4351
  %v4353 = vmul.f32 %v4292, 1.442695
  %v4354 = vpow.pop %v4353
  %v4355 = vmul.f32 %v4293, 1.442695
  %v4356 = vpow.pop %v4355
  %v4357 = vmul.f32 %v4294, 1.442695
  %v4358 = vpow.pop %v4357
  %v4359 = vadd.f32 %v4296, 1.0
  %v4360 = vadd.f32 %v4298, 1.0
  %v4361 = vadd.f32 %v4300, 1.0
  %v4362 = vadd.f32 %v4302, 1.0
  %v4363 = vadd.f32 %v4304, 1.0
  %v4364 = vadd.f32 %v4306, 1.0
  %v4365 = vadd.f32 %v4308, 1.0
  %v4366 = vadd.f32 %v4310, 1.0
  %v4367 = vadd.f32 %v4312, 1.0
  %v4368 = vadd.f32 %v4314, 1.0
  %v4369 = vadd.f32 %v4316, 1.0
  %v4370 = vadd.f32 %v4318, 1.0
  %v4371 = vadd.f32 %v4320, 1.0
  %v4372 = vadd.f32 %v4322, 1.0
  %v4373 = vadd.f32 %v4324, 1.0
  %v4374 = vadd.f32 %v4326, 1.0
  %v4375 = vadd.f32 %v4328, 1.0
  %v4376 = vadd.f32 %v4330, 1.0
  %v4377 = vadd.f32 %v4332, 1.0
  %v4378 = vadd.f32 %v4334, 1.0
  %v4379 = vadd.f32 %v4336, 1.0
  %v4380 = vadd.f32 %v4338, 1.0
  %v4381 = vadd.f32 %v4340, 1.0
  %v4382 = vadd.f32 %v4342, 1.0
  %v4383 = vadd.f32 %v4344, 1.0
  %v4384 = vadd.f32 %v4346, 1.0
  %v4385 = vadd.f32 %v4348, 1.0
  %v4386 = vadd.f32 %v4350, 1.0
  %v4387 = vadd.f32 %v4352, 1.0
  %v4388 = vadd.f32 %v4354, 1.0
  %v4389 = vadd.f32 %v4356, 1.0
  %v4390 = vadd.f32 %v4358, 1.0
  %v4391 = vrcp.pop %v4359
  %v4392 = vmul.f32 1.0, %v4391
  %v4393 = vrcp.pop %v4360
  %v4394 = vmul.f32 1.0, %v4393
  %v4395 = vrcp.pop %v4361
  %v4396 = vmul.f32 1.0, %v4395
  %v4397 = vrcp.pop %v4362
  %v4398 = vmul.f32 1.0, %v4397
  %v4399 = vrcp.pop %v4363
  %v4400 = vmul.f32 1.0, %v4399
  %v4401 = vrcp.pop %v4364
  %v4402 = vmul.f32 1.0, %v4401
  %v4403 = vrcp.pop %v4365
  %v4404 = vmul.f32 1.0, %v4403
  %v4405 = vrcp.pop %v4366
  %v4406 = vmul.f32 1.0, %v4405
  %v4407 = vrcp.pop %v4367
  %v4408 = vmul.f32 1.0, %v4407
  %v4409 = vrcp.pop %v4368
  %v4410 = vmul.f32 1.0, %v4409
  %v4411 = vrcp.pop %v4369
  %v4412 = vmul.f32 1.0, %v4411
  %v4413 = vrcp.pop %v4370
  %v4414 = vmul.f32 1.0, %v4413
  %v4415 = vrcp.pop %v4371
  %v4416 = vmul.f32 1.0, %v4415
  %v4417 = vrcp.pop %v4372
  %v4418 = vmul.f32 1.0, %v4417
  %v4419 = vrcp.pop %v4373
  %v4420 = vmul.f32 1.0, %v4419
  %v4421 = vrcp.pop %v4374
  %v4422 = vmul.f32 1.0, %v4421
  %v4423 = vrcp.pop %v4375
  %v4424 = vmul.f32 1.0, %v4423
  %v4425 = vrcp.pop %v4376
  %v4426 = vmul.f32 1.0, %v4425
  %v4427 = vrcp.pop %v4377
  %v4428 = vmul.f32 1.0, %v4427
  %v4429 = vrcp.pop %v4378
  %v4430 = vmul.f32 1.0, %v4429
  %v4431 = vrcp.pop %v4379
  %v4432 = vmul.f32 1.0, %v4431
  %v4433 = vrcp.pop %v4380
  %v4434 = vmul.f32 1.0, %v4433
  %v4435 = vrcp.pop %v4381
  %v4436 = vmul.f32 1.0, %v4435
  %v4437 = vrcp.pop %v4382
  %v4438 = vmul.f32 1.0, %v4437
  %v4439 = vrcp.pop %v4383
  %v4440 = vmul.f32 1.0, %v4439
  %v4441 = vrcp.pop %v4384
  %v4442 = vmul.f32 1.0, %v4441
  %v4443 = vrcp.pop %v4385
  %v4444 = vmul.f32 1.0, %v4443
  %v4445 = vrcp.pop %v4386
  %v4446 = vmul.f32 1.0, %v4445
  %v4447 = vrcp.pop %v4387
  %v4448 = vmul.f32 1.0, %v4447
  %v4449 = vrcp.pop %v4388
  %v4450 = vmul.f32 1.0, %v4449
  %v4451 = vrcp.pop %v4389
  %v4452 = vmul.f32 1.0, %v4451
  %v4453 = vrcp.pop %v4390
  %v4454 = vmul.f32 1.0, %v4453
  %4487 = vrot.lane.b32.xlu0 %v4392, 125
  %v4488 = vpop.permute.xlu0 %4487
  %4489 = vrot.lane.b32.xlu0 %v4394, 125
  %v4490 = vpop.permute.xlu0 %4489
  %4491 = vrot.lane.b32.xlu0 %v4396, 125
  %v4492 = vpop.permute.xlu0 %4491
  %4493 = vrot.lane.b32.xlu0 %v4398, 125
  %v4494 = vpop.permute.xlu0 %4493
  %4495 = vrot.lane.b32.xlu0 %v4400, 125
  %v4496 = vpop.permute.xlu0 %4495
  %4497 = vrot.lane.b32.xlu0 %v4402, 125
  %v4498 = vpop.permute.xlu0 %4497
  %4499 = vrot.lane.b32.xlu0 %v4404, 125
  %v4500 = vpop.permute.xlu0 %4499
  %4501 = vrot.lane.b32.xlu0 %v4406, 125
  %v4502 = vpop.permute.xlu0 %4501
  %4503 = vrot.lane.b32.xlu0 %v4408, 125
  %v4504 = vpop.permute.xlu0 %4503
  %4505 = vrot.lane.b32.xlu0 %v4410, 125
  %v4506 = vpop.permute.xlu0 %4505
  %4507 = vrot.lane.b32.xlu0 %v4412, 125
  %v4508 = vpop.permute.xlu0 %4507
  %4509 = vrot.lane.b32.xlu0 %v4414, 125
  %v4510 = vpop.permute.xlu0 %4509
  %4511 = vrot.lane.b32.xlu0 %v4416, 125
  %v4512 = vpop.permute.xlu0 %4511
  %4513 = vrot.lane.b32.xlu0 %v4418, 125
  %v4514 = vpop.permute.xlu0 %4513
  %4515 = vrot.lane.b32.xlu0 %v4420, 125
  %v4516 = vpop.permute.xlu0 %4515
  %4517 = vrot.lane.b32.xlu0 %v4422, 125
  %v4518 = vpop.permute.xlu0 %4517
  %4519 = vrot.lane.b32.xlu0 %v4424, 125
  %v4520 = vpop.permute.xlu0 %4519
  %4521 = vrot.lane.b32.xlu0 %v4426, 125
  %v4522 = vpop.permute.xlu0 %4521
  %4523 = vrot.lane.b32.xlu0 %v4428, 125
  %v4524 = vpop.permute.xlu0 %4523
  %4525 = vrot.lane.b32.xlu0 %v4430, 125
  %v4526 = vpop.permute.xlu0 %4525
  %4527 = vrot.lane.b32.xlu0 %v4432, 125
  %v4528 = vpop.permute.xlu0 %4527
  %4529 = vrot.lane.b32.xlu0 %v4434, 125
  %v4530 = vpop.permute.xlu0 %4529
  %4531 = vrot.lane.b32.xlu0 %v4436, 125
  %v4532 = vpop.permute.xlu0 %4531
  %4533 = vrot.lane.b32.xlu0 %v4438, 125
  %v4534 = vpop.permute.xlu0 %4533
  %4535 = vrot.lane.b32.xlu0 %v4440, 125
  %v4536 = vpop.permute.xlu0 %4535
  %4537 = vrot.lane.b32.xlu0 %v4442, 125
  %v4538 = vpop.permute.xlu0 %4537
  %4539 = vrot.lane.b32.xlu0 %v4444, 125
  %v4540 = vpop.permute.xlu0 %4539
  %4541 = vrot.lane.b32.xlu0 %v4446, 125
  %v4542 = vpop.permute.xlu0 %4541
  %4543 = vrot.lane.b32.xlu0 %v4448, 125
  %v4544 = vpop.permute.xlu0 %4543
  %4545 = vrot.lane.b32.xlu0 %v4450, 125
  %v4546 = vpop.permute.xlu0 %4545
  %4547 = vrot.lane.b32.xlu0 %v4452, 125
  %v4548 = vpop.permute.xlu0 %4547
  %4549 = vrot.lane.b32.xlu0 %v4454, 125
  %v4550 = vpop.permute.xlu0 %4549
  %v4583 = vmul.f32 %v4231, %v4488
  %v4584 = vmul.f32 %v4232, %v4490
  %v4585 = vmul.f32 %v4233, %v4492
  %v4586 = vmul.f32 %v4234, %v4494
  %v4587 = vmul.f32 %v4235, %v4496
  %v4588 = vmul.f32 %v4236, %v4498
  %v4589 = vmul.f32 %v4237, %v4500
  %v4590 = vmul.f32 %v4238, %v4502
  %v4591 = vmul.f32 %v4239, %v4504
  %v4592 = vmul.f32 %v4240, %v4506
  %v4593 = vmul.f32 %v4241, %v4508
  %v4594 = vmul.f32 %v4242, %v4510
  %v4595 = vmul.f32 %v4243, %v4512
  %v4596 = vmul.f32 %v4244, %v4514
  %v4597 = vmul.f32 %v4245, %v4516
  %v4598 = vmul.f32 %v4246, %v4518
  %v4599 = vmul.f32 %v4247, %v4520
  %v4600 = vmul.f32 %v4248, %v4522
  %v4601 = vmul.f32 %v4249, %v4524
  %v4602 = vmul.f32 %v4250, %v4526
  %v4603 = vmul.f32 %v4251, %v4528
  %v4604 = vmul.f32 %v4252, %v4530
  %v4605 = vmul.f32 %v4253, %v4532
  %v4606 = vmul.f32 %v4254, %v4534
  %v4607 = vmul.f32 %v4255, %v4536
  %v4608 = vmul.f32 %v4256, %v4538
  %v4609 = vmul.f32 %v4257, %v4540
  %v4610 = vmul.f32 %v4258, %v4542
  %v4611 = vmul.f32 %v4259, %v4544
  %v4612 = vmul.f32 %v4260, %v4546
  %v4613 = vmul.f32 %v4261, %v4548
  %v4614 = vmul.f32 %v4262, %v4550
  %v4615 = vmul.f32 %v4583, %v4583
  %v4616 = vmul.f32 %v4584, %v4584
  %v4617 = vmul.f32 %v4585, %v4585
  %v4618 = vmul.f32 %v4586, %v4586
  %v4619 = vmul.f32 %v4587, %v4587
  %v4620 = vmul.f32 %v4588, %v4588
  %v4621 = vmul.f32 %v4589, %v4589
  %v4622 = vmul.f32 %v4590, %v4590
  %v4623 = vmul.f32 %v4591, %v4591
  %v4624 = vmul.f32 %v4592, %v4592
  %v4625 = vmul.f32 %v4593, %v4593
  %v4626 = vmul.f32 %v4594, %v4594
  %v4627 = vmul.f32 %v4595, %v4595
  %v4628 = vmul.f32 %v4596, %v4596
  %v4629 = vmul.f32 %v4597, %v4597
  %v4630 = vmul.f32 %v4598, %v4598
  %v4631 = vmul.f32 %v4599, %v4599
  %v4632 = vmul.f32 %v4600, %v4600
  %v4633 = vmul.f32 %v4601, %v4601
  %v4634 = vmul.f32 %v4602, %v4602
  %v4635 = vmul.f32 %v4603, %v4603
  %v4636 = vmul.f32 %v4604, %v4604
  %v4637 = vmul.f32 %v4605, %v4605
  %v4638 = vmul.f32 %v4606, %v4606
  %v4639 = vmul.f32 %v4607, %v4607
  %v4640 = vmul.f32 %v4608, %v4608
  %v4641 = vmul.f32 %v4609, %v4609
  %v4642 = vmul.f32 %v4610, %v4610
  %v4643 = vmul.f32 %v4611, %v4611
  %v4644 = vmul.f32 %v4612, %v4612
  %v4645 = vmul.f32 %v4613, %v4613
  %v4646 = vmul.f32 %v4614, %v4614
  %vm4647 = vcmask 23552
  %v4648 = vsel %vm4647, %v4615, 0.0
  %4649 = vadd.xlane.f32.xlu0 %v4648
  %v4650 = vpop.xlane.xlu0 %4649
  %v4651 = vsel %vm4647, %v4616, 0.0
  %4652 = vadd.xlane.f32.xlu0 %v4651
  %v4653 = vpop.xlane.xlu0 %4652
  %v4654 = vsel %vm4647, %v4617, 0.0
  %4655 = vadd.xlane.f32.xlu0 %v4654
  %v4656 = vpop.xlane.xlu0 %4655
  %v4657 = vsel %vm4647, %v4618, 0.0
  %4658 = vadd.xlane.f32.xlu0 %v4657
  %v4659 = vpop.xlane.xlu0 %4658
  %v4660 = vsel %vm4647, %v4619, 0.0
  %4661 = vadd.xlane.f32.xlu0 %v4660
  %v4662 = vpop.xlane.xlu0 %4661
  %v4663 = vsel %vm4647, %v4620, 0.0
  %4664 = vadd.xlane.f32.xlu0 %v4663
  %v4665 = vpop.xlane.xlu0 %4664
  %v4666 = vsel %vm4647, %v4621, 0.0
  %4667 = vadd.xlane.f32.xlu0 %v4666
  %v4668 = vpop.xlane.xlu0 %4667
  %v4669 = vsel %vm4647, %v4622, 0.0
  %4670 = vadd.xlane.f32.xlu0 %v4669
  %v4671 = vpop.xlane.xlu0 %4670
  %v4672 = vsel %vm4647, %v4623, 0.0
  %4673 = vadd.xlane.f32.xlu0 %v4672
  %v4674 = vpop.xlane.xlu0 %4673
  %v4675 = vsel %vm4647, %v4624, 0.0
  %4676 = vadd.xlane.f32.xlu0 %v4675
  %v4677 = vpop.xlane.xlu0 %4676
  %v4678 = vsel %vm4647, %v4625, 0.0
  %4679 = vadd.xlane.f32.xlu0 %v4678
  %v4680 = vpop.xlane.xlu0 %4679
  %v4681 = vsel %vm4647, %v4626, 0.0
  %4682 = vadd.xlane.f32.xlu0 %v4681
  %v4683 = vpop.xlane.xlu0 %4682
  %v4684 = vsel %vm4647, %v4627, 0.0
  %4685 = vadd.xlane.f32.xlu0 %v4684
  %v4686 = vpop.xlane.xlu0 %4685
  %v4687 = vsel %vm4647, %v4628, 0.0
  %4688 = vadd.xlane.f32.xlu0 %v4687
  %v4689 = vpop.xlane.xlu0 %4688
  %v4690 = vsel %vm4647, %v4629, 0.0
  %4691 = vadd.xlane.f32.xlu0 %v4690
  %v4692 = vpop.xlane.xlu0 %4691
  %v4693 = vsel %vm4647, %v4630, 0.0
  %4694 = vadd.xlane.f32.xlu0 %v4693
  %v4695 = vpop.xlane.xlu0 %4694
  %v4696 = vsel %vm4647, %v4631, 0.0
  %4697 = vadd.xlane.f32.xlu0 %v4696
  %v4698 = vpop.xlane.xlu0 %4697
  %v4699 = vsel %vm4647, %v4632, 0.0
  %4700 = vadd.xlane.f32.xlu0 %v4699
  %v4701 = vpop.xlane.xlu0 %4700
  %v4702 = vsel %vm4647, %v4633, 0.0
  %4703 = vadd.xlane.f32.xlu0 %v4702
  %v4704 = vpop.xlane.xlu0 %4703
  %v4705 = vsel %vm4647, %v4634, 0.0
  %4706 = vadd.xlane.f32.xlu0 %v4705
  %v4707 = vpop.xlane.xlu0 %4706
  %v4708 = vsel %vm4647, %v4635, 0.0
  %4709 = vadd.xlane.f32.xlu0 %v4708
  %v4710 = vpop.xlane.xlu0 %4709
  %v4711 = vsel %vm4647, %v4636, 0.0
  %4712 = vadd.xlane.f32.xlu0 %v4711
  %v4713 = vpop.xlane.xlu0 %4712
  %v4714 = vsel %vm4647, %v4637, 0.0
  %4715 = vadd.xlane.f32.xlu0 %v4714
  %v4716 = vpop.xlane.xlu0 %4715
  %v4717 = vsel %vm4647, %v4638, 0.0
  %4718 = vadd.xlane.f32.xlu0 %v4717
  %v4719 = vpop.xlane.xlu0 %4718
  %v4720 = vsel %vm4647, %v4639, 0.0
  %4721 = vadd.xlane.f32.xlu0 %v4720
  %v4722 = vpop.xlane.xlu0 %4721
  %v4723 = vsel %vm4647, %v4640, 0.0
  %4724 = vadd.xlane.f32.xlu0 %v4723
  %v4725 = vpop.xlane.xlu0 %4724
  %v4726 = vsel %vm4647, %v4641, 0.0
  %4727 = vadd.xlane.f32.xlu0 %v4726
  %v4728 = vpop.xlane.xlu0 %4727
  %v4729 = vsel %vm4647, %v4642, 0.0
  %4730 = vadd.xlane.f32.xlu0 %v4729
  %v4731 = vpop.xlane.xlu0 %4730
  %v4732 = vsel %vm4647, %v4643, 0.0
  %4733 = vadd.xlane.f32.xlu0 %v4732
  %v4734 = vpop.xlane.xlu0 %4733
  %v4735 = vsel %vm4647, %v4644, 0.0
  %4736 = vadd.xlane.f32.xlu0 %v4735
  %v4737 = vpop.xlane.xlu0 %4736
  %v4738 = vsel %vm4647, %v4645, 0.0
  %4739 = vadd.xlane.f32.xlu0 %v4738
  %v4740 = vpop.xlane.xlu0 %4739
  %v4741 = vsel %vm4647, %v4646, 0.0
  %4742 = vadd.xlane.f32.xlu0 %v4741
  %v4743 = vpop.xlane.xlu0 %4742
  %v4744 = vmax.f32 %v4650, 1e-24
  %v4745 = vmax.f32 %v4653, 1e-24
  %v4746 = vmax.f32 %v4656, 1e-24
  %v4747 = vmax.f32 %v4659, 1e-24
  %v4748 = vmax.f32 %v4662, 1e-24
  %v4749 = vmax.f32 %v4665, 1e-24
  %v4750 = vmax.f32 %v4668, 1e-24
  %v4751 = vmax.f32 %v4671, 1e-24
  %v4752 = vmax.f32 %v4674, 1e-24
  %v4753 = vmax.f32 %v4677, 1e-24
  %v4754 = vmax.f32 %v4680, 1e-24
  %v4755 = vmax.f32 %v4683, 1e-24
  %v4756 = vmax.f32 %v4686, 1e-24
  %v4757 = vmax.f32 %v4689, 1e-24
  %v4758 = vmax.f32 %v4692, 1e-24
  %v4759 = vmax.f32 %v4695, 1e-24
  %v4760 = vmax.f32 %v4698, 1e-24
  %v4761 = vmax.f32 %v4701, 1e-24
  %v4762 = vmax.f32 %v4704, 1e-24
  %v4763 = vmax.f32 %v4707, 1e-24
  %v4764 = vmax.f32 %v4710, 1e-24
  %v4765 = vmax.f32 %v4713, 1e-24
  %v4766 = vmax.f32 %v4716, 1e-24
  %v4767 = vmax.f32 %v4719, 1e-24
  %v4768 = vmax.f32 %v4722, 1e-24
  %v4769 = vmax.f32 %v4725, 1e-24
  %v4770 = vmax.f32 %v4728, 1e-24
  %v4771 = vmax.f32 %v4731, 1e-24
  %v4772 = vmax.f32 %v4734, 1e-24
  %v4773 = vmax.f32 %v4737, 1e-24
  %v4774 = vmax.f32 %v4740, 1e-24
  %v4775 = vmax.f32 %v4743, 1e-24
  %v4776 = vrsqrt.pop %v4744
  %v4777 = vrsqrt.pop %v4745
  %v4778 = vrsqrt.pop %v4746
  %v4779 = vrsqrt.pop %v4747
  %v4780 = vrsqrt.pop %v4748
  %v4781 = vrsqrt.pop %v4749
  %v4782 = vrsqrt.pop %v4750
  %v4783 = vrsqrt.pop %v4751
  %v4784 = vrsqrt.pop %v4752
  %v4785 = vrsqrt.pop %v4753
  %v4786 = vrsqrt.pop %v4754
  %v4787 = vrsqrt.pop %v4755
  %v4788 = vrsqrt.pop %v4756
  %v4789 = vrsqrt.pop %v4757
  %v4790 = vrsqrt.pop %v4758
  %v4791 = vrsqrt.pop %v4759
  %v4792 = vrsqrt.pop %v4760
  %v4793 = vrsqrt.pop %v4761
  %v4794 = vrsqrt.pop %v4762
  %v4795 = vrsqrt.pop %v4763
  %v4796 = vrsqrt.pop %v4764
  %v4797 = vrsqrt.pop %v4765
  %v4798 = vrsqrt.pop %v4766
  %v4799 = vrsqrt.pop %v4767
  %v4800 = vrsqrt.pop %v4768
  %v4801 = vrsqrt.pop %v4769
  %v4802 = vrsqrt.pop %v4770
  %v4803 = vrsqrt.pop %v4771
  %v4804 = vrsqrt.pop %v4772
  %v4805 = vrsqrt.pop %v4773
  %v4806 = vrsqrt.pop %v4774
  %v4807 = vrsqrt.pop %v4775
  %v4808 = vmul.f32 %v4583, %v4776
  %v4809 = vmul.f32 %v4584, %v4777
  %v4810 = vmul.f32 %v4585, %v4778
  %v4811 = vmul.f32 %v4586, %v4779
  %v4812 = vmul.f32 %v4587, %v4780
  %v4813 = vmul.f32 %v4588, %v4781
  %v4814 = vmul.f32 %v4589, %v4782
  %v4815 = vmul.f32 %v4590, %v4783
  %v4816 = vmul.f32 %v4591, %v4784
  %v4817 = vmul.f32 %v4592, %v4785
  %v4818 = vmul.f32 %v4593, %v4786
  %v4819 = vmul.f32 %v4594, %v4787
  %v4820 = vmul.f32 %v4595, %v4788
  %v4821 = vmul.f32 %v4596, %v4789
  %v4822 = vmul.f32 %v4597, %v4790
  %v4823 = vmul.f32 %v4598, %v4791
  %v4824 = vmul.f32 %v4599, %v4792
  %v4825 = vmul.f32 %v4600, %v4793
  %v4826 = vmul.f32 %v4601, %v4794
  %v4827 = vmul.f32 %v4602, %v4795
  %v4828 = vmul.f32 %v4603, %v4796
  %v4829 = vmul.f32 %v4604, %v4797
  %v4830 = vmul.f32 %v4605, %v4798
  %v4831 = vmul.f32 %v4606, %v4799
  %v4832 = vmul.f32 %v4607, %v4800
  %v4833 = vmul.f32 %v4608, %v4801
  %v4834 = vmul.f32 %v4609, %v4802
  %v4835 = vmul.f32 %v4610, %v4803
  %v4836 = vmul.f32 %v4611, %v4804
  %v4837 = vmul.f32 %v4612, %v4805
  %v4838 = vmul.f32 %v4613, %v4806
  %v4839 = vmul.f32 %v4614, %v4807
  %4840 = vst.msk [vmem:[%s5] sm:$0xff] %vm4647, %v4808
  %4841 = vst.msk [vmem:[%s5 + $0x8] sm:$0xff] %vm4647, %v4809
  %4842 = vst.msk [vmem:[%s5 + $0x10] sm:$0xff] %vm4647, %v4810
  %4843 = vst.msk [vmem:[%s5 + $0x18] sm:$0xff] %vm4647, %v4811
  %4844 = vst.msk [vmem:[%s5 + $0x20] sm:$0xff] %vm4647, %v4812
  %4845 = vst.msk [vmem:[%s5 + $0x28] sm:$0xff] %vm4647, %v4813
  %4846 = vst.msk [vmem:[%s5 + $0x30] sm:$0xff] %vm4647, %v4814
  %4847 = vst.msk [vmem:[%s5 + $0x38] sm:$0xff] %vm4647, %v4815
  %4848 = vst.msk [vmem:[%s5 + $0x40] sm:$0xff] %vm4647, %v4816
  %4849 = vst.msk [vmem:[%s5 + $0x48] sm:$0xff] %vm4647, %v4817
  %4850 = vst.msk [vmem:[%s5 + $0x50] sm:$0xff] %vm4647, %v4818
  %4851 = vst.msk [vmem:[%s5 + $0x58] sm:$0xff] %vm4647, %v4819
  %4852 = vst.msk [vmem:[%s5 + $0x60] sm:$0xff] %vm4647, %v4820
  %4853 = vst.msk [vmem:[%s5 + $0x68] sm:$0xff] %vm4647, %v4821
  %4854 = vst.msk [vmem:[%s5 + $0x70] sm:$0xff] %vm4647, %v4822
  %4855 = vst.msk [vmem:[%s5 + $0x78] sm:$0xff] %vm4647, %v4823
  %4856 = vst.msk [vmem:[%s5 + $0x80] sm:$0xff] %vm4647, %v4824
  %4857 = vst.msk [vmem:[%s5 + $0x88] sm:$0xff] %vm4647, %v4825
  %4858 = vst.msk [vmem:[%s5 + $0x90] sm:$0xff] %vm4647, %v4826
  %4859 = vst.msk [vmem:[%s5 + $0x98] sm:$0xff] %vm4647, %v4827
  %4860 = vst.msk [vmem:[%s5 + $0xa0] sm:$0xff] %vm4647, %v4828
  %4861 = vst.msk [vmem:[%s5 + $0xa8] sm:$0xff] %vm4647, %v4829
  %4862 = vst.msk [vmem:[%s5 + $0xb0] sm:$0xff] %vm4647, %v4830
  %4863 = vst.msk [vmem:[%s5 + $0xb8] sm:$0xff] %vm4647, %v4831
  %4864 = vst.msk [vmem:[%s5 + $0xc0] sm:$0xff] %vm4647, %v4832
  %4865 = vst.msk [vmem:[%s5 + $0xc8] sm:$0xff] %vm4647, %v4833
  %4866 = vst.msk [vmem:[%s5 + $0xd0] sm:$0xff] %vm4647, %v4834
  %4867 = vst.msk [vmem:[%s5 + $0xd8] sm:$0xff] %vm4647, %v4835
  %4868 = vst.msk [vmem:[%s5 + $0xe0] sm:$0xff] %vm4647, %v4836
  %4869 = vst.msk [vmem:[%s5 + $0xe8] sm:$0xff] %vm4647, %v4837
  %4870 = vst.msk [vmem:[%s5 + $0xf0] sm:$0xff] %vm4647, %v4838
  %4871 = vst.msk [vmem:[%s5 + $0xf8] sm:$0xff] %vm4647, %v4839
  // Predicated region
  $region22: #{tpu_custom_call.1} parent=0 // pred_check
    _
  $region23: #{tpu_custom_call.1} parent=0 // pred_check_branch
    %4873 = sbr.rel (0) target = $region25
  $region24: #{tpu_custom_call.1} parent=0 // pred_region
    _
  $region25: #{tpu_custom_call.1} parent=0 // pred_fallthru
    _
  // Predicated region
  $region26: #{tpu_custom_call.1} parent=0 // pred_check
    _
  $region27: #{tpu_custom_call.1} parent=0 // pred_check_branch
    %4875 = sbr.rel (0) target = $region29
  $region28: #{tpu_custom_call.1} parent=0 // pred_region
    _
  $region29: #{tpu_custom_call.1} parent=0 // pred_fallthru
    _

</llo_original>
